<compile_context>
chip_gen: v5e
topology: v5e:2x2
jax: 0.10.0
libtpu: 0.0.40
codegen_flags: <defaults>
</compile_context>

<pallas_src>
import functools

import jax
import jax.numpy as jnp
from jax.experimental import pallas as pl
from jax.experimental.pallas import tpu as pltpu


SUBLANE = 8            # f32 sublane tile
LANE = 128             # lane width
_MAX_UNROLL_STEPS = 64  # fully unroll recurrences up to this many steps


def _round_up(x, m):
    return ((x + m - 1) // m) * m


def _row_offset(t, batch):
    """Row offset t*batch; a static Python int on the unrolled path."""
    if isinstance(t, int):
        return t * batch
    return pl.multiple_of(t * batch, SUBLANE)


def _time_loop(lo, hi, body):
    """Fully unroll short recurrences (static slices + LLO visibility across
    iterations); fall back to pl.loop for long sequences."""
    if hi - lo <= _MAX_UNROLL_STEPS:
        for t in range(lo, hi):
            body(t)
    else:
        pl.loop(lo, hi)(body)


# ----------------------------------------------------------------------------
# Fused Seq2Seq kernel: encoder recurrence -> decoder recurrence -> projection.
# All refs are 2D (time folded into the sublane axis) so every op is a plain
# (rows, lanes) tile.  `hidden` is already padded to a multiple of 128.
# ----------------------------------------------------------------------------
def seq2seq_kernel(x_ref, len_ref, tgt_ref,
                   enc_wih_ref, enc_whh_ref, enc_b_ref,
                   dec_wih_ref, dec_whh_ref, dec_b_ref,
                   out_w_ref, out_b_ref,
                   out_ref, hN_ref,
                   h_sc, c_sc, gx_sc, gy_sc, hseq_sc,
                   *, hidden, t_in, t_out, batch):
    hp = hidden

    # ---- input-side gate pre-activations for ALL timesteps: one big
    #      lane-dense matmul per LSTM (biases folded in) --------------------
    gx_sc[...] = (jnp.dot(x_ref[...], enc_wih_ref[...],
                          preferred_element_type=jnp.float32) + enc_b_ref[...])
    gy_sc[...] = (jnp.dot(tgt_ref[...], dec_wih_ref[...],
                          preferred_element_type=jnp.float32) + dec_b_ref[...])

    h_sc[...] = jnp.zeros_like(h_sc)
    c_sc[...] = jnp.zeros_like(c_sc)

    # ---- hoist loop-invariant loads / broadcasts ---------------------------
    # TODO(synk): could pin Whh in the MXU across the recurrence with
    # pltpu.matmul_push_rhs/matmul_acc_lhs/matmul_pop; with the loop fully
    # unrolled we rely on Mosaic hoisting the constant RHS staging instead.
    enc_whh = enc_whh_ref[...]
    dec_whh = dec_whh_ref[...]
    len_b = jnp.broadcast_to(len_ref[...], (batch, hp))          # (B, H) int32

    def cell(gates, c):
        # sigmoid(z) = 0.5*tanh(0.5*z) + 0.5 -> one EUP op per gate.
        # All gate slices are vreg-aligned (hp is a multiple of 128).
        i = 0.5 * jnp.tanh(0.5 * gates[:, 0 * hp:1 * hp]) + 0.5
        f = 0.5 * jnp.tanh(0.5 * gates[:, 1 * hp:2 * hp]) + 0.5
        g = jnp.tanh(gates[:, 2 * hp:3 * hp])
        o = 0.5 * jnp.tanh(0.5 * gates[:, 3 * hp:4 * hp]) + 0.5
        c_new = f * c + i * g
        h_new = o * jnp.tanh(c_new)
        return h_new, c_new

    # ---- encoder recurrence (packed-sequence semantics) --------------------
    def enc_step(t):
        h = h_sc[...]
        c = c_sc[...]
        gates = gx_sc[pl.ds(_row_offset(t, batch), batch), :] + jnp.dot(
            h, enc_whh, preferred_element_type=jnp.float32)
        h_new, c_new = cell(gates, c)
        valid = t < len_b                                        # (B, H) bool
        h_sc[...] = jnp.where(valid, h_new, h)
        c_sc[...] = jnp.where(valid, c_new, c)

    _time_loop(0, t_in, enc_step)

    # ---- decoder recurrence (teacher forcing) -------------------------------
    def dec_step(t, gates_in):
        h = h_sc[...]
        c = c_sc[...]
        gates = gates_in + jnp.dot(h, dec_whh,
                                   preferred_element_type=jnp.float32)
        h_new, c_new = cell(gates, c)
        h_sc[...] = h_new
        c_sc[...] = c_new
        hseq_sc[pl.ds(_row_offset(t, batch), batch), :] = h_new

    # t == 0 peeled: teacher-forced input frame is all-zero, so the input-side
    # contribution is just the bias (no tf_mask multiply / max / NaN leak).
    dec_step(0, jnp.broadcast_to(dec_b_ref[...], (batch, 4 * hp)))

    def dec_body(t):
        dec_step(t, gy_sc[pl.ds(_row_offset(t - 1, batch), batch), :])

    _time_loop(1, t_out, dec_body)

    # ---- batched, lane-dense output projection + stores ---------------------
    out_ref[...] = (jnp.dot(hseq_sc[...], out_w_ref[...],
                            preferred_element_type=jnp.float32) + out_b_ref[...])
    hN_ref[...] = h_sc[...]


# ----------------------------------------------------------------------------
# Wrapper
# ----------------------------------------------------------------------------
def _pad_rows(a, rows):
    return jnp.pad(a, ((0, rows - a.shape[0]), (0, 0)))


def _pad_cols(a, cols):
    return jnp.pad(a, ((0, 0), (0, cols - a.shape[1])))


def _pad_gate_cols(w, h, hp):
    """(rows, 4*h) -> (rows, 4*hp): pad each of the 4 gate blocks to hp lanes."""
    rows = w.shape[0]
    return jnp.pad(w.reshape(rows, 4, h),
                   ((0, 0), (0, 0), (0, hp - h))).reshape(rows, 4 * hp)


def seq2seq_forward(params, inp, input_length, target, *, num_batch_shards=1):
    """inp: (B, T_in, D_in)   input_length: (B,) int   target: (B, T_out, D_out)

    Returns (decoder_outputs (B, T_out, D_out), decoder_hidden (1, B, H)).
    `num_batch_shards` adds a leading "parallel" grid axis over batch shards
    (set to 2 on v7x to use both TensorCores; keep 1 on 1-TC v5e/v6e).
    """
    hidden = params["enc_whh_T"].shape[0]
    B, t_in, d_in = inp.shape
    _, t_out, d_out = target.shape

    hp = _round_up(hidden, LANE)   # vreg-aligned gate slices
    dp = _round_up(d_out, LANE)    # lane-dense output stores

    ns = num_batch_shards
    bp = _round_up(B, SUBLANE * ns)
    bps = bp // ns
    pad = bp - B

    # padded rows get length 0, so their encoder state (and decoder init)
    # stays zero; their outputs are sliced off below.
    x = jnp.pad(inp.astype(jnp.float32), ((0, pad), (0, 0), (0, 0)))
    y = jnp.pad(target.astype(jnp.float32), ((0, pad), (0, 0), (0, 0)))
    lens = jnp.pad(input_length.astype(jnp.int32), (0, pad))

    # per-shard, time-major, flattened to 2D; teacher-forcing shift is index
    # math inside the kernel (no concatenate / HBM copy here).
    x2 = x.reshape(ns, bps, t_in, d_in).transpose(0, 2, 1, 3).reshape(
        ns, t_in * bps, d_in)
    y2 = y.reshape(ns, bps, t_out, d_out).transpose(0, 2, 1, 3).reshape(
        ns, t_out * bps, d_out)
    len3 = lens.reshape(ns, bps, 1)

    # Parameter padding (hidden -> hp, output lanes -> dp).  Padded hidden
    # units have zero weights/bias and therefore stay exactly zero.
    # TODO(synk): for large models cast sequence inputs / Wih to bf16 for the
    # two big pre-activation matmuls (halves VMEM slabs + HBM traffic; keep
    # gate math in f32, esp. on v5e which has no bf16 VPU).
    enc_wih = _pad_gate_cols(params["enc_wih_T"], hidden, hp)
    enc_whh = _pad_rows(_pad_gate_cols(params["enc_whh_T"], hidden, hp), hp)
    enc_b = _pad_gate_cols(params["enc_b"], hidden, hp)
    dec_wih = _pad_gate_cols(params["dec_wih_T"], hidden, hp)
    dec_whh = _pad_rows(_pad_gate_cols(params["dec_whh_T"], hidden, hp), hp)
    dec_b = _pad_gate_cols(params["dec_b"], hidden, hp)
    out_w = _pad_rows(_pad_cols(params["out_w_T"], dp), hp)
    out_b = _pad_cols(params["out_b"], dp)
    weights = (enc_wih, enc_whh, enc_b, dec_wih, dec_whh, dec_b, out_w, out_b)

    def shard_spec(rows, cols):
        return pl.BlockSpec((None, rows, cols), lambda s: (s, 0, 0))

    def full_spec(arr):
        return pl.BlockSpec(arr.shape, lambda s: (0, 0))

    # VMEM budget: double-buffered per-shard blocks + weights + scratch + slack.
    # TODO(synk): for very long sequences (esp. v7x's 64 MiB VMEM) stream the
    # gx/gy slabs in time chunks (time grid axis or pltpu.emit_pipeline)
    # instead of keeping the full sequence resident.
    f32 = 4
    block_bytes = f32 * (t_in * bps * d_in + t_out * bps * d_out + bps
                         + t_out * bps * dp + bps * hp
                         + sum(int(w.size) for w in weights))
    scratch_bytes = f32 * (2 * bps * hp + (t_in + t_out) * bps * 4 * hp
                           + t_out * bps * hp)
    vmem_limit = int(min(2 * block_bytes + scratch_bytes + (4 << 20), 64 << 20))

    flops = 2 * bp * (t_in * (d_in + hp) * 4 * hp
                      + t_out * (d_out + hp) * 4 * hp
                      + t_out * hp * dp)
    cost = pl.CostEstimate(flops=int(flops),
                           transcendentals=int(bp * (t_in + t_out) * 5 * hp),
                           bytes_accessed=int(ns * block_bytes))

    out3, h_n3 = pl.pallas_call(
        functools.partial(seq2seq_kernel, hidden=hp, t_in=t_in, t_out=t_out,
                          batch=bps),
        out_shape=(
            jax.ShapeDtypeStruct((ns, t_out * bps, dp), jnp.float32),
            jax.ShapeDtypeStruct((ns, bps, hp), jnp.float32),
        ),
        grid=(ns,),
        in_specs=[shard_spec(t_in * bps, d_in),
                  shard_spec(bps, 1),
                  shard_spec(t_out * bps, d_out)]
                 + [full_spec(w) for w in weights],
        out_specs=(shard_spec(t_out * bps, dp), shard_spec(bps, hp)),
        scratch_shapes=[
            pltpu.VMEM((bps, hp), jnp.float32),                # h
            pltpu.VMEM((bps, hp), jnp.float32),                # c
            pltpu.VMEM((t_in * bps, 4 * hp), jnp.float32),     # enc x-gates
            pltpu.VMEM((t_out * bps, 4 * hp), jnp.float32),    # dec y-gates
            pltpu.VMEM((t_out * bps, hp), jnp.float32),        # dec h sequence
        ],
        compiler_params=pltpu.CompilerParams(
            dimension_semantics=("parallel",),
            vmem_limit_bytes=vmem_limit),
        cost_estimate=cost,
    )(x2, len3, y2, *weights)

    out = (out3.reshape(ns, t_out, bps, dp).transpose(0, 2, 1, 3)
           .reshape(bp, t_out, dp))
    decoder_outputs = out[:B, :, :d_out]
    decoder_hidden = h_n3.reshape(bp, hp)[:B, :hidden][None]    # (1, B, H)
    return decoder_outputs, decoder_hidden


# ----------------------------------------------------------------------------
# Pure-JAX reference (for correctness check)
# ----------------------------------------------------------------------------
def _ref_lstm_step(x_t, h, c, wih_T, whh_T, b, hidden):
    gates = x_t @ wih_T + h @ whh_T + b
    i = jax.nn.sigmoid(gates[:, 0 * hidden:1 * hidden])
    f = jax.nn.sigmoid(gates[:, 1 * hidden:2 * hidden])
    g = jnp.tanh(gates[:, 2 * hidden:3 * hidden])
    o = jax.nn.sigmoid(gates[:, 3 * hidden:4 * hidden])
    c_new = f * c + i * g
    h_new = o * jnp.tanh(c_new)
    return h_new, c_new


def seq2seq_reference(params, inp, input_length, target):
    hidden = params["enc_whh_T"].shape[0]
    B, t_in, _ = inp.shape
    _, t_out, _ = target.shape
    h = jnp.zeros((B, hidden), jnp.float32)
    c = jnp.zeros((B, hidden), jnp.float32)
    lengths = input_length.astype(jnp.int32).reshape(B, 1)
    x_tm = jnp.transpose(inp.astype(jnp.float32), (1, 0, 2))
    for t in range(t_in):
        h_new, c_new = _ref_lstm_step(x_tm[t], h, c, params["enc_wih_T"],
                                      params["enc_whh_T"], params["enc_b"],
                                      hidden)
        valid = t < lengths
        h = jnp.where(valid, h_new, h)
        c = jnp.where(valid, c_new, c)
    tgt = target.astype(jnp.float32)
    dec_in = jnp.concatenate([jnp.zeros_like(tgt[:, :1, :]), tgt[:, :-1, :]],
                             axis=1)
    y_tm = jnp.transpose(dec_in, (1, 0, 2))
    outs = []
    for t in range(t_out):
        h, c = _ref_lstm_step(y_tm[t], h, c, params["dec_wih_T"],
                              params["dec_whh_T"], params["dec_b"], hidden)
        outs.append(h @ params["out_w_T"] + params["out_b"])
    dec_out = jnp.stack(outs, axis=0)                            # (T_out, B, D)
    return jnp.transpose(dec_out, (1, 0, 2)), h[None]


# ----------------------------------------------------------------------------
# Deterministic parameter init (PyTorch-style uniform(-1/sqrt(H), 1/sqrt(H)))
# ----------------------------------------------------------------------------
def init_params(key, d_in, d_out, hidden):
    ks = jax.random.split(key, 8)
    s = 1.0 / jnp.sqrt(hidden)

    def u(k, shape):
        return jax.random.uniform(k, shape, jnp.float32, -s, s)

    return {
        # encoder LSTM (weights stored pre-transposed for x @ W^T)
        "enc_wih_T": u(ks[0], (d_in, 4 * hidden)),
        "enc_whh_T": u(ks[1], (hidden, 4 * hidden)),
        "enc_b": u(ks[2], (1, 4 * hidden)),        # b_ih + b_hh folded together
        # decoder LSTM
        "dec_wih_T": u(ks[3], (d_out, 4 * hidden)),
        "dec_whh_T": u(ks[4], (hidden, 4 * hidden)),
        "dec_b": u(ks[5], (1, 4 * hidden)),
        # decoder linear head
        "out_w_T": u(ks[6], (hidden, d_out)),
        "out_b": u(ks[7], (1, d_out)),
    }


if __name__ == "__main__":
    B, T_IN, T_OUT, D_IN, D_OUT, H = 2, 8, 6, 16, 16, 32

    key = jax.random.PRNGKey(0)
    k_in, k_tgt, k_par = jax.random.split(key, 3)

    inp = jax.random.normal(k_in, (B, T_IN, D_IN), jnp.float32)
    input_length = jnp.array([T_IN, 5], dtype=jnp.int32)
    target = jax.random.normal(k_tgt, (B, T_OUT, D_OUT), jnp.float32)
    params = init_params(k_par, D_IN, D_OUT, H)

    ref_out, ref_hidden = jax.block_until_ready(
        seq2seq_reference(params, inp, input_length, target))

    fwd = jax.jit(seq2seq_forward, static_argnames="num_batch_shards")

    # Default path (single shard; one TensorCore).
    dec_out, dec_hidden = jax.block_until_ready(
        fwd(params, inp, input_length, target))
    assert dec_out.shape == (B, T_OUT, D_OUT)
    assert dec_hidden.shape == (1, B, H)
    assert jnp.allclose(dec_out, ref_out, atol=1e-3, rtol=1e-3)
    assert jnp.allclose(dec_hidden, ref_hidden, atol=1e-3, rtol=1e-3)

    # Batch-sharded path (megacore on v7x; sequential-but-correct on v5e/v6e).
    dec_out2, dec_hidden2 = jax.block_until_ready(
        fwd(params, inp, input_length, target, num_batch_shards=2))
    assert jnp.allclose(dec_out2, ref_out, atol=1e-3, rtol=1e-3)
    assert jnp.allclose(dec_hidden2, ref_hidden, atol=1e-3, rtol=1e-3)

    print("KERNEL_OK")
</pallas_src>

<mosaic_0001>
module attributes {stable_mosaic.version = 11 : i64} {
  func.func @seq2seq_kernel(%arg0: i32, %arg1: memref<1x64x16xf32, #tpu.memory_space<vmem>>, %arg2: memref<1x8x1xi32, #tpu.memory_space<vmem>>, %arg3: memref<1x48x16xf32, #tpu.memory_space<vmem>>, %arg4: memref<16x512xf32, #tpu.memory_space<vmem>>, %arg5: memref<128x512xf32, #tpu.memory_space<vmem>>, %arg6: memref<1x512xf32, #tpu.memory_space<vmem>>, %arg7: memref<16x512xf32, #tpu.memory_space<vmem>>, %arg8: memref<128x512xf32, #tpu.memory_space<vmem>>, %arg9: memref<1x512xf32, #tpu.memory_space<vmem>>, %arg10: memref<128x128xf32, #tpu.memory_space<vmem>>, %arg11: memref<1x128xf32, #tpu.memory_space<vmem>>, %arg12: memref<1x48x128xf32, #tpu.memory_space<vmem>>, %arg13: memref<1x8x128xf32, #tpu.memory_space<vmem>>, %arg14: memref<8x128xf32, #tpu.memory_space<vmem>>, %arg15: memref<8x128xf32, #tpu.memory_space<vmem>>, %arg16: memref<64x512xf32, #tpu.memory_space<vmem>>, %arg17: memref<48x512xf32, #tpu.memory_space<vmem>>, %arg18: memref<48x128xf32, #tpu.memory_space<vmem>>) attributes {dimension_semantics = [#tpu.dimension_semantics<parallel>], iteration_bounds = array<i64: 1>, scalar_prefetch = 0 : i64, scratch_operands = 5 : i64, tpu.core_type = #tpu.core_type<tc>, window_params = [{transform_indices = @transform_0, window_bounds = array<i64: 1, 64, 16>}, {transform_indices = @transform_1, window_bounds = array<i64: 1, 8, 1>}, {transform_indices = @transform_2, window_bounds = array<i64: 1, 48, 16>}, {pipeline_mode = #tpu.pipeline_mode<synchronous>, transform_indices = @transform_3, window_bounds = array<i64: 16, 512>}, {pipeline_mode = #tpu.pipeline_mode<synchronous>, transform_indices = @transform_4, window_bounds = array<i64: 128, 512>}, {pipeline_mode = #tpu.pipeline_mode<synchronous>, transform_indices = @transform_5, window_bounds = array<i64: 1, 512>}, {pipeline_mode = #tpu.pipeline_mode<synchronous>, transform_indices = @transform_6, window_bounds = array<i64: 16, 512>}, {pipeline_mode = #tpu.pipeline_mode<synchronous>, transform_indices = @transform_7, window_bounds = array<i64: 128, 512>}, {pipeline_mode = #tpu.pipeline_mode<synchronous>, transform_indices = @transform_8, window_bounds = array<i64: 1, 512>}, {pipeline_mode = #tpu.pipeline_mode<synchronous>, transform_indices = @transform_9, window_bounds = array<i64: 128, 128>}, {pipeline_mode = #tpu.pipeline_mode<synchronous>, transform_indices = @transform_10, window_bounds = array<i64: 1, 128>}, {transform_indices = @transform_11, window_bounds = array<i64: 1, 48, 128>}, {transform_indices = @transform_12, window_bounds = array<i64: 1, 8, 128>}]} {
    %c0 = arith.constant 0 : index
    %c0_0 = arith.constant 0 : index
    %c0_1 = arith.constant 0 : index
    %0 = vector.load %arg1[%c0, %c0_0, %c0_1] : memref<1x64x16xf32, #tpu.memory_space<vmem>>, vector<1x64x16xf32>
    %1 = vector.shape_cast %0 : vector<1x64x16xf32> to vector<64x16xf32>
    %c0_2 = arith.constant 0 : index
    %c0_3 = arith.constant 0 : index
    %2 = vector.load %arg4[%c0_2, %c0_3] : memref<16x512xf32, #tpu.memory_space<vmem>>, vector<16x512xf32>
    %cst = arith.constant dense<0.000000e+00> : vector<64x512xf32>
    %3 = tpu.matmul %1, %2, %cst {dimension_numbers = #tpu.dot_dimension_numbers<[1], [0], [0], [1], [0, 0, 1, 1], [], []>} : vector<64x16xf32>, vector<16x512xf32>, vector<64x512xf32> -> vector<64x512xf32>
    %c0_4 = arith.constant 0 : index
    %c0_5 = arith.constant 0 : index
    %4 = vector.load %arg6[%c0_4, %c0_5] : memref<1x512xf32, #tpu.memory_space<vmem>>, vector<1x512xf32>
    %5 = vector.broadcast %4 : vector<1x512xf32> to vector<64x512xf32>
    %6 = arith.addf %3, %5 : vector<64x512xf32>
    %c0_6 = arith.constant 0 : index
    %c0_7 = arith.constant 0 : index
    %7 = vector.load %arg16[%c0_6, %c0_7] : memref<64x512xf32, #tpu.memory_space<vmem>>, vector<64x512xf32>
    tpu.vector_store %arg16[%c0_6, %c0_7], %6 {strides = array<i32>} : memref<64x512xf32, #tpu.memory_space<vmem>>, vector<64x512xf32>,
    %c0_8 = arith.constant 0 : index
    %c0_9 = arith.constant 0 : index
    %c0_10 = arith.constant 0 : index
    %8 = vector.load %arg3[%c0_8, %c0_9, %c0_10] : memref<1x48x16xf32, #tpu.memory_space<vmem>>, vector<1x48x16xf32>
    %9 = vector.shape_cast %8 : vector<1x48x16xf32> to vector<48x16xf32>
    %c0_11 = arith.constant 0 : index
    %c0_12 = arith.constant 0 : index
    %10 = vector.load %arg7[%c0_11, %c0_12] : memref<16x512xf32, #tpu.memory_space<vmem>>, vector<16x512xf32>
    %cst_13 = arith.constant dense<0.000000e+00> : vector<48x512xf32>
    %11 = tpu.matmul %9, %10, %cst_13 {dimension_numbers = #tpu.dot_dimension_numbers<[1], [0], [0], [1], [0, 0, 1, 1], [], []>} : vector<48x16xf32>, vector<16x512xf32>, vector<48x512xf32> -> vector<48x512xf32>
    %c0_14 = arith.constant 0 : index
    %c0_15 = arith.constant 0 : index
    %12 = vector.load %arg9[%c0_14, %c0_15] : memref<1x512xf32, #tpu.memory_space<vmem>>, vector<1x512xf32>
    %13 = vector.broadcast %12 : vector<1x512xf32> to vector<48x512xf32>
    %14 = arith.addf %11, %13 : vector<48x512xf32>
    %c0_16 = arith.constant 0 : index
    %c0_17 = arith.constant 0 : index
    %15 = vector.load %arg17[%c0_16, %c0_17] : memref<48x512xf32, #tpu.memory_space<vmem>>, vector<48x512xf32>
    tpu.vector_store %arg17[%c0_16, %c0_17], %14 {strides = array<i32>} : memref<48x512xf32, #tpu.memory_space<vmem>>, vector<48x512xf32>,
    %cst_18 = arith.constant 0.000000e+00 : f32
    %16 = vector.broadcast %cst_18 : f32 to vector<8x128xf32>
    %c0_19 = arith.constant 0 : index
    %c0_20 = arith.constant 0 : index
    %17 = vector.load %arg14[%c0_19, %c0_20] : memref<8x128xf32, #tpu.memory_space<vmem>>, vector<8x128xf32>
    tpu.vector_store %arg14[%c0_19, %c0_20], %16 {strides = array<i32>} : memref<8x128xf32, #tpu.memory_space<vmem>>, vector<8x128xf32>,
    %cst_21 = arith.constant 0.000000e+00 : f32
    %18 = vector.broadcast %cst_21 : f32 to vector<8x128xf32>
    %c0_22 = arith.constant 0 : index
    %c0_23 = arith.constant 0 : index
    %19 = vector.load %arg15[%c0_22, %c0_23] : memref<8x128xf32, #tpu.memory_space<vmem>>, vector<8x128xf32>
    tpu.vector_store %arg15[%c0_22, %c0_23], %18 {strides = array<i32>} : memref<8x128xf32, #tpu.memory_space<vmem>>, vector<8x128xf32>,
    %c0_24 = arith.constant 0 : index
    %c0_25 = arith.constant 0 : index
    %20 = vector.load %arg5[%c0_24, %c0_25] : memref<128x512xf32, #tpu.memory_space<vmem>>, vector<128x512xf32>
    %c0_26 = arith.constant 0 : index
    %c0_27 = arith.constant 0 : index
    %21 = vector.load %arg8[%c0_26, %c0_27] : memref<128x512xf32, #tpu.memory_space<vmem>>, vector<128x512xf32>
    %c0_28 = arith.constant 0 : index
    %c0_29 = arith.constant 0 : index
    %c0_30 = arith.constant 0 : index
    %22 = vector.load %arg2[%c0_28, %c0_29, %c0_30] : memref<1x8x1xi32, #tpu.memory_space<vmem>>, vector<1x8x1xi32>
    %23 = vector.shape_cast %22 : vector<1x8x1xi32> to vector<8x1xi32>
    %24 = vector.shape_cast %23 : vector<8x1xi32> to vector<8x1xi32>
    %25 = vector.broadcast %24 : vector<8x1xi32> to vector<8x128xi32>
    %c0_31 = arith.constant 0 : index
    %c0_32 = arith.constant 0 : index
    %26 = vector.load %arg14[%c0_31, %c0_32] : memref<8x128xf32, #tpu.memory_space<vmem>>, vector<8x128xf32>
    %c0_33 = arith.constant 0 : index
    %c0_34 = arith.constant 0 : index
    %27 = vector.load %arg15[%c0_33, %c0_34] : memref<8x128xf32, #tpu.memory_space<vmem>>, vector<8x128xf32>
    %c0_35 = arith.constant 0 : index
    %c0_36 = arith.constant 0 : index
    %28 = vector.load %arg16[%c0_35, %c0_36] : memref<64x512xf32, #tpu.memory_space<vmem>>, vector<8x512xf32>
    %cst_37 = arith.constant dense<0.000000e+00> : vector<8x512xf32>
    %29 = tpu.matmul %26, %20, %cst_37 {dimension_numbers = #tpu.dot_dimension_numbers<[1], [0], [0], [1], [0, 0, 1, 1], [], []>} : vector<8x128xf32>, vector<128x512xf32>, vector<8x512xf32> -> vector<8x512xf32>
    %30 = arith.addf %28, %29 : vector<8x512xf32>
    %31 = vector.extract_strided_slice %30 {offsets = [0, 0], sizes = [8, 128], strides = [1, 1]} : vector<8x512xf32> to vector<8x128xf32>
    %cst_38 = arith.constant 5.000000e-01 : f32
    %32 = vector.broadcast %cst_38 : f32 to vector<8x128xf32>
    %33 = arith.mulf %32, %31 : vector<8x128xf32>
    %34 = math.tanh %33 : vector<8x128xf32>
    %cst_39 = arith.constant 5.000000e-01 : f32
    %35 = vector.broadcast %cst_39 : f32 to vector<8x128xf32>
    %36 = arith.mulf %35, %34 : vector<8x128xf32>
    %cst_40 = arith.constant 5.000000e-01 : f32
    %37 = vector.broadcast %cst_40 : f32 to vector<8x128xf32>
    %38 = arith.addf %36, %37 : vector<8x128xf32>
    %39 = vector.extract_strided_slice %30 {offsets = [0, 128], sizes = [8, 128], strides = [1, 1]} : vector<8x512xf32> to vector<8x128xf32>
    %cst_41 = arith.constant 5.000000e-01 : f32
    %40 = vector.broadcast %cst_41 : f32 to vector<8x128xf32>
    %41 = arith.mulf %40, %39 : vector<8x128xf32>
    %42 = math.tanh %41 : vector<8x128xf32>
    %cst_42 = arith.constant 5.000000e-01 : f32
    %43 = vector.broadcast %cst_42 : f32 to vector<8x128xf32>
    %44 = arith.mulf %43, %42 : vector<8x128xf32>
    %cst_43 = arith.constant 5.000000e-01 : f32
    %45 = vector.broadcast %cst_43 : f32 to vector<8x128xf32>
    %46 = arith.addf %44, %45 : vector<8x128xf32>
    %47 = vector.extract_strided_slice %30 {offsets = [0, 256], sizes = [8, 128], strides = [1, 1]} : vector<8x512xf32> to vector<8x128xf32>
    %48 = math.tanh %47 : vector<8x128xf32>
    %49 = vector.extract_strided_slice %30 {offsets = [0, 384], sizes = [8, 128], strides = [1, 1]} : vector<8x512xf32> to vector<8x128xf32>
    %cst_44 = arith.constant 5.000000e-01 : f32
    %50 = vector.broadcast %cst_44 : f32 to vector<8x128xf32>
    %51 = arith.mulf %50, %49 : vector<8x128xf32>
    %52 = math.tanh %51 : vector<8x128xf32>
    %cst_45 = arith.constant 5.000000e-01 : f32
    %53 = vector.broadcast %cst_45 : f32 to vector<8x128xf32>
    %54 = arith.mulf %53, %52 : vector<8x128xf32>
    %cst_46 = arith.constant 5.000000e-01 : f32
    %55 = vector.broadcast %cst_46 : f32 to vector<8x128xf32>
    %56 = arith.addf %54, %55 : vector<8x128xf32>
    %57 = arith.mulf %46, %27 : vector<8x128xf32>
    %58 = arith.mulf %38, %48 : vector<8x128xf32>
    %59 = arith.addf %57, %58 : vector<8x128xf32>
    %60 = math.tanh %59 : vector<8x128xf32>
    %61 = arith.mulf %56, %60 : vector<8x128xf32>
    %c0_i32 = arith.constant 0 : i32
    %62 = vector.broadcast %c0_i32 : i32 to vector<8x128xi32>
    %63 = arith.cmpi sgt, %25, %62 : vector<8x128xi32>
    %64 = arith.select %63, %61, %26 : vector<8x128xi1>, vector<8x128xf32>
    %c0_47 = arith.constant 0 : index
    %c0_48 = arith.constant 0 : index
    %65 = vector.load %arg14[%c0_47, %c0_48] : memref<8x128xf32, #tpu.memory_space<vmem>>, vector<8x128xf32>
    tpu.vector_store %arg14[%c0_47, %c0_48], %64 {strides = array<i32>} : memref<8x128xf32, #tpu.memory_space<vmem>>, vector<8x128xf32>,
    %66 = arith.select %63, %59, %27 : vector<8x128xi1>, vector<8x128xf32>
    %c0_49 = arith.constant 0 : index
    %c0_50 = arith.constant 0 : index
    %67 = vector.load %arg15[%c0_49, %c0_50] : memref<8x128xf32, #tpu.memory_space<vmem>>, vector<8x128xf32>
    tpu.vector_store %arg15[%c0_49, %c0_50], %66 {strides = array<i32>} : memref<8x128xf32, #tpu.memory_space<vmem>>, vector<8x128xf32>,
    %c0_51 = arith.constant 0 : index
    %c0_52 = arith.constant 0 : index
    %68 = vector.load %arg14[%c0_51, %c0_52] : memref<8x128xf32, #tpu.memory_space<vmem>>, vector<8x128xf32>
    %c0_53 = arith.constant 0 : index
    %c0_54 = arith.constant 0 : index
    %69 = vector.load %arg15[%c0_53, %c0_54] : memref<8x128xf32, #tpu.memory_space<vmem>>, vector<8x128xf32>
    %c8 = arith.constant 8 : index
    %c0_55 = arith.constant 0 : index
    %70 = vector.load %arg16[%c8, %c0_55] : memref<64x512xf32, #tpu.memory_space<vmem>>, vector<8x512xf32>
    %cst_56 = arith.constant dense<0.000000e+00> : vector<8x512xf32>
    %71 = tpu.matmul %68, %20, %cst_56 {dimension_numbers = #tpu.dot_dimension_numbers<[1], [0], [0], [1], [0, 0, 1, 1], [], []>} : vector<8x128xf32>, vector<128x512xf32>, vector<8x512xf32> -> vector<8x512xf32>
    %72 = arith.addf %70, %71 : vector<8x512xf32>
    %73 = vector.extract_strided_slice %72 {offsets = [0, 0], sizes = [8, 128], strides = [1, 1]} : vector<8x512xf32> to vector<8x128xf32>
    %cst_57 = arith.constant 5.000000e-01 : f32
    %74 = vector.broadcast %cst_57 : f32 to vector<8x128xf32>
    %75 = arith.mulf %74, %73 : vector<8x128xf32>
    %76 = math.tanh %75 : vector<8x128xf32>
    %cst_58 = arith.constant 5.000000e-01 : f32
    %77 = vector.broadcast %cst_58 : f32 to vector<8x128xf32>
    %78 = arith.mulf %77, %76 : vector<8x128xf32>
    %cst_59 = arith.constant 5.000000e-01 : f32
    %79 = vector.broadcast %cst_59 : f32 to vector<8x128xf32>
    %80 = arith.addf %78, %79 : vector<8x128xf32>
    %81 = vector.extract_strided_slice %72 {offsets = [0, 128], sizes = [8, 128], strides = [1, 1]} : vector<8x512xf32> to vector<8x128xf32>
    %cst_60 = arith.constant 5.000000e-01 : f32
    %82 = vector.broadcast %cst_60 : f32 to vector<8x128xf32>
    %83 = arith.mulf %82, %81 : vector<8x128xf32>
    %84 = math.tanh %83 : vector<8x128xf32>
    %cst_61 = arith.constant 5.000000e-01 : f32
    %85 = vector.broadcast %cst_61 : f32 to vector<8x128xf32>
    %86 = arith.mulf %85, %84 : vector<8x128xf32>
    %cst_62 = arith.constant 5.000000e-01 : f32
    %87 = vector.broadcast %cst_62 : f32 to vector<8x128xf32>
    %88 = arith.addf %86, %87 : vector<8x128xf32>
    %89 = vector.extract_strided_slice %72 {offsets = [0, 256], sizes = [8, 128], strides = [1, 1]} : vector<8x512xf32> to vector<8x128xf32>
    %90 = math.tanh %89 : vector<8x128xf32>
    %91 = vector.extract_strided_slice %72 {offsets = [0, 384], sizes = [8, 128], strides = [1, 1]} : vector<8x512xf32> to vector<8x128xf32>
    %cst_63 = arith.constant 5.000000e-01 : f32
    %92 = vector.broadcast %cst_63 : f32 to vector<8x128xf32>
    %93 = arith.mulf %92, %91 : vector<8x128xf32>
    %94 = math.tanh %93 : vector<8x128xf32>
    %cst_64 = arith.constant 5.000000e-01 : f32
    %95 = vector.broadcast %cst_64 : f32 to vector<8x128xf32>
    %96 = arith.mulf %95, %94 : vector<8x128xf32>
    %cst_65 = arith.constant 5.000000e-01 : f32
    %97 = vector.broadcast %cst_65 : f32 to vector<8x128xf32>
    %98 = arith.addf %96, %97 : vector<8x128xf32>
    %99 = arith.mulf %88, %69 : vector<8x128xf32>
    %100 = arith.mulf %80, %90 : vector<8x128xf32>
    %101 = arith.addf %99, %100 : vector<8x128xf32>
    %102 = math.tanh %101 : vector<8x128xf32>
    %103 = arith.mulf %98, %102 : vector<8x128xf32>
    %c1_i32 = arith.constant 1 : i32
    %104 = vector.broadcast %c1_i32 : i32 to vector<8x128xi32>
    %105 = arith.cmpi sgt, %25, %104 : vector<8x128xi32>
    %106 = arith.select %105, %103, %68 : vector<8x128xi1>, vector<8x128xf32>
    %c0_66 = arith.constant 0 : index
    %c0_67 = arith.constant 0 : index
    %107 = vector.load %arg14[%c0_66, %c0_67] : memref<8x128xf32, #tpu.memory_space<vmem>>, vector<8x128xf32>
    tpu.vector_store %arg14[%c0_66, %c0_67], %106 {strides = array<i32>} : memref<8x128xf32, #tpu.memory_space<vmem>>, vector<8x128xf32>,
    %108 = arith.select %105, %101, %69 : vector<8x128xi1>, vector<8x128xf32>
    %c0_68 = arith.constant 0 : index
    %c0_69 = arith.constant 0 : index
    %109 = vector.load %arg15[%c0_68, %c0_69] : memref<8x128xf32, #tpu.memory_space<vmem>>, vector<8x128xf32>
    tpu.vector_store %arg15[%c0_68, %c0_69], %108 {strides = array<i32>} : memref<8x128xf32, #tpu.memory_space<vmem>>, vector<8x128xf32>,
    %c0_70 = arith.constant 0 : index
    %c0_71 = arith.constant 0 : index
    %110 = vector.load %arg14[%c0_70, %c0_71] : memref<8x128xf32, #tpu.memory_space<vmem>>, vector<8x128xf32>
    %c0_72 = arith.constant 0 : index
    %c0_73 = arith.constant 0 : index
    %111 = vector.load %arg15[%c0_72, %c0_73] : memref<8x128xf32, #tpu.memory_space<vmem>>, vector<8x128xf32>
    %c16 = arith.constant 16 : index
    %c0_74 = arith.constant 0 : index
    %112 = vector.load %arg16[%c16, %c0_74] : memref<64x512xf32, #tpu.memory_space<vmem>>, vector<8x512xf32>
    %cst_75 = arith.constant dense<0.000000e+00> : vector<8x512xf32>
    %113 = tpu.matmul %110, %20, %cst_75 {dimension_numbers = #tpu.dot_dimension_numbers<[1], [0], [0], [1], [0, 0, 1, 1], [], []>} : vector<8x128xf32>, vector<128x512xf32>, vector<8x512xf32> -> vector<8x512xf32>
    %114 = arith.addf %112, %113 : vector<8x512xf32>
    %115 = vector.extract_strided_slice %114 {offsets = [0, 0], sizes = [8, 128], strides = [1, 1]} : vector<8x512xf32> to vector<8x128xf32>
    %cst_76 = arith.constant 5.000000e-01 : f32
    %116 = vector.broadcast %cst_76 : f32 to vector<8x128xf32>
    %117 = arith.mulf %116, %115 : vector<8x128xf32>
    %118 = math.tanh %117 : vector<8x128xf32>
    %cst_77 = arith.constant 5.000000e-01 : f32
    %119 = vector.broadcast %cst_77 : f32 to vector<8x128xf32>
    %120 = arith.mulf %119, %118 : vector<8x128xf32>
    %cst_78 = arith.constant 5.000000e-01 : f32
    %121 = vector.broadcast %cst_78 : f32 to vector<8x128xf32>
    %122 = arith.addf %120, %121 : vector<8x128xf32>
    %123 = vector.extract_strided_slice %114 {offsets = [0, 128], sizes = [8, 128], strides = [1, 1]} : vector<8x512xf32> to vector<8x128xf32>
    %cst_79 = arith.constant 5.000000e-01 : f32
    %124 = vector.broadcast %cst_79 : f32 to vector<8x128xf32>
    %125 = arith.mulf %124, %123 : vector<8x128xf32>
    %126 = math.tanh %125 : vector<8x128xf32>
    %cst_80 = arith.constant 5.000000e-01 : f32
    %127 = vector.broadcast %cst_80 : f32 to vector<8x128xf32>
    %128 = arith.mulf %127, %126 : vector<8x128xf32>
    %cst_81 = arith.constant 5.000000e-01 : f32
    %129 = vector.broadcast %cst_81 : f32 to vector<8x128xf32>
    %130 = arith.addf %128, %129 : vector<8x128xf32>
    %131 = vector.extract_strided_slice %114 {offsets = [0, 256], sizes = [8, 128], strides = [1, 1]} : vector<8x512xf32> to vector<8x128xf32>
    %132 = math.tanh %131 : vector<8x128xf32>
    %133 = vector.extract_strided_slice %114 {offsets = [0, 384], sizes = [8, 128], strides = [1, 1]} : vector<8x512xf32> to vector<8x128xf32>
    %cst_82 = arith.constant 5.000000e-01 : f32
    %134 = vector.broadcast %cst_82 : f32 to vector<8x128xf32>
    %135 = arith.mulf %134, %133 : vector<8x128xf32>
    %136 = math.tanh %135 : vector<8x128xf32>
    %cst_83 = arith.constant 5.000000e-01 : f32
    %137 = vector.broadcast %cst_83 : f32 to vector<8x128xf32>
    %138 = arith.mulf %137, %136 : vector<8x128xf32>
    %cst_84 = arith.constant 5.000000e-01 : f32
    %139 = vector.broadcast %cst_84 : f32 to vector<8x128xf32>
    %140 = arith.addf %138, %139 : vector<8x128xf32>
    %141 = arith.mulf %130, %111 : vector<8x128xf32>
    %142 = arith.mulf %122, %132 : vector<8x128xf32>
    %143 = arith.addf %141, %142 : vector<8x128xf32>
    %144 = math.tanh %143 : vector<8x128xf32>
    %145 = arith.mulf %140, %144 : vector<8x128xf32>
    %c2_i32 = arith.constant 2 : i32
    %146 = vector.broadcast %c2_i32 : i32 to vector<8x128xi32>
    %147 = arith.cmpi sgt, %25, %146 : vector<8x128xi32>
    %148 = arith.select %147, %145, %110 : vector<8x128xi1>, vector<8x128xf32>
    %c0_85 = arith.constant 0 : index
    %c0_86 = arith.constant 0 : index
    %149 = vector.load %arg14[%c0_85, %c0_86] : memref<8x128xf32, #tpu.memory_space<vmem>>, vector<8x128xf32>
    tpu.vector_store %arg14[%c0_85, %c0_86], %148 {strides = array<i32>} : memref<8x128xf32, #tpu.memory_space<vmem>>, vector<8x128xf32>,
    %150 = arith.select %147, %143, %111 : vector<8x128xi1>, vector<8x128xf32>
    %c0_87 = arith.constant 0 : index
    %c0_88 = arith.constant 0 : index
    %151 = vector.load %arg15[%c0_87, %c0_88] : memref<8x128xf32, #tpu.memory_space<vmem>>, vector<8x128xf32>
    tpu.vector_store %arg15[%c0_87, %c0_88], %150 {strides = array<i32>} : memref<8x128xf32, #tpu.memory_space<vmem>>, vector<8x128xf32>,
    %c0_89 = arith.constant 0 : index
    %c0_90 = arith.constant 0 : index
    %152 = vector.load %arg14[%c0_89, %c0_90] : memref<8x128xf32, #tpu.memory_space<vmem>>, vector<8x128xf32>
    %c0_91 = arith.constant 0 : index
    %c0_92 = arith.constant 0 : index
    %153 = vector.load %arg15[%c0_91, %c0_92] : memref<8x128xf32, #tpu.memory_space<vmem>>, vector<8x128xf32>
    %c24 = arith.constant 24 : index
    %c0_93 = arith.constant 0 : index
    %154 = vector.load %arg16[%c24, %c0_93] : memref<64x512xf32, #tpu.memory_space<vmem>>, vector<8x512xf32>
    %cst_94 = arith.constant dense<0.000000e+00> : vector<8x512xf32>
    %155 = tpu.matmul %152, %20, %cst_94 {dimension_numbers = #tpu.dot_dimension_numbers<[1], [0], [0], [1], [0, 0, 1, 1], [], []>} : vector<8x128xf32>, vector<128x512xf32>, vector<8x512xf32> -> vector<8x512xf32>
    %156 = arith.addf %154, %155 : vector<8x512xf32>
    %157 = vector.extract_strided_slice %156 {offsets = [0, 0], sizes = [8, 128], strides = [1, 1]} : vector<8x512xf32> to vector<8x128xf32>
    %cst_95 = arith.constant 5.000000e-01 : f32
    %158 = vector.broadcast %cst_95 : f32 to vector<8x128xf32>
    %159 = arith.mulf %158, %157 : vector<8x128xf32>
    %160 = math.tanh %159 : vector<8x128xf32>
    %cst_96 = arith.constant 5.000000e-01 : f32
    %161 = vector.broadcast %cst_96 : f32 to vector<8x128xf32>
    %162 = arith.mulf %161, %160 : vector<8x128xf32>
    %cst_97 = arith.constant 5.000000e-01 : f32
    %163 = vector.broadcast %cst_97 : f32 to vector<8x128xf32>
    %164 = arith.addf %162, %163 : vector<8x128xf32>
    %165 = vector.extract_strided_slice %156 {offsets = [0, 128], sizes = [8, 128], strides = [1, 1]} : vector<8x512xf32> to vector<8x128xf32>
    %cst_98 = arith.constant 5.000000e-01 : f32
    %166 = vector.broadcast %cst_98 : f32 to vector<8x128xf32>
    %167 = arith.mulf %166, %165 : vector<8x128xf32>
    %168 = math.tanh %167 : vector<8x128xf32>
    %cst_99 = arith.constant 5.000000e-01 : f32
    %169 = vector.broadcast %cst_99 : f32 to vector<8x128xf32>
    %170 = arith.mulf %169, %168 : vector<8x128xf32>
    %cst_100 = arith.constant 5.000000e-01 : f32
    %171 = vector.broadcast %cst_100 : f32 to vector<8x128xf32>
    %172 = arith.addf %170, %171 : vector<8x128xf32>
    %173 = vector.extract_strided_slice %156 {offsets = [0, 256], sizes = [8, 128], strides = [1, 1]} : vector<8x512xf32> to vector<8x128xf32>
    %174 = math.tanh %173 : vector<8x128xf32>
    %175 = vector.extract_strided_slice %156 {offsets = [0, 384], sizes = [8, 128], strides = [1, 1]} : vector<8x512xf32> to vector<8x128xf32>
    %cst_101 = arith.constant 5.000000e-01 : f32
    %176 = vector.broadcast %cst_101 : f32 to vector<8x128xf32>
    %177 = arith.mulf %176, %175 : vector<8x128xf32>
    %178 = math.tanh %177 : vector<8x128xf32>
    %cst_102 = arith.constant 5.000000e-01 : f32
    %179 = vector.broadcast %cst_102 : f32 to vector<8x128xf32>
    %180 = arith.mulf %179, %178 : vector<8x128xf32>
    %cst_103 = arith.constant 5.000000e-01 : f32
    %181 = vector.broadcast %cst_103 : f32 to vector<8x128xf32>
    %182 = arith.addf %180, %181 : vector<8x128xf32>
    %183 = arith.mulf %172, %153 : vector<8x128xf32>
    %184 = arith.mulf %164, %174 : vector<8x128xf32>
    %185 = arith.addf %183, %184 : vector<8x128xf32>
    %186 = math.tanh %185 : vector<8x128xf32>
    %187 = arith.mulf %182, %186 : vector<8x128xf32>
    %c3_i32 = arith.constant 3 : i32
    %188 = vector.broadcast %c3_i32 : i32 to vector<8x128xi32>
    %189 = arith.cmpi sgt, %25, %188 : vector<8x128xi32>
    %190 = arith.select %189, %187, %152 : vector<8x128xi1>, vector<8x128xf32>
    %c0_104 = arith.constant 0 : index
    %c0_105 = arith.constant 0 : index
    %191 = vector.load %arg14[%c0_104, %c0_105] : memref<8x128xf32, #tpu.memory_space<vmem>>, vector<8x128xf32>
    tpu.vector_store %arg14[%c0_104, %c0_105], %190 {strides = array<i32>} : memref<8x128xf32, #tpu.memory_space<vmem>>, vector<8x128xf32>,
    %192 = arith.select %189, %185, %153 : vector<8x128xi1>, vector<8x128xf32>
    %c0_106 = arith.constant 0 : index
    %c0_107 = arith.constant 0 : index
    %193 = vector.load %arg15[%c0_106, %c0_107] : memref<8x128xf32, #tpu.memory_space<vmem>>, vector<8x128xf32>
    tpu.vector_store %arg15[%c0_106, %c0_107], %192 {strides = array<i32>} : memref<8x128xf32, #tpu.memory_space<vmem>>, vector<8x128xf32>,
    %c0_108 = arith.constant 0 : index
    %c0_109 = arith.constant 0 : index
    %194 = vector.load %arg14[%c0_108, %c0_109] : memref<8x128xf32, #tpu.memory_space<vmem>>, vector<8x128xf32>
    %c0_110 = arith.constant 0 : index
    %c0_111 = arith.constant 0 : index
    %195 = vector.load %arg15[%c0_110, %c0_111] : memref<8x128xf32, #tpu.memory_space<vmem>>, vector<8x128xf32>
    %c32 = arith.constant 32 : index
    %c0_112 = arith.constant 0 : index
    %196 = vector.load %arg16[%c32, %c0_112] : memref<64x512xf32, #tpu.memory_space<vmem>>, vector<8x512xf32>
    %cst_113 = arith.constant dense<0.000000e+00> : vector<8x512xf32>
    %197 = tpu.matmul %194, %20, %cst_113 {dimension_numbers = #tpu.dot_dimension_numbers<[1], [0], [0], [1], [0, 0, 1, 1], [], []>} : vector<8x128xf32>, vector<128x512xf32>, vector<8x512xf32> -> vector<8x512xf32>
    %198 = arith.addf %196, %197 : vector<8x512xf32>
    %199 = vector.extract_strided_slice %198 {offsets = [0, 0], sizes = [8, 128], strides = [1, 1]} : vector<8x512xf32> to vector<8x128xf32>
    %cst_114 = arith.constant 5.000000e-01 : f32
    %200 = vector.broadcast %cst_114 : f32 to vector<8x128xf32>
    %201 = arith.mulf %200, %199 : vector<8x128xf32>
    %202 = math.tanh %201 : vector<8x128xf32>
    %cst_115 = arith.constant 5.000000e-01 : f32
    %203 = vector.broadcast %cst_115 : f32 to vector<8x128xf32>
    %204 = arith.mulf %203, %202 : vector<8x128xf32>
    %cst_116 = arith.constant 5.000000e-01 : f32
    %205 = vector.broadcast %cst_116 : f32 to vector<8x128xf32>
    %206 = arith.addf %204, %205 : vector<8x128xf32>
    %207 = vector.extract_strided_slice %198 {offsets = [0, 128], sizes = [8, 128], strides = [1, 1]} : vector<8x512xf32> to vector<8x128xf32>
    %cst_117 = arith.constant 5.000000e-01 : f32
    %208 = vector.broadcast %cst_117 : f32 to vector<8x128xf32>
    %209 = arith.mulf %208, %207 : vector<8x128xf32>
    %210 = math.tanh %209 : vector<8x128xf32>
    %cst_118 = arith.constant 5.000000e-01 : f32
    %211 = vector.broadcast %cst_118 : f32 to vector<8x128xf32>
    %212 = arith.mulf %211, %210 : vector<8x128xf32>
    %cst_119 = arith.constant 5.000000e-01 : f32
    %213 = vector.broadcast %cst_119 : f32 to vector<8x128xf32>
    %214 = arith.addf %212, %213 : vector<8x128xf32>
    %215 = vector.extract_strided_slice %198 {offsets = [0, 256], sizes = [8, 128], strides = [1, 1]} : vector<8x512xf32> to vector<8x128xf32>
    %216 = math.tanh %215 : vector<8x128xf32>
    %217 = vector.extract_strided_slice %198 {offsets = [0, 384], sizes = [8, 128], strides = [1, 1]} : vector<8x512xf32> to vector<8x128xf32>
    %cst_120 = arith.constant 5.000000e-01 : f32
    %218 = vector.broadcast %cst_120 : f32 to vector<8x128xf32>
    %219 = arith.mulf %218, %217 : vector<8x128xf32>
    %220 = math.tanh %219 : vector<8x128xf32>
    %cst_121 = arith.constant 5.000000e-01 : f32
    %221 = vector.broadcast %cst_121 : f32 to vector<8x128xf32>
    %222 = arith.mulf %221, %220 : vector<8x128xf32>
    %cst_122 = arith.constant 5.000000e-01 : f32
    %223 = vector.broadcast %cst_122 : f32 to vector<8x128xf32>
    %224 = arith.addf %222, %223 : vector<8x128xf32>
    %225 = arith.mulf %214, %195 : vector<8x128xf32>
    %226 = arith.mulf %206, %216 : vector<8x128xf32>
    %227 = arith.addf %225, %226 : vector<8x128xf32>
    %228 = math.tanh %227 : vector<8x128xf32>
    %229 = arith.mulf %224, %228 : vector<8x128xf32>
    %c4_i32 = arith.constant 4 : i32
    %230 = vector.broadcast %c4_i32 : i32 to vector<8x128xi32>
    %231 = arith.cmpi sgt, %25, %230 : vector<8x128xi32>
    %232 = arith.select %231, %229, %194 : vector<8x128xi1>, vector<8x128xf32>
    %c0_123 = arith.constant 0 : index
    %c0_124 = arith.constant 0 : index
    %233 = vector.load %arg14[%c0_123, %c0_124] : memref<8x128xf32, #tpu.memory_space<vmem>>, vector<8x128xf32>
    tpu.vector_store %arg14[%c0_123, %c0_124], %232 {strides = array<i32>} : memref<8x128xf32, #tpu.memory_space<vmem>>, vector<8x128xf32>,
    %234 = arith.select %231, %227, %195 : vector<8x128xi1>, vector<8x128xf32>
    %c0_125 = arith.constant 0 : index
    %c0_126 = arith.constant 0 : index
    %235 = vector.load %arg15[%c0_125, %c0_126] : memref<8x128xf32, #tpu.memory_space<vmem>>, vector<8x128xf32>
    tpu.vector_store %arg15[%c0_125, %c0_126], %234 {strides = array<i32>} : memref<8x128xf32, #tpu.memory_space<vmem>>, vector<8x128xf32>,
    %c0_127 = arith.constant 0 : index
    %c0_128 = arith.constant 0 : index
    %236 = vector.load %arg14[%c0_127, %c0_128] : memref<8x128xf32, #tpu.memory_space<vmem>>, vector<8x128xf32>
    %c0_129 = arith.constant 0 : index
    %c0_130 = arith.constant 0 : index
    %237 = vector.load %arg15[%c0_129, %c0_130] : memref<8x128xf32, #tpu.memory_space<vmem>>, vector<8x128xf32>
    %c40 = arith.constant 40 : index
    %c0_131 = arith.constant 0 : index
    %238 = vector.load %arg16[%c40, %c0_131] : memref<64x512xf32, #tpu.memory_space<vmem>>, vector<8x512xf32>
    %cst_132 = arith.constant dense<0.000000e+00> : vector<8x512xf32>
    %239 = tpu.matmul %236, %20, %cst_132 {dimension_numbers = #tpu.dot_dimension_numbers<[1], [0], [0], [1], [0, 0, 1, 1], [], []>} : vector<8x128xf32>, vector<128x512xf32>, vector<8x512xf32> -> vector<8x512xf32>
    %240 = arith.addf %238, %239 : vector<8x512xf32>
    %241 = vector.extract_strided_slice %240 {offsets = [0, 0], sizes = [8, 128], strides = [1, 1]} : vector<8x512xf32> to vector<8x128xf32>
    %cst_133 = arith.constant 5.000000e-01 : f32
    %242 = vector.broadcast %cst_133 : f32 to vector<8x128xf32>
    %243 = arith.mulf %242, %241 : vector<8x128xf32>
    %244 = math.tanh %243 : vector<8x128xf32>
    %cst_134 = arith.constant 5.000000e-01 : f32
    %245 = vector.broadcast %cst_134 : f32 to vector<8x128xf32>
    %246 = arith.mulf %245, %244 : vector<8x128xf32>
    %cst_135 = arith.constant 5.000000e-01 : f32
    %247 = vector.broadcast %cst_135 : f32 to vector<8x128xf32>
    %248 = arith.addf %246, %247 : vector<8x128xf32>
    %249 = vector.extract_strided_slice %240 {offsets = [0, 128], sizes = [8, 128], strides = [1, 1]} : vector<8x512xf32> to vector<8x128xf32>
    %cst_136 = arith.constant 5.000000e-01 : f32
    %250 = vector.broadcast %cst_136 : f32 to vector<8x128xf32>
    %251 = arith.mulf %250, %249 : vector<8x128xf32>
    %252 = math.tanh %251 : vector<8x128xf32>
    %cst_137 = arith.constant 5.000000e-01 : f32
    %253 = vector.broadcast %cst_137 : f32 to vector<8x128xf32>
    %254 = arith.mulf %253, %252 : vector<8x128xf32>
    %cst_138 = arith.constant 5.000000e-01 : f32
    %255 = vector.broadcast %cst_138 : f32 to vector<8x128xf32>
    %256 = arith.addf %254, %255 : vector<8x128xf32>
    %257 = vector.extract_strided_slice %240 {offsets = [0, 256], sizes = [8, 128], strides = [1, 1]} : vector<8x512xf32> to vector<8x128xf32>
    %258 = math.tanh %257 : vector<8x128xf32>
    %259 = vector.extract_strided_slice %240 {offsets = [0, 384], sizes = [8, 128], strides = [1, 1]} : vector<8x512xf32> to vector<8x128xf32>
    %cst_139 = arith.constant 5.000000e-01 : f32
    %260 = vector.broadcast %cst_139 : f32 to vector<8x128xf32>
    %261 = arith.mulf %260, %259 : vector<8x128xf32>
    %262 = math.tanh %261 : vector<8x128xf32>
    %cst_140 = arith.constant 5.000000e-01 : f32
    %263 = vector.broadcast %cst_140 : f32 to vector<8x128xf32>
    %264 = arith.mulf %263, %262 : vector<8x128xf32>
    %cst_141 = arith.constant 5.000000e-01 : f32
    %265 = vector.broadcast %cst_141 : f32 to vector<8x128xf32>
    %266 = arith.addf %264, %265 : vector<8x128xf32>
    %267 = arith.mulf %256, %237 : vector<8x128xf32>
    %268 = arith.mulf %248, %258 : vector<8x128xf32>
    %269 = arith.addf %267, %268 : vector<8x128xf32>
    %270 = math.tanh %269 : vector<8x128xf32>
    %271 = arith.mulf %266, %270 : vector<8x128xf32>
    %c5_i32 = arith.constant 5 : i32
    %272 = vector.broadcast %c5_i32 : i32 to vector<8x128xi32>
    %273 = arith.cmpi sgt, %25, %272 : vector<8x128xi32>
    %274 = arith.select %273, %271, %236 : vector<8x128xi1>, vector<8x128xf32>
    %c0_142 = arith.constant 0 : index
    %c0_143 = arith.constant 0 : index
    %275 = vector.load %arg14[%c0_142, %c0_143] : memref<8x128xf32, #tpu.memory_space<vmem>>, vector<8x128xf32>
    tpu.vector_store %arg14[%c0_142, %c0_143], %274 {strides = array<i32>} : memref<8x128xf32, #tpu.memory_space<vmem>>, vector<8x128xf32>,
    %276 = arith.select %273, %269, %237 : vector<8x128xi1>, vector<8x128xf32>
    %c0_144 = arith.constant 0 : index
    %c0_145 = arith.constant 0 : index
    %277 = vector.load %arg15[%c0_144, %c0_145] : memref<8x128xf32, #tpu.memory_space<vmem>>, vector<8x128xf32>
    tpu.vector_store %arg15[%c0_144, %c0_145], %276 {strides = array<i32>} : memref<8x128xf32, #tpu.memory_space<vmem>>, vector<8x128xf32>,
    %c0_146 = arith.constant 0 : index
    %c0_147 = arith.constant 0 : index
    %278 = vector.load %arg14[%c0_146, %c0_147] : memref<8x128xf32, #tpu.memory_space<vmem>>, vector<8x128xf32>
    %c0_148 = arith.constant 0 : index
    %c0_149 = arith.constant 0 : index
    %279 = vector.load %arg15[%c0_148, %c0_149] : memref<8x128xf32, #tpu.memory_space<vmem>>, vector<8x128xf32>
    %c48 = arith.constant 48 : index
    %c0_150 = arith.constant 0 : index
    %280 = vector.load %arg16[%c48, %c0_150] : memref<64x512xf32, #tpu.memory_space<vmem>>, vector<8x512xf32>
    %cst_151 = arith.constant dense<0.000000e+00> : vector<8x512xf32>
    %281 = tpu.matmul %278, %20, %cst_151 {dimension_numbers = #tpu.dot_dimension_numbers<[1], [0], [0], [1], [0, 0, 1, 1], [], []>} : vector<8x128xf32>, vector<128x512xf32>, vector<8x512xf32> -> vector<8x512xf32>
    %282 = arith.addf %280, %281 : vector<8x512xf32>
    %283 = vector.extract_strided_slice %282 {offsets = [0, 0], sizes = [8, 128], strides = [1, 1]} : vector<8x512xf32> to vector<8x128xf32>
    %cst_152 = arith.constant 5.000000e-01 : f32
    %284 = vector.broadcast %cst_152 : f32 to vector<8x128xf32>
    %285 = arith.mulf %284, %283 : vector<8x128xf32>
    %286 = math.tanh %285 : vector<8x128xf32>
    %cst_153 = arith.constant 5.000000e-01 : f32
    %287 = vector.broadcast %cst_153 : f32 to vector<8x128xf32>
    %288 = arith.mulf %287, %286 : vector<8x128xf32>
    %cst_154 = arith.constant 5.000000e-01 : f32
    %289 = vector.broadcast %cst_154 : f32 to vector<8x128xf32>
    %290 = arith.addf %288, %289 : vector<8x128xf32>
    %291 = vector.extract_strided_slice %282 {offsets = [0, 128], sizes = [8, 128], strides = [1, 1]} : vector<8x512xf32> to vector<8x128xf32>
    %cst_155 = arith.constant 5.000000e-01 : f32
    %292 = vector.broadcast %cst_155 : f32 to vector<8x128xf32>
    %293 = arith.mulf %292, %291 : vector<8x128xf32>
    %294 = math.tanh %293 : vector<8x128xf32>
    %cst_156 = arith.constant 5.000000e-01 : f32
    %295 = vector.broadcast %cst_156 : f32 to vector<8x128xf32>
    %296 = arith.mulf %295, %294 : vector<8x128xf32>
    %cst_157 = arith.constant 5.000000e-01 : f32
    %297 = vector.broadcast %cst_157 : f32 to vector<8x128xf32>
    %298 = arith.addf %296, %297 : vector<8x128xf32>
    %299 = vector.extract_strided_slice %282 {offsets = [0, 256], sizes = [8, 128], strides = [1, 1]} : vector<8x512xf32> to vector<8x128xf32>
    %300 = math.tanh %299 : vector<8x128xf32>
    %301 = vector.extract_strided_slice %282 {offsets = [0, 384], sizes = [8, 128], strides = [1, 1]} : vector<8x512xf32> to vector<8x128xf32>
    %cst_158 = arith.constant 5.000000e-01 : f32
    %302 = vector.broadcast %cst_158 : f32 to vector<8x128xf32>
    %303 = arith.mulf %302, %301 : vector<8x128xf32>
    %304 = math.tanh %303 : vector<8x128xf32>
    %cst_159 = arith.constant 5.000000e-01 : f32
    %305 = vector.broadcast %cst_159 : f32 to vector<8x128xf32>
    %306 = arith.mulf %305, %304 : vector<8x128xf32>
    %cst_160 = arith.constant 5.000000e-01 : f32
    %307 = vector.broadcast %cst_160 : f32 to vector<8x128xf32>
    %308 = arith.addf %306, %307 : vector<8x128xf32>
    %309 = arith.mulf %298, %279 : vector<8x128xf32>
    %310 = arith.mulf %290, %300 : vector<8x128xf32>
    %311 = arith.addf %309, %310 : vector<8x128xf32>
    %312 = math.tanh %311 : vector<8x128xf32>
    %313 = arith.mulf %308, %312 : vector<8x128xf32>
    %c6_i32 = arith.constant 6 : i32
    %314 = vector.broadcast %c6_i32 : i32 to vector<8x128xi32>
    %315 = arith.cmpi sgt, %25, %314 : vector<8x128xi32>
    %316 = arith.select %315, %313, %278 : vector<8x128xi1>, vector<8x128xf32>
    %c0_161 = arith.constant 0 : index
    %c0_162 = arith.constant 0 : index
    %317 = vector.load %arg14[%c0_161, %c0_162] : memref<8x128xf32, #tpu.memory_space<vmem>>, vector<8x128xf32>
    tpu.vector_store %arg14[%c0_161, %c0_162], %316 {strides = array<i32>} : memref<8x128xf32, #tpu.memory_space<vmem>>, vector<8x128xf32>,
    %318 = arith.select %315, %311, %279 : vector<8x128xi1>, vector<8x128xf32>
    %c0_163 = arith.constant 0 : index
    %c0_164 = arith.constant 0 : index
    %319 = vector.load %arg15[%c0_163, %c0_164] : memref<8x128xf32, #tpu.memory_space<vmem>>, vector<8x128xf32>
    tpu.vector_store %arg15[%c0_163, %c0_164], %318 {strides = array<i32>} : memref<8x128xf32, #tpu.memory_space<vmem>>, vector<8x128xf32>,
    %c0_165 = arith.constant 0 : index
    %c0_166 = arith.constant 0 : index
    %320 = vector.load %arg14[%c0_165, %c0_166] : memref<8x128xf32, #tpu.memory_space<vmem>>, vector<8x128xf32>
    %c0_167 = arith.constant 0 : index
    %c0_168 = arith.constant 0 : index
    %321 = vector.load %arg15[%c0_167, %c0_168] : memref<8x128xf32, #tpu.memory_space<vmem>>, vector<8x128xf32>
    %c56 = arith.constant 56 : index
    %c0_169 = arith.constant 0 : index
    %322 = vector.load %arg16[%c56, %c0_169] : memref<64x512xf32, #tpu.memory_space<vmem>>, vector<8x512xf32>
    %cst_170 = arith.constant dense<0.000000e+00> : vector<8x512xf32>
    %323 = tpu.matmul %320, %20, %cst_170 {dimension_numbers = #tpu.dot_dimension_numbers<[1], [0], [0], [1], [0, 0, 1, 1], [], []>} : vector<8x128xf32>, vector<128x512xf32>, vector<8x512xf32> -> vector<8x512xf32>
    %324 = arith.addf %322, %323 : vector<8x512xf32>
    %325 = vector.extract_strided_slice %324 {offsets = [0, 0], sizes = [8, 128], strides = [1, 1]} : vector<8x512xf32> to vector<8x128xf32>
    %cst_171 = arith.constant 5.000000e-01 : f32
    %326 = vector.broadcast %cst_171 : f32 to vector<8x128xf32>
    %327 = arith.mulf %326, %325 : vector<8x128xf32>
    %328 = math.tanh %327 : vector<8x128xf32>
    %cst_172 = arith.constant 5.000000e-01 : f32
    %329 = vector.broadcast %cst_172 : f32 to vector<8x128xf32>
    %330 = arith.mulf %329, %328 : vector<8x128xf32>
    %cst_173 = arith.constant 5.000000e-01 : f32
    %331 = vector.broadcast %cst_173 : f32 to vector<8x128xf32>
    %332 = arith.addf %330, %331 : vector<8x128xf32>
    %333 = vector.extract_strided_slice %324 {offsets = [0, 128], sizes = [8, 128], strides = [1, 1]} : vector<8x512xf32> to vector<8x128xf32>
    %cst_174 = arith.constant 5.000000e-01 : f32
    %334 = vector.broadcast %cst_174 : f32 to vector<8x128xf32>
    %335 = arith.mulf %334, %333 : vector<8x128xf32>
    %336 = math.tanh %335 : vector<8x128xf32>
    %cst_175 = arith.constant 5.000000e-01 : f32
    %337 = vector.broadcast %cst_175 : f32 to vector<8x128xf32>
    %338 = arith.mulf %337, %336 : vector<8x128xf32>
    %cst_176 = arith.constant 5.000000e-01 : f32
    %339 = vector.broadcast %cst_176 : f32 to vector<8x128xf32>
    %340 = arith.addf %338, %339 : vector<8x128xf32>
    %341 = vector.extract_strided_slice %324 {offsets = [0, 256], sizes = [8, 128], strides = [1, 1]} : vector<8x512xf32> to vector<8x128xf32>
    %342 = math.tanh %341 : vector<8x128xf32>
    %343 = vector.extract_strided_slice %324 {offsets = [0, 384], sizes = [8, 128], strides = [1, 1]} : vector<8x512xf32> to vector<8x128xf32>
    %cst_177 = arith.constant 5.000000e-01 : f32
    %344 = vector.broadcast %cst_177 : f32 to vector<8x128xf32>
    %345 = arith.mulf %344, %343 : vector<8x128xf32>
    %346 = math.tanh %345 : vector<8x128xf32>
    %cst_178 = arith.constant 5.000000e-01 : f32
    %347 = vector.broadcast %cst_178 : f32 to vector<8x128xf32>
    %348 = arith.mulf %347, %346 : vector<8x128xf32>
    %cst_179 = arith.constant 5.000000e-01 : f32
    %349 = vector.broadcast %cst_179 : f32 to vector<8x128xf32>
    %350 = arith.addf %348, %349 : vector<8x128xf32>
    %351 = arith.mulf %340, %321 : vector<8x128xf32>
    %352 = arith.mulf %332, %342 : vector<8x128xf32>
    %353 = arith.addf %351, %352 : vector<8x128xf32>
    %354 = math.tanh %353 : vector<8x128xf32>
    %355 = arith.mulf %350, %354 : vector<8x128xf32>
    %c7_i32 = arith.constant 7 : i32
    %356 = vector.broadcast %c7_i32 : i32 to vector<8x128xi32>
    %357 = arith.cmpi sgt, %25, %356 : vector<8x128xi32>
    %358 = arith.select %357, %355, %320 : vector<8x128xi1>, vector<8x128xf32>
    %c0_180 = arith.constant 0 : index
    %c0_181 = arith.constant 0 : index
    %359 = vector.load %arg14[%c0_180, %c0_181] : memref<8x128xf32, #tpu.memory_space<vmem>>, vector<8x128xf32>
    tpu.vector_store %arg14[%c0_180, %c0_181], %358 {strides = array<i32>} : memref<8x128xf32, #tpu.memory_space<vmem>>, vector<8x128xf32>,
    %360 = arith.select %357, %353, %321 : vector<8x128xi1>, vector<8x128xf32>
    %c0_182 = arith.constant 0 : index
    %c0_183 = arith.constant 0 : index
    %361 = vector.load %arg15[%c0_182, %c0_183] : memref<8x128xf32, #tpu.memory_space<vmem>>, vector<8x128xf32>
    tpu.vector_store %arg15[%c0_182, %c0_183], %360 {strides = array<i32>} : memref<8x128xf32, #tpu.memory_space<vmem>>, vector<8x128xf32>,
    %c0_184 = arith.constant 0 : index
    %c0_185 = arith.constant 0 : index
    %362 = vector.load %arg9[%c0_184, %c0_185] : memref<1x512xf32, #tpu.memory_space<vmem>>, vector<1x512xf32>
    %363 = vector.shape_cast %362 : vector<1x512xf32> to vector<1x512xf32>
    %364 = vector.broadcast %363 : vector<1x512xf32> to vector<8x512xf32>
    %c0_186 = arith.constant 0 : index
    %c0_187 = arith.constant 0 : index
    %365 = vector.load %arg14[%c0_186, %c0_187] : memref<8x128xf32, #tpu.memory_space<vmem>>, vector<8x128xf32>
    %c0_188 = arith.constant 0 : index
    %c0_189 = arith.constant 0 : index
    %366 = vector.load %arg15[%c0_188, %c0_189] : memref<8x128xf32, #tpu.memory_space<vmem>>, vector<8x128xf32>
    %cst_190 = arith.constant dense<0.000000e+00> : vector<8x512xf32>
    %367 = tpu.matmul %365, %21, %cst_190 {dimension_numbers = #tpu.dot_dimension_numbers<[1], [0], [0], [1], [0, 0, 1, 1], [], []>} : vector<8x128xf32>, vector<128x512xf32>, vector<8x512xf32> -> vector<8x512xf32>
    %368 = arith.addf %364, %367 : vector<8x512xf32>
    %369 = vector.extract_strided_slice %368 {offsets = [0, 0], sizes = [8, 128], strides = [1, 1]} : vector<8x512xf32> to vector<8x128xf32>
    %cst_191 = arith.constant 5.000000e-01 : f32
    %370 = vector.broadcast %cst_191 : f32 to vector<8x128xf32>
    %371 = arith.mulf %370, %369 : vector<8x128xf32>
    %372 = math.tanh %371 : vector<8x128xf32>
    %cst_192 = arith.constant 5.000000e-01 : f32
    %373 = vector.broadcast %cst_192 : f32 to vector<8x128xf32>
    %374 = arith.mulf %373, %372 : vector<8x128xf32>
    %cst_193 = arith.constant 5.000000e-01 : f32
    %375 = vector.broadcast %cst_193 : f32 to vector<8x128xf32>
    %376 = arith.addf %374, %375 : vector<8x128xf32>
    %377 = vector.extract_strided_slice %368 {offsets = [0, 128], sizes = [8, 128], strides = [1, 1]} : vector<8x512xf32> to vector<8x128xf32>
    %cst_194 = arith.constant 5.000000e-01 : f32
    %378 = vector.broadcast %cst_194 : f32 to vector<8x128xf32>
    %379 = arith.mulf %378, %377 : vector<8x128xf32>
    %380 = math.tanh %379 : vector<8x128xf32>
    %cst_195 = arith.constant 5.000000e-01 : f32
    %381 = vector.broadcast %cst_195 : f32 to vector<8x128xf32>
    %382 = arith.mulf %381, %380 : vector<8x128xf32>
    %cst_196 = arith.constant 5.000000e-01 : f32
    %383 = vector.broadcast %cst_196 : f32 to vector<8x128xf32>
    %384 = arith.addf %382, %383 : vector<8x128xf32>
    %385 = vector.extract_strided_slice %368 {offsets = [0, 256], sizes = [8, 128], strides = [1, 1]} : vector<8x512xf32> to vector<8x128xf32>
    %386 = math.tanh %385 : vector<8x128xf32>
    %387 = vector.extract_strided_slice %368 {offsets = [0, 384], sizes = [8, 128], strides = [1, 1]} : vector<8x512xf32> to vector<8x128xf32>
    %cst_197 = arith.constant 5.000000e-01 : f32
    %388 = vector.broadcast %cst_197 : f32 to vector<8x128xf32>
    %389 = arith.mulf %388, %387 : vector<8x128xf32>
    %390 = math.tanh %389 : vector<8x128xf32>
    %cst_198 = arith.constant 5.000000e-01 : f32
    %391 = vector.broadcast %cst_198 : f32 to vector<8x128xf32>
    %392 = arith.mulf %391, %390 : vector<8x128xf32>
    %cst_199 = arith.constant 5.000000e-01 : f32
    %393 = vector.broadcast %cst_199 : f32 to vector<8x128xf32>
    %394 = arith.addf %392, %393 : vector<8x128xf32>
    %395 = arith.mulf %384, %366 : vector<8x128xf32>
    %396 = arith.mulf %376, %386 : vector<8x128xf32>
    %397 = arith.addf %395, %396 : vector<8x128xf32>
    %398 = math.tanh %397 : vector<8x128xf32>
    %399 = arith.mulf %394, %398 : vector<8x128xf32>
    %c0_200 = arith.constant 0 : index
    %c0_201 = arith.constant 0 : index
    %400 = vector.load %arg14[%c0_200, %c0_201] : memref<8x128xf32, #tpu.memory_space<vmem>>, vector<8x128xf32>
    tpu.vector_store %arg14[%c0_200, %c0_201], %399 {strides = array<i32>} : memref<8x128xf32, #tpu.memory_space<vmem>>, vector<8x128xf32>,
    %c0_202 = arith.constant 0 : index
    %c0_203 = arith.constant 0 : index
    %401 = vector.load %arg15[%c0_202, %c0_203] : memref<8x128xf32, #tpu.memory_space<vmem>>, vector<8x128xf32>
    tpu.vector_store %arg15[%c0_202, %c0_203], %397 {strides = array<i32>} : memref<8x128xf32, #tpu.memory_space<vmem>>, vector<8x128xf32>,
    %c0_204 = arith.constant 0 : index
    %c0_205 = arith.constant 0 : index
    %402 = vector.load %arg18[%c0_204, %c0_205] : memref<48x128xf32, #tpu.memory_space<vmem>>, vector<8x128xf32>
    tpu.vector_store %arg18[%c0_204, %c0_205], %399 {strides = array<i32>} : memref<48x128xf32, #tpu.memory_space<vmem>>, vector<8x128xf32>,
    %c0_206 = arith.constant 0 : index
    %c0_207 = arith.constant 0 : index
    %403 = vector.load %arg17[%c0_206, %c0_207] : memref<48x512xf32, #tpu.memory_space<vmem>>, vector<8x512xf32>
    %c0_208 = arith.constant 0 : index
    %c0_209 = arith.constant 0 : index
    %404 = vector.load %arg14[%c0_208, %c0_209] : memref<8x128xf32, #tpu.memory_space<vmem>>, vector<8x128xf32>
    %c0_210 = arith.constant 0 : index
    %c0_211 = arith.constant 0 : index
    %405 = vector.load %arg15[%c0_210, %c0_211] : memref<8x128xf32, #tpu.memory_space<vmem>>, vector<8x128xf32>
    %cst_212 = arith.constant dense<0.000000e+00> : vector<8x512xf32>
    %406 = tpu.matmul %404, %21, %cst_212 {dimension_numbers = #tpu.dot_dimension_numbers<[1], [0], [0], [1], [0, 0, 1, 1], [], []>} : vector<8x128xf32>, vector<128x512xf32>, vector<8x512xf32> -> vector<8x512xf32>
    %407 = arith.addf %403, %406 : vector<8x512xf32>
    %408 = vector.extract_strided_slice %407 {offsets = [0, 0], sizes = [8, 128], strides = [1, 1]} : vector<8x512xf32> to vector<8x128xf32>
    %cst_213 = arith.constant 5.000000e-01 : f32
    %409 = vector.broadcast %cst_213 : f32 to vector<8x128xf32>
    %410 = arith.mulf %409, %408 : vector<8x128xf32>
    %411 = math.tanh %410 : vector<8x128xf32>
    %cst_214 = arith.constant 5.000000e-01 : f32
    %412 = vector.broadcast %cst_214 : f32 to vector<8x128xf32>
    %413 = arith.mulf %412, %411 : vector<8x128xf32>
    %cst_215 = arith.constant 5.000000e-01 : f32
    %414 = vector.broadcast %cst_215 : f32 to vector<8x128xf32>
    %415 = arith.addf %413, %414 : vector<8x128xf32>
    %416 = vector.extract_strided_slice %407 {offsets = [0, 128], sizes = [8, 128], strides = [1, 1]} : vector<8x512xf32> to vector<8x128xf32>
    %cst_216 = arith.constant 5.000000e-01 : f32
    %417 = vector.broadcast %cst_216 : f32 to vector<8x128xf32>
    %418 = arith.mulf %417, %416 : vector<8x128xf32>
    %419 = math.tanh %418 : vector<8x128xf32>
    %cst_217 = arith.constant 5.000000e-01 : f32
    %420 = vector.broadcast %cst_217 : f32 to vector<8x128xf32>
    %421 = arith.mulf %420, %419 : vector<8x128xf32>
    %cst_218 = arith.constant 5.000000e-01 : f32
    %422 = vector.broadcast %cst_218 : f32 to vector<8x128xf32>
    %423 = arith.addf %421, %422 : vector<8x128xf32>
    %424 = vector.extract_strided_slice %407 {offsets = [0, 256], sizes = [8, 128], strides = [1, 1]} : vector<8x512xf32> to vector<8x128xf32>
    %425 = math.tanh %424 : vector<8x128xf32>
    %426 = vector.extract_strided_slice %407 {offsets = [0, 384], sizes = [8, 128], strides = [1, 1]} : vector<8x512xf32> to vector<8x128xf32>
    %cst_219 = arith.constant 5.000000e-01 : f32
    %427 = vector.broadcast %cst_219 : f32 to vector<8x128xf32>
    %428 = arith.mulf %427, %426 : vector<8x128xf32>
    %429 = math.tanh %428 : vector<8x128xf32>
    %cst_220 = arith.constant 5.000000e-01 : f32
    %430 = vector.broadcast %cst_220 : f32 to vector<8x128xf32>
    %431 = arith.mulf %430, %429 : vector<8x128xf32>
    %cst_221 = arith.constant 5.000000e-01 : f32
    %432 = vector.broadcast %cst_221 : f32 to vector<8x128xf32>
    %433 = arith.addf %431, %432 : vector<8x128xf32>
    %434 = arith.mulf %423, %405 : vector<8x128xf32>
    %435 = arith.mulf %415, %425 : vector<8x128xf32>
    %436 = arith.addf %434, %435 : vector<8x128xf32>
    %437 = math.tanh %436 : vector<8x128xf32>
    %438 = arith.mulf %433, %437 : vector<8x128xf32>
    %c0_222 = arith.constant 0 : index
    %c0_223 = arith.constant 0 : index
    %439 = vector.load %arg14[%c0_222, %c0_223] : memref<8x128xf32, #tpu.memory_space<vmem>>, vector<8x128xf32>
    tpu.vector_store %arg14[%c0_222, %c0_223], %438 {strides = array<i32>} : memref<8x128xf32, #tpu.memory_space<vmem>>, vector<8x128xf32>,
    %c0_224 = arith.constant 0 : index
    %c0_225 = arith.constant 0 : index
    %440 = vector.load %arg15[%c0_224, %c0_225] : memref<8x128xf32, #tpu.memory_space<vmem>>, vector<8x128xf32>
    tpu.vector_store %arg15[%c0_224, %c0_225], %436 {strides = array<i32>} : memref<8x128xf32, #tpu.memory_space<vmem>>, vector<8x128xf32>,
    %c8_226 = arith.constant 8 : index
    %c0_227 = arith.constant 0 : index
    %441 = vector.load %arg18[%c8_226, %c0_227] : memref<48x128xf32, #tpu.memory_space<vmem>>, vector<8x128xf32>
    tpu.vector_store %arg18[%c8_226, %c0_227], %438 {strides = array<i32>} : memref<48x128xf32, #tpu.memory_space<vmem>>, vector<8x128xf32>,
    %c8_228 = arith.constant 8 : index
    %c0_229 = arith.constant 0 : index
    %442 = vector.load %arg17[%c8_228, %c0_229] : memref<48x512xf32, #tpu.memory_space<vmem>>, vector<8x512xf32>
    %c0_230 = arith.constant 0 : index
    %c0_231 = arith.constant 0 : index
    %443 = vector.load %arg14[%c0_230, %c0_231] : memref<8x128xf32, #tpu.memory_space<vmem>>, vector<8x128xf32>
    %c0_232 = arith.constant 0 : index
    %c0_233 = arith.constant 0 : index
    %444 = vector.load %arg15[%c0_232, %c0_233] : memref<8x128xf32, #tpu.memory_space<vmem>>, vector<8x128xf32>
    %cst_234 = arith.constant dense<0.000000e+00> : vector<8x512xf32>
    %445 = tpu.matmul %443, %21, %cst_234 {dimension_numbers = #tpu.dot_dimension_numbers<[1], [0], [0], [1], [0, 0, 1, 1], [], []>} : vector<8x128xf32>, vector<128x512xf32>, vector<8x512xf32> -> vector<8x512xf32>
    %446 = arith.addf %442, %445 : vector<8x512xf32>
    %447 = vector.extract_strided_slice %446 {offsets = [0, 0], sizes = [8, 128], strides = [1, 1]} : vector<8x512xf32> to vector<8x128xf32>
    %cst_235 = arith.constant 5.000000e-01 : f32
    %448 = vector.broadcast %cst_235 : f32 to vector<8x128xf32>
    %449 = arith.mulf %448, %447 : vector<8x128xf32>
    %450 = math.tanh %449 : vector<8x128xf32>
    %cst_236 = arith.constant 5.000000e-01 : f32
    %451 = vector.broadcast %cst_236 : f32 to vector<8x128xf32>
    %452 = arith.mulf %451, %450 : vector<8x128xf32>
    %cst_237 = arith.constant 5.000000e-01 : f32
    %453 = vector.broadcast %cst_237 : f32 to vector<8x128xf32>
    %454 = arith.addf %452, %453 : vector<8x128xf32>
    %455 = vector.extract_strided_slice %446 {offsets = [0, 128], sizes = [8, 128], strides = [1, 1]} : vector<8x512xf32> to vector<8x128xf32>
    %cst_238 = arith.constant 5.000000e-01 : f32
    %456 = vector.broadcast %cst_238 : f32 to vector<8x128xf32>
    %457 = arith.mulf %456, %455 : vector<8x128xf32>
    %458 = math.tanh %457 : vector<8x128xf32>
    %cst_239 = arith.constant 5.000000e-01 : f32
    %459 = vector.broadcast %cst_239 : f32 to vector<8x128xf32>
    %460 = arith.mulf %459, %458 : vector<8x128xf32>
    %cst_240 = arith.constant 5.000000e-01 : f32
    %461 = vector.broadcast %cst_240 : f32 to vector<8x128xf32>
    %462 = arith.addf %460, %461 : vector<8x128xf32>
    %463 = vector.extract_strided_slice %446 {offsets = [0, 256], sizes = [8, 128], strides = [1, 1]} : vector<8x512xf32> to vector<8x128xf32>
    %464 = math.tanh %463 : vector<8x128xf32>
    %465 = vector.extract_strided_slice %446 {offsets = [0, 384], sizes = [8, 128], strides = [1, 1]} : vector<8x512xf32> to vector<8x128xf32>
    %cst_241 = arith.constant 5.000000e-01 : f32
    %466 = vector.broadcast %cst_241 : f32 to vector<8x128xf32>
    %467 = arith.mulf %466, %465 : vector<8x128xf32>
    %468 = math.tanh %467 : vector<8x128xf32>
    %cst_242 = arith.constant 5.000000e-01 : f32
    %469 = vector.broadcast %cst_242 : f32 to vector<8x128xf32>
    %470 = arith.mulf %469, %468 : vector<8x128xf32>
    %cst_243 = arith.constant 5.000000e-01 : f32
    %471 = vector.broadcast %cst_243 : f32 to vector<8x128xf32>
    %472 = arith.addf %470, %471 : vector<8x128xf32>
    %473 = arith.mulf %462, %444 : vector<8x128xf32>
    %474 = arith.mulf %454, %464 : vector<8x128xf32>
    %475 = arith.addf %473, %474 : vector<8x128xf32>
    %476 = math.tanh %475 : vector<8x128xf32>
    %477 = arith.mulf %472, %476 : vector<8x128xf32>
    %c0_244 = arith.constant 0 : index
    %c0_245 = arith.constant 0 : index
    %478 = vector.load %arg14[%c0_244, %c0_245] : memref<8x128xf32, #tpu.memory_space<vmem>>, vector<8x128xf32>
    tpu.vector_store %arg14[%c0_244, %c0_245], %477 {strides = array<i32>} : memref<8x128xf32, #tpu.memory_space<vmem>>, vector<8x128xf32>,
    %c0_246 = arith.constant 0 : index
    %c0_247 = arith.constant 0 : index
    %479 = vector.load %arg15[%c0_246, %c0_247] : memref<8x128xf32, #tpu.memory_space<vmem>>, vector<8x128xf32>
    tpu.vector_store %arg15[%c0_246, %c0_247], %475 {strides = array<i32>} : memref<8x128xf32, #tpu.memory_space<vmem>>, vector<8x128xf32>,
    %c16_248 = arith.constant 16 : index
    %c0_249 = arith.constant 0 : index
    %480 = vector.load %arg18[%c16_248, %c0_249] : memref<48x128xf32, #tpu.memory_space<vmem>>, vector<8x128xf32>
    tpu.vector_store %arg18[%c16_248, %c0_249], %477 {strides = array<i32>} : memref<48x128xf32, #tpu.memory_space<vmem>>, vector<8x128xf32>,
    %c16_250 = arith.constant 16 : index
    %c0_251 = arith.constant 0 : index
    %481 = vector.load %arg17[%c16_250, %c0_251] : memref<48x512xf32, #tpu.memory_space<vmem>>, vector<8x512xf32>
    %c0_252 = arith.constant 0 : index
    %c0_253 = arith.constant 0 : index
    %482 = vector.load %arg14[%c0_252, %c0_253] : memref<8x128xf32, #tpu.memory_space<vmem>>, vector<8x128xf32>
    %c0_254 = arith.constant 0 : index
    %c0_255 = arith.constant 0 : index
    %483 = vector.load %arg15[%c0_254, %c0_255] : memref<8x128xf32, #tpu.memory_space<vmem>>, vector<8x128xf32>
    %cst_256 = arith.constant dense<0.000000e+00> : vector<8x512xf32>
    %484 = tpu.matmul %482, %21, %cst_256 {dimension_numbers = #tpu.dot_dimension_numbers<[1], [0], [0], [1], [0, 0, 1, 1], [], []>} : vector<8x128xf32>, vector<128x512xf32>, vector<8x512xf32> -> vector<8x512xf32>
    %485 = arith.addf %481, %484 : vector<8x512xf32>
    %486 = vector.extract_strided_slice %485 {offsets = [0, 0], sizes = [8, 128], strides = [1, 1]} : vector<8x512xf32> to vector<8x128xf32>
    %cst_257 = arith.constant 5.000000e-01 : f32
    %487 = vector.broadcast %cst_257 : f32 to vector<8x128xf32>
    %488 = arith.mulf %487, %486 : vector<8x128xf32>
    %489 = math.tanh %488 : vector<8x128xf32>
    %cst_258 = arith.constant 5.000000e-01 : f32
    %490 = vector.broadcast %cst_258 : f32 to vector<8x128xf32>
    %491 = arith.mulf %490, %489 : vector<8x128xf32>
    %cst_259 = arith.constant 5.000000e-01 : f32
    %492 = vector.broadcast %cst_259 : f32 to vector<8x128xf32>
    %493 = arith.addf %491, %492 : vector<8x128xf32>
    %494 = vector.extract_strided_slice %485 {offsets = [0, 128], sizes = [8, 128], strides = [1, 1]} : vector<8x512xf32> to vector<8x128xf32>
    %cst_260 = arith.constant 5.000000e-01 : f32
    %495 = vector.broadcast %cst_260 : f32 to vector<8x128xf32>
    %496 = arith.mulf %495, %494 : vector<8x128xf32>
    %497 = math.tanh %496 : vector<8x128xf32>
    %cst_261 = arith.constant 5.000000e-01 : f32
    %498 = vector.broadcast %cst_261 : f32 to vector<8x128xf32>
    %499 = arith.mulf %498, %497 : vector<8x128xf32>
    %cst_262 = arith.constant 5.000000e-01 : f32
    %500 = vector.broadcast %cst_262 : f32 to vector<8x128xf32>
    %501 = arith.addf %499, %500 : vector<8x128xf32>
    %502 = vector.extract_strided_slice %485 {offsets = [0, 256], sizes = [8, 128], strides = [1, 1]} : vector<8x512xf32> to vector<8x128xf32>
    %503 = math.tanh %502 : vector<8x128xf32>
    %504 = vector.extract_strided_slice %485 {offsets = [0, 384], sizes = [8, 128], strides = [1, 1]} : vector<8x512xf32> to vector<8x128xf32>
    %cst_263 = arith.constant 5.000000e-01 : f32
    %505 = vector.broadcast %cst_263 : f32 to vector<8x128xf32>
    %506 = arith.mulf %505, %504 : vector<8x128xf32>
    %507 = math.tanh %506 : vector<8x128xf32>
    %cst_264 = arith.constant 5.000000e-01 : f32
    %508 = vector.broadcast %cst_264 : f32 to vector<8x128xf32>
    %509 = arith.mulf %508, %507 : vector<8x128xf32>
    %cst_265 = arith.constant 5.000000e-01 : f32
    %510 = vector.broadcast %cst_265 : f32 to vector<8x128xf32>
    %511 = arith.addf %509, %510 : vector<8x128xf32>
    %512 = arith.mulf %501, %483 : vector<8x128xf32>
    %513 = arith.mulf %493, %503 : vector<8x128xf32>
    %514 = arith.addf %512, %513 : vector<8x128xf32>
    %515 = math.tanh %514 : vector<8x128xf32>
    %516 = arith.mulf %511, %515 : vector<8x128xf32>
    %c0_266 = arith.constant 0 : index
    %c0_267 = arith.constant 0 : index
    %517 = vector.load %arg14[%c0_266, %c0_267] : memref<8x128xf32, #tpu.memory_space<vmem>>, vector<8x128xf32>
    tpu.vector_store %arg14[%c0_266, %c0_267], %516 {strides = array<i32>} : memref<8x128xf32, #tpu.memory_space<vmem>>, vector<8x128xf32>,
    %c0_268 = arith.constant 0 : index
    %c0_269 = arith.constant 0 : index
    %518 = vector.load %arg15[%c0_268, %c0_269] : memref<8x128xf32, #tpu.memory_space<vmem>>, vector<8x128xf32>
    tpu.vector_store %arg15[%c0_268, %c0_269], %514 {strides = array<i32>} : memref<8x128xf32, #tpu.memory_space<vmem>>, vector<8x128xf32>,
    %c24_270 = arith.constant 24 : index
    %c0_271 = arith.constant 0 : index
    %519 = vector.load %arg18[%c24_270, %c0_271] : memref<48x128xf32, #tpu.memory_space<vmem>>, vector<8x128xf32>
    tpu.vector_store %arg18[%c24_270, %c0_271], %516 {strides = array<i32>} : memref<48x128xf32, #tpu.memory_space<vmem>>, vector<8x128xf32>,
    %c24_272 = arith.constant 24 : index
    %c0_273 = arith.constant 0 : index
    %520 = vector.load %arg17[%c24_272, %c0_273] : memref<48x512xf32, #tpu.memory_space<vmem>>, vector<8x512xf32>
    %c0_274 = arith.constant 0 : index
    %c0_275 = arith.constant 0 : index
    %521 = vector.load %arg14[%c0_274, %c0_275] : memref<8x128xf32, #tpu.memory_space<vmem>>, vector<8x128xf32>
    %c0_276 = arith.constant 0 : index
    %c0_277 = arith.constant 0 : index
    %522 = vector.load %arg15[%c0_276, %c0_277] : memref<8x128xf32, #tpu.memory_space<vmem>>, vector<8x128xf32>
    %cst_278 = arith.constant dense<0.000000e+00> : vector<8x512xf32>
    %523 = tpu.matmul %521, %21, %cst_278 {dimension_numbers = #tpu.dot_dimension_numbers<[1], [0], [0], [1], [0, 0, 1, 1], [], []>} : vector<8x128xf32>, vector<128x512xf32>, vector<8x512xf32> -> vector<8x512xf32>
    %524 = arith.addf %520, %523 : vector<8x512xf32>
    %525 = vector.extract_strided_slice %524 {offsets = [0, 0], sizes = [8, 128], strides = [1, 1]} : vector<8x512xf32> to vector<8x128xf32>
    %cst_279 = arith.constant 5.000000e-01 : f32
    %526 = vector.broadcast %cst_279 : f32 to vector<8x128xf32>
    %527 = arith.mulf %526, %525 : vector<8x128xf32>
    %528 = math.tanh %527 : vector<8x128xf32>
    %cst_280 = arith.constant 5.000000e-01 : f32
    %529 = vector.broadcast %cst_280 : f32 to vector<8x128xf32>
    %530 = arith.mulf %529, %528 : vector<8x128xf32>
    %cst_281 = arith.constant 5.000000e-01 : f32
    %531 = vector.broadcast %cst_281 : f32 to vector<8x128xf32>
    %532 = arith.addf %530, %531 : vector<8x128xf32>
    %533 = vector.extract_strided_slice %524 {offsets = [0, 128], sizes = [8, 128], strides = [1, 1]} : vector<8x512xf32> to vector<8x128xf32>
    %cst_282 = arith.constant 5.000000e-01 : f32
    %534 = vector.broadcast %cst_282 : f32 to vector<8x128xf32>
    %535 = arith.mulf %534, %533 : vector<8x128xf32>
    %536 = math.tanh %535 : vector<8x128xf32>
    %cst_283 = arith.constant 5.000000e-01 : f32
    %537 = vector.broadcast %cst_283 : f32 to vector<8x128xf32>
    %538 = arith.mulf %537, %536 : vector<8x128xf32>
    %cst_284 = arith.constant 5.000000e-01 : f32
    %539 = vector.broadcast %cst_284 : f32 to vector<8x128xf32>
    %540 = arith.addf %538, %539 : vector<8x128xf32>
    %541 = vector.extract_strided_slice %524 {offsets = [0, 256], sizes = [8, 128], strides = [1, 1]} : vector<8x512xf32> to vector<8x128xf32>
    %542 = math.tanh %541 : vector<8x128xf32>
    %543 = vector.extract_strided_slice %524 {offsets = [0, 384], sizes = [8, 128], strides = [1, 1]} : vector<8x512xf32> to vector<8x128xf32>
    %cst_285 = arith.constant 5.000000e-01 : f32
    %544 = vector.broadcast %cst_285 : f32 to vector<8x128xf32>
    %545 = arith.mulf %544, %543 : vector<8x128xf32>
    %546 = math.tanh %545 : vector<8x128xf32>
    %cst_286 = arith.constant 5.000000e-01 : f32
    %547 = vector.broadcast %cst_286 : f32 to vector<8x128xf32>
    %548 = arith.mulf %547, %546 : vector<8x128xf32>
    %cst_287 = arith.constant 5.000000e-01 : f32
    %549 = vector.broadcast %cst_287 : f32 to vector<8x128xf32>
    %550 = arith.addf %548, %549 : vector<8x128xf32>
    %551 = arith.mulf %540, %522 : vector<8x128xf32>
    %552 = arith.mulf %532, %542 : vector<8x128xf32>
    %553 = arith.addf %551, %552 : vector<8x128xf32>
    %554 = math.tanh %553 : vector<8x128xf32>
    %555 = arith.mulf %550, %554 : vector<8x128xf32>
    %c0_288 = arith.constant 0 : index
    %c0_289 = arith.constant 0 : index
    %556 = vector.load %arg14[%c0_288, %c0_289] : memref<8x128xf32, #tpu.memory_space<vmem>>, vector<8x128xf32>
    tpu.vector_store %arg14[%c0_288, %c0_289], %555 {strides = array<i32>} : memref<8x128xf32, #tpu.memory_space<vmem>>, vector<8x128xf32>,
    %c0_290 = arith.constant 0 : index
    %c0_291 = arith.constant 0 : index
    %557 = vector.load %arg15[%c0_290, %c0_291] : memref<8x128xf32, #tpu.memory_space<vmem>>, vector<8x128xf32>
    tpu.vector_store %arg15[%c0_290, %c0_291], %553 {strides = array<i32>} : memref<8x128xf32, #tpu.memory_space<vmem>>, vector<8x128xf32>,
    %c32_292 = arith.constant 32 : index
    %c0_293 = arith.constant 0 : index
    %558 = vector.load %arg18[%c32_292, %c0_293] : memref<48x128xf32, #tpu.memory_space<vmem>>, vector<8x128xf32>
    tpu.vector_store %arg18[%c32_292, %c0_293], %555 {strides = array<i32>} : memref<48x128xf32, #tpu.memory_space<vmem>>, vector<8x128xf32>,
    %c32_294 = arith.constant 32 : index
    %c0_295 = arith.constant 0 : index
    %559 = vector.load %arg17[%c32_294, %c0_295] : memref<48x512xf32, #tpu.memory_space<vmem>>, vector<8x512xf32>
    %c0_296 = arith.constant 0 : index
    %c0_297 = arith.constant 0 : index
    %560 = vector.load %arg14[%c0_296, %c0_297] : memref<8x128xf32, #tpu.memory_space<vmem>>, vector<8x128xf32>
    %c0_298 = arith.constant 0 : index
    %c0_299 = arith.constant 0 : index
    %561 = vector.load %arg15[%c0_298, %c0_299] : memref<8x128xf32, #tpu.memory_space<vmem>>, vector<8x128xf32>
    %cst_300 = arith.constant dense<0.000000e+00> : vector<8x512xf32>
    %562 = tpu.matmul %560, %21, %cst_300 {dimension_numbers = #tpu.dot_dimension_numbers<[1], [0], [0], [1], [0, 0, 1, 1], [], []>} : vector<8x128xf32>, vector<128x512xf32>, vector<8x512xf32> -> vector<8x512xf32>
    %563 = arith.addf %559, %562 : vector<8x512xf32>
    %564 = vector.extract_strided_slice %563 {offsets = [0, 0], sizes = [8, 128], strides = [1, 1]} : vector<8x512xf32> to vector<8x128xf32>
    %cst_301 = arith.constant 5.000000e-01 : f32
    %565 = vector.broadcast %cst_301 : f32 to vector<8x128xf32>
    %566 = arith.mulf %565, %564 : vector<8x128xf32>
    %567 = math.tanh %566 : vector<8x128xf32>
    %cst_302 = arith.constant 5.000000e-01 : f32
    %568 = vector.broadcast %cst_302 : f32 to vector<8x128xf32>
    %569 = arith.mulf %568, %567 : vector<8x128xf32>
    %cst_303 = arith.constant 5.000000e-01 : f32
    %570 = vector.broadcast %cst_303 : f32 to vector<8x128xf32>
    %571 = arith.addf %569, %570 : vector<8x128xf32>
    %572 = vector.extract_strided_slice %563 {offsets = [0, 128], sizes = [8, 128], strides = [1, 1]} : vector<8x512xf32> to vector<8x128xf32>
    %cst_304 = arith.constant 5.000000e-01 : f32
    %573 = vector.broadcast %cst_304 : f32 to vector<8x128xf32>
    %574 = arith.mulf %573, %572 : vector<8x128xf32>
    %575 = math.tanh %574 : vector<8x128xf32>
    %cst_305 = arith.constant 5.000000e-01 : f32
    %576 = vector.broadcast %cst_305 : f32 to vector<8x128xf32>
    %577 = arith.mulf %576, %575 : vector<8x128xf32>
    %cst_306 = arith.constant 5.000000e-01 : f32
    %578 = vector.broadcast %cst_306 : f32 to vector<8x128xf32>
    %579 = arith.addf %577, %578 : vector<8x128xf32>
    %580 = vector.extract_strided_slice %563 {offsets = [0, 256], sizes = [8, 128], strides = [1, 1]} : vector<8x512xf32> to vector<8x128xf32>
    %581 = math.tanh %580 : vector<8x128xf32>
    %582 = vector.extract_strided_slice %563 {offsets = [0, 384], sizes = [8, 128], strides = [1, 1]} : vector<8x512xf32> to vector<8x128xf32>
    %cst_307 = arith.constant 5.000000e-01 : f32
    %583 = vector.broadcast %cst_307 : f32 to vector<8x128xf32>
    %584 = arith.mulf %583, %582 : vector<8x128xf32>
    %585 = math.tanh %584 : vector<8x128xf32>
    %cst_308 = arith.constant 5.000000e-01 : f32
    %586 = vector.broadcast %cst_308 : f32 to vector<8x128xf32>
    %587 = arith.mulf %586, %585 : vector<8x128xf32>
    %cst_309 = arith.constant 5.000000e-01 : f32
    %588 = vector.broadcast %cst_309 : f32 to vector<8x128xf32>
    %589 = arith.addf %587, %588 : vector<8x128xf32>
    %590 = arith.mulf %579, %561 : vector<8x128xf32>
    %591 = arith.mulf %571, %581 : vector<8x128xf32>
    %592 = arith.addf %590, %591 : vector<8x128xf32>
    %593 = math.tanh %592 : vector<8x128xf32>
    %594 = arith.mulf %589, %593 : vector<8x128xf32>
    %c0_310 = arith.constant 0 : index
    %c0_311 = arith.constant 0 : index
    %595 = vector.load %arg14[%c0_310, %c0_311] : memref<8x128xf32, #tpu.memory_space<vmem>>, vector<8x128xf32>
    tpu.vector_store %arg14[%c0_310, %c0_311], %594 {strides = array<i32>} : memref<8x128xf32, #tpu.memory_space<vmem>>, vector<8x128xf32>,
    %c0_312 = arith.constant 0 : index
    %c0_313 = arith.constant 0 : index
    %596 = vector.load %arg15[%c0_312, %c0_313] : memref<8x128xf32, #tpu.memory_space<vmem>>, vector<8x128xf32>
    tpu.vector_store %arg15[%c0_312, %c0_313], %592 {strides = array<i32>} : memref<8x128xf32, #tpu.memory_space<vmem>>, vector<8x128xf32>,
    %c40_314 = arith.constant 40 : index
    %c0_315 = arith.constant 0 : index
    %597 = vector.load %arg18[%c40_314, %c0_315] : memref<48x128xf32, #tpu.memory_space<vmem>>, vector<8x128xf32>
    tpu.vector_store %arg18[%c40_314, %c0_315], %594 {strides = array<i32>} : memref<48x128xf32, #tpu.memory_space<vmem>>, vector<8x128xf32>,
    %c0_316 = arith.constant 0 : index
    %c0_317 = arith.constant 0 : index
    %598 = vector.load %arg18[%c0_316, %c0_317] : memref<48x128xf32, #tpu.memory_space<vmem>>, vector<48x128xf32>
    %c0_318 = arith.constant 0 : index
    %c0_319 = arith.constant 0 : index
    %599 = vector.load %arg10[%c0_318, %c0_319] : memref<128x128xf32, #tpu.memory_space<vmem>>, vector<128x128xf32>
    %cst_320 = arith.constant dense<0.000000e+00> : vector<48x128xf32>
    %600 = tpu.matmul %598, %599, %cst_320 {dimension_numbers = #tpu.dot_dimension_numbers<[1], [0], [0], [1], [0, 0, 1, 1], [], []>} : vector<48x128xf32>, vector<128x128xf32>, vector<48x128xf32> -> vector<48x128xf32>
    %c0_321 = arith.constant 0 : index
    %c0_322 = arith.constant 0 : index
    %601 = vector.load %arg11[%c0_321, %c0_322] : memref<1x128xf32, #tpu.memory_space<vmem>>, vector<1x128xf32>
    %602 = vector.broadcast %601 : vector<1x128xf32> to vector<48x128xf32>
    %603 = arith.addf %600, %602 : vector<48x128xf32>
    %c0_323 = arith.constant 0 : index
    %c0_324 = arith.constant 0 : index
    %c0_325 = arith.constant 0 : index
    %604 = vector.load %arg12[%c0_323, %c0_324, %c0_325] : memref<1x48x128xf32, #tpu.memory_space<vmem>>, vector<1x48x128xf32>
    %605 = vector.shape_cast %604 : vector<1x48x128xf32> to vector<48x128xf32>
    %606 = vector.shape_cast %603 : vector<48x128xf32> to vector<1x48x128xf32>
    tpu.vector_store %arg12[%c0_323, %c0_324, %c0_325], %606 {strides = array<i32>} : memref<1x48x128xf32, #tpu.memory_space<vmem>>, vector<1x48x128xf32>,
    %c0_326 = arith.constant 0 : index
    %c0_327 = arith.constant 0 : index
    %607 = vector.load %arg14[%c0_326, %c0_327] : memref<8x128xf32, #tpu.memory_space<vmem>>, vector<8x128xf32>
    %c0_328 = arith.constant 0 : index
    %c0_329 = arith.constant 0 : index
    %c0_330 = arith.constant 0 : index
    %608 = vector.load %arg13[%c0_328, %c0_329, %c0_330] : memref<1x8x128xf32, #tpu.memory_space<vmem>>, vector<1x8x128xf32>
    %609 = vector.shape_cast %608 : vector<1x8x128xf32> to vector<8x128xf32>
    %610 = vector.shape_cast %607 : vector<8x128xf32> to vector<1x8x128xf32>
    tpu.vector_store %arg13[%c0_328, %c0_329, %c0_330], %610 {strides = array<i32>} : memref<1x8x128xf32, #tpu.memory_space<vmem>>, vector<1x8x128xf32>,
    return
  }
  func.func @transform_0(%arg0: i32) -> (i32, i32, i32) {
    %c0_i32 = arith.constant 0 : i32
    %c0_i32_0 = arith.constant 0 : i32
    %c0_i32_1 = arith.constant 0 : i32
    return %arg0, %c0_i32, %c0_i32_0 : i32, i32, i32
  }
  func.func @transform_1(%arg0: i32) -> (i32, i32, i32) {
    %c0_i32 = arith.constant 0 : i32
    %c0_i32_0 = arith.constant 0 : i32
    %c0_i32_1 = arith.constant 0 : i32
    return %arg0, %c0_i32, %c0_i32_0 : i32, i32, i32
  }
  func.func @transform_2(%arg0: i32) -> (i32, i32, i32) {
    %c0_i32 = arith.constant 0 : i32
    %c0_i32_0 = arith.constant 0 : i32
    %c0_i32_1 = arith.constant 0 : i32
    return %arg0, %c0_i32, %c0_i32_0 : i32, i32, i32
  }
  func.func @transform_3(%arg0: i32) -> (i32, i32) {
    %c0_i32 = arith.constant 0 : i32
    %c0_i32_0 = arith.constant 0 : i32
    %c0_i32_1 = arith.constant 0 : i32
    return %c0_i32, %c0_i32_0 : i32, i32
  }
  func.func @transform_4(%arg0: i32) -> (i32, i32) {
    %c0_i32 = arith.constant 0 : i32
    %c0_i32_0 = arith.constant 0 : i32
    %c0_i32_1 = arith.constant 0 : i32
    return %c0_i32, %c0_i32_0 : i32, i32
  }
  func.func @transform_5(%arg0: i32) -> (i32, i32) {
    %c0_i32 = arith.constant 0 : i32
    %c0_i32_0 = arith.constant 0 : i32
    %c0_i32_1 = arith.constant 0 : i32
    return %c0_i32, %c0_i32_0 : i32, i32
  }
  func.func @transform_6(%arg0: i32) -> (i32, i32) {
    %c0_i32 = arith.constant 0 : i32
    %c0_i32_0 = arith.constant 0 : i32
    %c0_i32_1 = arith.constant 0 : i32
    return %c0_i32, %c0_i32_0 : i32, i32
  }
  func.func @transform_7(%arg0: i32) -> (i32, i32) {
    %c0_i32 = arith.constant 0 : i32
    %c0_i32_0 = arith.constant 0 : i32
    %c0_i32_1 = arith.constant 0 : i32
    return %c0_i32, %c0_i32_0 : i32, i32
  }
  func.func @transform_8(%arg0: i32) -> (i32, i32) {
    %c0_i32 = arith.constant 0 : i32
    %c0_i32_0 = arith.constant 0 : i32
    %c0_i32_1 = arith.constant 0 : i32
    return %c0_i32, %c0_i32_0 : i32, i32
  }
  func.func @transform_9(%arg0: i32) -> (i32, i32) {
    %c0_i32 = arith.constant 0 : i32
    %c0_i32_0 = arith.constant 0 : i32
    %c0_i32_1 = arith.constant 0 : i32
    return %c0_i32, %c0_i32_0 : i32, i32
  }
  func.func @transform_10(%arg0: i32) -> (i32, i32) {
    %c0_i32 = arith.constant 0 : i32
    %c0_i32_0 = arith.constant 0 : i32
    %c0_i32_1 = arith.constant 0 : i32
    return %c0_i32, %c0_i32_0 : i32, i32
  }
  func.func @transform_11(%arg0: i32) -> (i32, i32, i32) {
    %c0_i32 = arith.constant 0 : i32
    %c0_i32_0 = arith.constant 0 : i32
    %c0_i32_1 = arith.constant 0 : i32
    return %arg0, %c0_i32, %c0_i32_0 : i32, i32, i32
  }
  func.func @transform_12(%arg0: i32) -> (i32, i32, i32) {
    %c0_i32 = arith.constant 0 : i32
    %c0_i32_0 = arith.constant 0 : i32
    %c0_i32_1 = arith.constant 0 : i32
    return %arg0, %c0_i32, %c0_i32_0 : i32, i32, i32
  }
}

</mosaic_0001>

<llo_original>
// kernel: seq2seq_forward.1
$region0: #{seq2seq_forward.1}
  #allocation0 [shape = 'u32[]', space=smem, size = 0x4, offset = 0x4, fixed_abs, tag = 'smem constant byte address 0x4 - core index']
  #allocation1 [shape = 'u32[72,128]{1,0:T(1,128)}', space=vmem, size = 0x9000, scoped, tag = 'internal scratch']
  #allocation2 [shape = 'f32[8,128]{1,0:T(8,128)}', space=vmem, size = 0x1000, scoped, tag = 'scratch operand']
  #allocation3 [shape = 'f32[8,128]{1,0:T(8,128)}', space=vmem, size = 0x1000, scoped, tag = 'scratch operand']
  #allocation4 [shape = 'f32[64,512]{1,0:T(8,128)}', space=vmem, size = 0x20000, scoped, tag = 'scratch operand']
  #allocation5 [shape = 'f32[48,512]{1,0:T(8,128)}', space=vmem, size = 0x18000, scoped, tag = 'scratch operand']
  #allocation6 [shape = 'f32[48,128]{1,0:T(8,128)}', space=vmem, size = 0x6000, scoped, tag = 'scratch operand']
  %s0 = inlined_call_operand.vmem [shape: f32[1,64,16], index: 0, kind: input, shape index: {}]
  %s1 = inlined_call_operand.vmem [shape: s32[1,8,1], index: 1, kind: input, shape index: {}]
  %s2 = inlined_call_operand.vmem [shape: f32[1,48,16], index: 2, kind: input, shape index: {}]
  %s3 = inlined_call_operand.vmem [shape: f32[16,512], index: 3, kind: input, shape index: {}]
  %s4 = inlined_call_operand.vmem [shape: f32[128,512], index: 4, kind: input, shape index: {}]
  %s5 = inlined_call_operand.vmem [shape: f32[1,512], index: 5, kind: input, shape index: {}]
  %s6 = inlined_call_operand.vmem [shape: f32[16,512], index: 6, kind: input, shape index: {}]
  %s7 = inlined_call_operand.vmem [shape: f32[128,512], index: 7, kind: input, shape index: {}]
  %s8 = inlined_call_operand.vmem [shape: f32[1,512], index: 8, kind: input, shape index: {}]
  %s9 = inlined_call_operand.vmem [shape: f32[128,128], index: 9, kind: input, shape index: {}]
  %s10 = inlined_call_operand.vmem [shape: f32[1,128], index: 10, kind: input, shape index: {}]
  %s11 = inlined_call_operand.vmem [shape: f32[1,48,128], index: 11, kind: output, shape index: {0}]
  %s12 = inlined_call_operand.vmem [shape: f32[1,8,128], index: 12, kind: output, shape index: {1}]
  %13 = xla_tuple %s11, %s12
  %s14 = sld [smem:[#allocation0]]
  $region62: #{seq2seq_forward.1} parent=0
    _
  %s16 = ssub.s32 1, %s14
  %s17 = scalar_select 0, %s16, %s14
  // Predicated region
  $region2: #{seq2seq_forward.1} parent=0 // pred_check
    _
  $region3: #{seq2seq_forward.1} parent=0 // pred_check_branch
    %19 = sbr.rel (0) target = $region5
  $region4: #{seq2seq_forward.1} parent=0 // pred_region
    _
  $region5: #{seq2seq_forward.1} parent=0 // pred_fallthru
    _
  // Predicated region
  $region6: #{seq2seq_forward.1} parent=0 // pred_check
    _
  $region7: #{seq2seq_forward.1} parent=0 // pred_check_branch
    %21 = sbr.rel (0) target = $region9
  $region8: #{seq2seq_forward.1} parent=0 // pred_region
    _
  $region9: #{seq2seq_forward.1} parent=0 // pred_fallthru
    _
  // Predicated region
  $region10: #{seq2seq_forward.1} parent=0 // pred_check
    _
  $region11: #{seq2seq_forward.1} parent=0 // pred_check_branch
    %23 = sbr.rel (0) target = $region13
  $region12: #{seq2seq_forward.1} parent=0 // pred_region
    _
  $region13: #{seq2seq_forward.1} parent=0 // pred_fallthru
    _
  // Predicated region
  $region14: #{seq2seq_forward.1} parent=0 // pred_check
    _
  $region15: #{seq2seq_forward.1} parent=0 // pred_check_branch
    %25 = sbr.rel (0) target = $region17
  $region16: #{seq2seq_forward.1} parent=0 // pred_region
    _
  $region17: #{seq2seq_forward.1} parent=0 // pred_fallthru
    _
  // Predicated region
  $region18: #{seq2seq_forward.1} parent=0 // pred_check
    _
  $region19: #{seq2seq_forward.1} parent=0 // pred_check_branch
    %27 = sbr.rel (0) target = $region21
  $region20: #{seq2seq_forward.1} parent=0 // pred_region
    _
  $region21: #{seq2seq_forward.1} parent=0 // pred_fallthru
    _
  // Predicated region
  $region22: #{seq2seq_forward.1} parent=0 // pred_check
    _
  $region23: #{seq2seq_forward.1} parent=0 // pred_check_branch
    %29 = sbr.rel (0) target = $region25
  $region24: #{seq2seq_forward.1} parent=0 // pred_region
    _
  $region25: #{seq2seq_forward.1} parent=0 // pred_fallthru
    _
  // Predicated region
  $region26: #{seq2seq_forward.1} parent=0 // pred_check
    _
  $region27: #{seq2seq_forward.1} parent=0 // pred_check_branch
    %31 = sbr.rel (0) target = $region29
  $region28: #{seq2seq_forward.1} parent=0 // pred_region
    _
  $region29: #{seq2seq_forward.1} parent=0 // pred_fallthru
    _
  // Predicated region
  $region30: #{seq2seq_forward.1} parent=0 // pred_check
    _
  $region31: #{seq2seq_forward.1} parent=0 // pred_check_branch
    %33 = sbr.rel (0) target = $region33
  $region32: #{seq2seq_forward.1} parent=0 // pred_region
    _
  $region33: #{seq2seq_forward.1} parent=0 // pred_fallthru
    _
  // Predicated region
  $region34: #{seq2seq_forward.1} parent=0 // pred_check
    _
  $region35: #{seq2seq_forward.1} parent=0 // pred_check_branch
    %35 = sbr.rel (0) target = $region37
  $region36: #{seq2seq_forward.1} parent=0 // pred_region
    _
  $region37: #{seq2seq_forward.1} parent=0 // pred_fallthru
    _
  // Predicated region
  $region38: #{seq2seq_forward.1} parent=0 // pred_check
    _
  $region39: #{seq2seq_forward.1} parent=0 // pred_check_branch
    %37 = sbr.rel (0) target = $region41
  $region40: #{seq2seq_forward.1} parent=0 // pred_region
    _
  $region41: #{seq2seq_forward.1} parent=0 // pred_fallthru
    _
  // Predicated region
  $region42: #{seq2seq_forward.1} parent=0 // pred_check
    _
  $region43: #{seq2seq_forward.1} parent=0 // pred_check_branch
    %39 = sbr.rel (0) target = $region45
  $region44: #{seq2seq_forward.1} parent=0 // pred_region
    _
  $region45: #{seq2seq_forward.1} parent=0 // pred_fallthru
    _
  %v40 = vld [vmem:[%s0] sm:$0xff]
  %v41 = vld [vmem:[%s0 + $0x8] sm:$0xff]
  %v42 = vld [vmem:[%s0 + $0x10] sm:$0xff]
  %v43 = vld [vmem:[%s0 + $0x18] sm:$0xff]
  %v44 = vld [vmem:[%s0 + $0x20] sm:$0xff]
  %v45 = vld [vmem:[%s0 + $0x28] sm:$0xff]
  %v46 = vld [vmem:[%s0 + $0x30] sm:$0xff]
  %v47 = vld [vmem:[%s0 + $0x38] sm:$0xff]
  %v48 = vld [vmem:[%s3] sm:$0xff]
  %v49 = vld [vmem:[%s3 + $0x8] sm:$0xff]
  %v50 = vld [vmem:[%s3 + $0x10] sm:$0xff]
  %v51 = vld [vmem:[%s3 + $0x18] sm:$0xff]
  %v52 = vld [vmem:[%s3 + $0x20] sm:$0xff]
  %v53 = vld [vmem:[%s3 + $0x28] sm:$0xff]
  %v54 = vld [vmem:[%s3 + $0x30] sm:$0xff]
  %v55 = vld [vmem:[%s3 + $0x38] sm:$0xff]
  %v56 = vld [vmem:[%s5] sm:$0xf]
  %v58 = vperm.slane %v56, 0
  %v59 = vperm.slane %v56, 1
  %v60 = vperm.slane %v56, 2
  %v61 = vperm.slane %v56, 3
  %vm66 = vcmask 130048
  %v68 = vsel %vm66, %v40, 0
  %v71 = vsel %vm66, %v41, 0
  %v74 = vsel %vm66, %v42, 0
  %v77 = vsel %vm66, %v43, 0
  %v80 = vsel %vm66, %v44, 0
  %v83 = vsel %vm66, %v45, 0
  %v86 = vsel %vm66, %v46, 0
  %v89 = vsel %vm66, %v47, 0
  %91 = vmatpush.msra.mxu0 0.0
  %92 = vmatpush.msra.mxu0 0.0
  %93 = vmatpush.msra.mxu0 0.0
  %94 = vmatpush.msra.mxu0 0.0
  %95 = vmatpush.msra.mxu0 0.0
  %96 = vmatpush.msra.mxu0 0.0
  %97 = vmatpush.msra.mxu0 0.0
  %98 = vmatpush.msra.mxu0 0.0
  %99 = vmatpush.msra.mxu0 0.0
  %100 = vmatpush.msra.mxu0 0.0
  %101 = vmatpush.msra.mxu0 0.0
  %102 = vmatpush.msra.mxu0 0.0
  %103 = vmatpush.msra.mxu0 0.0
  %104 = vmatpush.msra.mxu0 0.0
  %105 = vmatpush.msra.mxu0 %v52
  %106 = vmatpush.msra.mxu0 %v48
  %107 = vmatmul.f32.gmra.mxu0 %v68
  %v108 = vpop.f32.mrf.mxu0
  %v109 = vadd.f32 %v58, %v108
  %110 = vmatmul.f32.gmra.mxu0 %v71
  %v111 = vpop.f32.mrf.mxu0
  %v112 = vadd.f32 %v58, %v111
  %113 = vmatmul.f32.gmra.mxu0 %v74
  %v114 = vpop.f32.mrf.mxu0
  %v115 = vadd.f32 %v58, %v114
  %116 = vmatmul.f32.gmra.mxu0 %v77
  %v117 = vpop.f32.mrf.mxu0
  %v118 = vadd.f32 %v58, %v117
  %119 = vmatmul.f32.gmra.mxu0 %v80
  %v120 = vpop.f32.mrf.mxu0
  %v121 = vadd.f32 %v58, %v120
  %122 = vmatmul.f32.gmra.mxu0 %v83
  %v123 = vpop.f32.mrf.mxu0
  %v124 = vadd.f32 %v58, %v123
  %125 = vmatmul.f32.gmra.mxu0 %v86
  %v126 = vpop.f32.mrf.mxu0
  %v127 = vadd.f32 %v58, %v126
  %128 = vmatmul.f32.gmra.mxu0 %v89
  %v129 = vpop.f32.mrf.mxu0
  %v130 = vadd.f32 %v58, %v129
  %131 = vdwg.mxu0
  %132 = vmatpush.msra.mxu0 0.0
  %133 = vmatpush.msra.mxu0 0.0
  %134 = vmatpush.msra.mxu0 0.0
  %135 = vmatpush.msra.mxu0 0.0
  %136 = vmatpush.msra.mxu0 0.0
  %137 = vmatpush.msra.mxu0 0.0
  %138 = vmatpush.msra.mxu0 0.0
  %139 = vmatpush.msra.mxu0 0.0
  %140 = vmatpush.msra.mxu0 0.0
  %141 = vmatpush.msra.mxu0 0.0
  %142 = vmatpush.msra.mxu0 0.0
  %143 = vmatpush.msra.mxu0 0.0
  %144 = vmatpush.msra.mxu0 0.0
  %145 = vmatpush.msra.mxu0 0.0
  %146 = vmatpush.msra.mxu0 %v53
  %147 = vmatpush.msra.mxu0 %v49
  %148 = vmatmul.f32.gmra.mxu0 %v68
  %v149 = vpop.f32.mrf.mxu0
  %v150 = vadd.f32 %v59, %v149
  %151 = vmatmul.f32.gmra.mxu0 %v71
  %v152 = vpop.f32.mrf.mxu0
  %v153 = vadd.f32 %v59, %v152
  %154 = vmatmul.f32.gmra.mxu0 %v74
  %v155 = vpop.f32.mrf.mxu0
  %v156 = vadd.f32 %v59, %v155
  %157 = vmatmul.f32.gmra.mxu0 %v77
  %v158 = vpop.f32.mrf.mxu0
  %v159 = vadd.f32 %v59, %v158
  %160 = vmatmul.f32.gmra.mxu0 %v80
  %v161 = vpop.f32.mrf.mxu0
  %v162 = vadd.f32 %v59, %v161
  %163 = vmatmul.f32.gmra.mxu0 %v83
  %v164 = vpop.f32.mrf.mxu0
  %v165 = vadd.f32 %v59, %v164
  %166 = vmatmul.f32.gmra.mxu0 %v86
  %v167 = vpop.f32.mrf.mxu0
  %v168 = vadd.f32 %v59, %v167
  %169 = vmatmul.f32.gmra.mxu0 %v89
  %v170 = vpop.f32.mrf.mxu0
  %v171 = vadd.f32 %v59, %v170
  %172 = vdwg.mxu0
  %173 = vmatpush.msra.mxu0 0.0
  %174 = vmatpush.msra.mxu0 0.0
  %175 = vmatpush.msra.mxu0 0.0
  %176 = vmatpush.msra.mxu0 0.0
  %177 = vmatpush.msra.mxu0 0.0
  %178 = vmatpush.msra.mxu0 0.0
  %179 = vmatpush.msra.mxu0 0.0
  %180 = vmatpush.msra.mxu0 0.0
  %181 = vmatpush.msra.mxu0 0.0
  %182 = vmatpush.msra.mxu0 0.0
  %183 = vmatpush.msra.mxu0 0.0
  %184 = vmatpush.msra.mxu0 0.0
  %185 = vmatpush.msra.mxu0 0.0
  %186 = vmatpush.msra.mxu0 0.0
  %187 = vmatpush.msra.mxu0 %v54
  %188 = vmatpush.msra.mxu0 %v50
  %189 = vmatmul.f32.gmra.mxu0 %v68
  %v190 = vpop.f32.mrf.mxu0
  %v191 = vadd.f32 %v60, %v190
  %192 = vmatmul.f32.gmra.mxu0 %v71
  %v193 = vpop.f32.mrf.mxu0
  %v194 = vadd.f32 %v60, %v193
  %195 = vmatmul.f32.gmra.mxu0 %v74
  %v196 = vpop.f32.mrf.mxu0
  %v197 = vadd.f32 %v60, %v196
  %198 = vmatmul.f32.gmra.mxu0 %v77
  %v199 = vpop.f32.mrf.mxu0
  %v200 = vadd.f32 %v60, %v199
  %201 = vmatmul.f32.gmra.mxu0 %v80
  %v202 = vpop.f32.mrf.mxu0
  %v203 = vadd.f32 %v60, %v202
  %204 = vmatmul.f32.gmra.mxu0 %v83
  %v205 = vpop.f32.mrf.mxu0
  %v206 = vadd.f32 %v60, %v205
  %207 = vmatmul.f32.gmra.mxu0 %v86
  %v208 = vpop.f32.mrf.mxu0
  %v209 = vadd.f32 %v60, %v208
  %210 = vmatmul.f32.gmra.mxu0 %v89
  %v211 = vpop.f32.mrf.mxu0
  %v212 = vadd.f32 %v60, %v211
  %213 = vdwg.mxu0
  %214 = vmatpush.msra.mxu0 0.0
  %215 = vmatpush.msra.mxu0 0.0
  %216 = vmatpush.msra.mxu0 0.0
  %217 = vmatpush.msra.mxu0 0.0
  %218 = vmatpush.msra.mxu0 0.0
  %219 = vmatpush.msra.mxu0 0.0
  %220 = vmatpush.msra.mxu0 0.0
  %221 = vmatpush.msra.mxu0 0.0
  %222 = vmatpush.msra.mxu0 0.0
  %223 = vmatpush.msra.mxu0 0.0
  %224 = vmatpush.msra.mxu0 0.0
  %225 = vmatpush.msra.mxu0 0.0
  %226 = vmatpush.msra.mxu0 0.0
  %227 = vmatpush.msra.mxu0 0.0
  %228 = vmatpush.msra.mxu0 %v55
  %229 = vmatpush.msra.mxu0 %v51
  %230 = vmatmul.f32.gmra.mxu0 %v68
  %v231 = vpop.f32.mrf.mxu0
  %v232 = vadd.f32 %v61, %v231
  %233 = vmatmul.f32.gmra.mxu0 %v71
  %v234 = vpop.f32.mrf.mxu0
  %v235 = vadd.f32 %v61, %v234
  %236 = vmatmul.f32.gmra.mxu0 %v74
  %v237 = vpop.f32.mrf.mxu0
  %v238 = vadd.f32 %v61, %v237
  %239 = vmatmul.f32.gmra.mxu0 %v77
  %v240 = vpop.f32.mrf.mxu0
  %v241 = vadd.f32 %v61, %v240
  %242 = vmatmul.f32.gmra.mxu0 %v80
  %v243 = vpop.f32.mrf.mxu0
  %v244 = vadd.f32 %v61, %v243
  %245 = vmatmul.f32.gmra.mxu0 %v83
  %v246 = vpop.f32.mrf.mxu0
  %v247 = vadd.f32 %v61, %v246
  %248 = vmatmul.f32.gmra.mxu0 %v86
  %v249 = vpop.f32.mrf.mxu0
  %v250 = vadd.f32 %v61, %v249
  %251 = vmatmul.f32.gmra.mxu0 %v89
  %v252 = vpop.f32.mrf.mxu0
  %v253 = vadd.f32 %v61, %v252
  %254 = vdwg.mxu0
  %255 = vst [vmem:[#allocation4] sm:$0xff] %v109
  %256 = vst [vmem:[#allocation4 + $0x8] sm:$0xff] %v150
  %257 = vst [vmem:[#allocation4 + $0x10] sm:$0xff] %v191
  %258 = vst [vmem:[#allocation4 + $0x18] sm:$0xff] %v232
  %259 = vst [vmem:[#allocation4 + $0x20] sm:$0xff] %v112
  %260 = vst [vmem:[#allocation4 + $0x28] sm:$0xff] %v153
  %261 = vst [vmem:[#allocation4 + $0x30] sm:$0xff] %v194
  %262 = vst [vmem:[#allocation4 + $0x38] sm:$0xff] %v235
  %263 = vst [vmem:[#allocation4 + $0x40] sm:$0xff] %v115
  %264 = vst [vmem:[#allocation4 + $0x48] sm:$0xff] %v156
  %265 = vst [vmem:[#allocation4 + $0x50] sm:$0xff] %v197
  %266 = vst [vmem:[#allocation4 + $0x58] sm:$0xff] %v238
  %267 = vst [vmem:[#allocation4 + $0x60] sm:$0xff] %v118
  %268 = vst [vmem:[#allocation4 + $0x68] sm:$0xff] %v159
  %269 = vst [vmem:[#allocation4 + $0x70] sm:$0xff] %v200
  %270 = vst [vmem:[#allocation4 + $0x78] sm:$0xff] %v241
  %271 = vst [vmem:[#allocation4 + $0x80] sm:$0xff] %v121
  %272 = vst [vmem:[#allocation4 + $0x88] sm:$0xff] %v162
  %273 = vst [vmem:[#allocation4 + $0x90] sm:$0xff] %v203
  %274 = vst [vmem:[#allocation4 + $0x98] sm:$0xff] %v244
  %275 = vst [vmem:[#allocation4 + $0xa0] sm:$0xff] %v124
  %276 = vst [vmem:[#allocation4 + $0xa8] sm:$0xff] %v165
  %277 = vst [vmem:[#allocation4 + $0xb0] sm:$0xff] %v206
  %278 = vst [vmem:[#allocation4 + $0xb8] sm:$0xff] %v247
  %279 = vst [vmem:[#allocation4 + $0xc0] sm:$0xff] %v127
  %280 = vst [vmem:[#allocation4 + $0xc8] sm:$0xff] %v168
  %281 = vst [vmem:[#allocation4 + $0xd0] sm:$0xff] %v209
  %282 = vst [vmem:[#allocation4 + $0xd8] sm:$0xff] %v250
  %283 = vst [vmem:[#allocation4 + $0xe0] sm:$0xff] %v130
  %284 = vst [vmem:[#allocation4 + $0xe8] sm:$0xff] %v171
  %285 = vst [vmem:[#allocation4 + $0xf0] sm:$0xff] %v212
  %286 = vst [vmem:[#allocation4 + $0xf8] sm:$0xff] %v253
  %v287 = vld [vmem:[%s2] sm:$0xff]
  %v288 = vld [vmem:[%s2 + $0x8] sm:$0xff]
  %v289 = vld [vmem:[%s2 + $0x10] sm:$0xff]
  %v290 = vld [vmem:[%s2 + $0x18] sm:$0xff]
  %v291 = vld [vmem:[%s2 + $0x20] sm:$0xff]
  %v292 = vld [vmem:[%s2 + $0x28] sm:$0xff]
  %v293 = vld [vmem:[%s6] sm:$0xff]
  %v294 = vld [vmem:[%s6 + $0x8] sm:$0xff]
  %v295 = vld [vmem:[%s6 + $0x10] sm:$0xff]
  %v296 = vld [vmem:[%s6 + $0x18] sm:$0xff]
  %v297 = vld [vmem:[%s6 + $0x20] sm:$0xff]
  %v298 = vld [vmem:[%s6 + $0x28] sm:$0xff]
  %v299 = vld [vmem:[%s6 + $0x30] sm:$0xff]
  %v300 = vld [vmem:[%s6 + $0x38] sm:$0xff]
  %v301 = vld [vmem:[%s8] sm:$0xf]
  %v303 = vperm.slane %v301, 0
  %v304 = vperm.slane %v301, 1
  %v305 = vperm.slane %v301, 2
  %v306 = vperm.slane %v301, 3
  %v312 = vsel %vm66, %v287, 0
  %v315 = vsel %vm66, %v288, 0
  %v318 = vsel %vm66, %v289, 0
  %v321 = vsel %vm66, %v290, 0
  %v324 = vsel %vm66, %v291, 0
  %v327 = vsel %vm66, %v292, 0
  %329 = vmatpush.msra.mxu0 0.0
  %330 = vmatpush.msra.mxu0 0.0
  %331 = vmatpush.msra.mxu0 0.0
  %332 = vmatpush.msra.mxu0 0.0
  %333 = vmatpush.msra.mxu0 0.0
  %334 = vmatpush.msra.mxu0 0.0
  %335 = vmatpush.msra.mxu0 0.0
  %336 = vmatpush.msra.mxu0 0.0
  %337 = vmatpush.msra.mxu0 0.0
  %338 = vmatpush.msra.mxu0 0.0
  %339 = vmatpush.msra.mxu0 0.0
  %340 = vmatpush.msra.mxu0 0.0
  %341 = vmatpush.msra.mxu0 0.0
  %342 = vmatpush.msra.mxu0 0.0
  %343 = vmatpush.msra.mxu0 %v297
  %344 = vmatpush.msra.mxu0 %v293
  %345 = vmatmul.f32.gmra.mxu0 %v312
  %v346 = vpop.f32.mrf.mxu0
  %v347 = vadd.f32 %v303, %v346
  %348 = vmatmul.f32.gmra.mxu0 %v315
  %v349 = vpop.f32.mrf.mxu0
  %v350 = vadd.f32 %v303, %v349
  %351 = vmatmul.f32.gmra.mxu0 %v318
  %v352 = vpop.f32.mrf.mxu0
  %v353 = vadd.f32 %v303, %v352
  %354 = vmatmul.f32.gmra.mxu0 %v321
  %v355 = vpop.f32.mrf.mxu0
  %v356 = vadd.f32 %v303, %v355
  %357 = vmatmul.f32.gmra.mxu0 %v324
  %v358 = vpop.f32.mrf.mxu0
  %v359 = vadd.f32 %v303, %v358
  %360 = vmatmul.f32.gmra.mxu0 %v327
  %v361 = vpop.f32.mrf.mxu0
  %v362 = vadd.f32 %v303, %v361
  %363 = vdwg.mxu0
  %364 = vmatpush.msra.mxu0 0.0
  %365 = vmatpush.msra.mxu0 0.0
  %366 = vmatpush.msra.mxu0 0.0
  %367 = vmatpush.msra.mxu0 0.0
  %368 = vmatpush.msra.mxu0 0.0
  %369 = vmatpush.msra.mxu0 0.0
  %370 = vmatpush.msra.mxu0 0.0
  %371 = vmatpush.msra.mxu0 0.0
  %372 = vmatpush.msra.mxu0 0.0
  %373 = vmatpush.msra.mxu0 0.0
  %374 = vmatpush.msra.mxu0 0.0
  %375 = vmatpush.msra.mxu0 0.0
  %376 = vmatpush.msra.mxu0 0.0
  %377 = vmatpush.msra.mxu0 0.0
  %378 = vmatpush.msra.mxu0 %v298
  %379 = vmatpush.msra.mxu0 %v294
  %380 = vmatmul.f32.gmra.mxu0 %v312
  %v381 = vpop.f32.mrf.mxu0
  %v382 = vadd.f32 %v304, %v381
  %383 = vmatmul.f32.gmra.mxu0 %v315
  %v384 = vpop.f32.mrf.mxu0
  %v385 = vadd.f32 %v304, %v384
  %386 = vmatmul.f32.gmra.mxu0 %v318
  %v387 = vpop.f32.mrf.mxu0
  %v388 = vadd.f32 %v304, %v387
  %389 = vmatmul.f32.gmra.mxu0 %v321
  %v390 = vpop.f32.mrf.mxu0
  %v391 = vadd.f32 %v304, %v390
  %392 = vmatmul.f32.gmra.mxu0 %v324
  %v393 = vpop.f32.mrf.mxu0
  %v394 = vadd.f32 %v304, %v393
  %395 = vmatmul.f32.gmra.mxu0 %v327
  %v396 = vpop.f32.mrf.mxu0
  %v397 = vadd.f32 %v304, %v396
  %398 = vdwg.mxu0
  %399 = vmatpush.msra.mxu0 0.0
  %400 = vmatpush.msra.mxu0 0.0
  %401 = vmatpush.msra.mxu0 0.0
  %402 = vmatpush.msra.mxu0 0.0
  %403 = vmatpush.msra.mxu0 0.0
  %404 = vmatpush.msra.mxu0 0.0
  %405 = vmatpush.msra.mxu0 0.0
  %406 = vmatpush.msra.mxu0 0.0
  %407 = vmatpush.msra.mxu0 0.0
  %408 = vmatpush.msra.mxu0 0.0
  %409 = vmatpush.msra.mxu0 0.0
  %410 = vmatpush.msra.mxu0 0.0
  %411 = vmatpush.msra.mxu0 0.0
  %412 = vmatpush.msra.mxu0 0.0
  %413 = vmatpush.msra.mxu0 %v299
  %414 = vmatpush.msra.mxu0 %v295
  %415 = vmatmul.f32.gmra.mxu0 %v312
  %v416 = vpop.f32.mrf.mxu0
  %v417 = vadd.f32 %v305, %v416
  %418 = vmatmul.f32.gmra.mxu0 %v315
  %v419 = vpop.f32.mrf.mxu0
  %v420 = vadd.f32 %v305, %v419
  %421 = vmatmul.f32.gmra.mxu0 %v318
  %v422 = vpop.f32.mrf.mxu0
  %v423 = vadd.f32 %v305, %v422
  %424 = vmatmul.f32.gmra.mxu0 %v321
  %v425 = vpop.f32.mrf.mxu0
  %v426 = vadd.f32 %v305, %v425
  %427 = vmatmul.f32.gmra.mxu0 %v324
  %v428 = vpop.f32.mrf.mxu0
  %v429 = vadd.f32 %v305, %v428
  %430 = vmatmul.f32.gmra.mxu0 %v327
  %v431 = vpop.f32.mrf.mxu0
  %v432 = vadd.f32 %v305, %v431
  %433 = vdwg.mxu0
  %434 = vmatpush.msra.mxu0 0.0
  %435 = vmatpush.msra.mxu0 0.0
  %436 = vmatpush.msra.mxu0 0.0
  %437 = vmatpush.msra.mxu0 0.0
  %438 = vmatpush.msra.mxu0 0.0
  %439 = vmatpush.msra.mxu0 0.0
  %440 = vmatpush.msra.mxu0 0.0
  %441 = vmatpush.msra.mxu0 0.0
  %442 = vmatpush.msra.mxu0 0.0
  %443 = vmatpush.msra.mxu0 0.0
  %444 = vmatpush.msra.mxu0 0.0
  %445 = vmatpush.msra.mxu0 0.0
  %446 = vmatpush.msra.mxu0 0.0
  %447 = vmatpush.msra.mxu0 0.0
  %448 = vmatpush.msra.mxu0 %v300
  %449 = vmatpush.msra.mxu0 %v296
  %450 = vmatmul.f32.gmra.mxu0 %v312
  %v451 = vpop.f32.mrf.mxu0
  %v452 = vadd.f32 %v306, %v451
  %453 = vmatmul.f32.gmra.mxu0 %v315
  %v454 = vpop.f32.mrf.mxu0
  %v455 = vadd.f32 %v306, %v454
  %456 = vmatmul.f32.gmra.mxu0 %v318
  %v457 = vpop.f32.mrf.mxu0
  %v458 = vadd.f32 %v306, %v457
  %459 = vmatmul.f32.gmra.mxu0 %v321
  %v460 = vpop.f32.mrf.mxu0
  %v461 = vadd.f32 %v306, %v460
  %462 = vmatmul.f32.gmra.mxu0 %v324
  %v463 = vpop.f32.mrf.mxu0
  %v464 = vadd.f32 %v306, %v463
  %465 = vmatmul.f32.gmra.mxu0 %v327
  %v466 = vpop.f32.mrf.mxu0
  %v467 = vadd.f32 %v306, %v466
  %468 = vdwg.mxu0
  %469 = vst [vmem:[#allocation5] sm:$0xff] %v347
  %470 = vst [vmem:[#allocation5 + $0x8] sm:$0xff] %v382
  %471 = vst [vmem:[#allocation5 + $0x10] sm:$0xff] %v417
  %472 = vst [vmem:[#allocation5 + $0x18] sm:$0xff] %v452
  %473 = vst [vmem:[#allocation5 + $0x20] sm:$0xff] %v350
  %474 = vst [vmem:[#allocation5 + $0x28] sm:$0xff] %v385
  %475 = vst [vmem:[#allocation5 + $0x30] sm:$0xff] %v420
  %476 = vst [vmem:[#allocation5 + $0x38] sm:$0xff] %v455
  %477 = vst [vmem:[#allocation5 + $0x40] sm:$0xff] %v353
  %478 = vst [vmem:[#allocation5 + $0x48] sm:$0xff] %v388
  %479 = vst [vmem:[#allocation5 + $0x50] sm:$0xff] %v423
  %480 = vst [vmem:[#allocation5 + $0x58] sm:$0xff] %v458
  %481 = vst [vmem:[#allocation5 + $0x60] sm:$0xff] %v356
  %482 = vst [vmem:[#allocation5 + $0x68] sm:$0xff] %v391
  %483 = vst [vmem:[#allocation5 + $0x70] sm:$0xff] %v426
  %484 = vst [vmem:[#allocation5 + $0x78] sm:$0xff] %v461
  %485 = vst [vmem:[#allocation5 + $0x80] sm:$0xff] %v359
  %486 = vst [vmem:[#allocation5 + $0x88] sm:$0xff] %v394
  %487 = vst [vmem:[#allocation5 + $0x90] sm:$0xff] %v429
  %488 = vst [vmem:[#allocation5 + $0x98] sm:$0xff] %v464
  %489 = vst [vmem:[#allocation5 + $0xa0] sm:$0xff] %v362
  %490 = vst [vmem:[#allocation5 + $0xa8] sm:$0xff] %v397
  %491 = vst [vmem:[#allocation5 + $0xb0] sm:$0xff] %v432
  %492 = vst [vmem:[#allocation5 + $0xb8] sm:$0xff] %v467
  %493 = vst [vmem:[#allocation2] sm:$0xff] 0.0
  %494 = vst [vmem:[#allocation3] sm:$0xff] 0.0
  %v495 = vld [vmem:[%s4] sm:$0xff]
  %v496 = vld [vmem:[%s4 + $0x8] sm:$0xff]
  %v497 = vld [vmem:[%s4 + $0x10] sm:$0xff]
  %v498 = vld [vmem:[%s4 + $0x18] sm:$0xff]
  %v499 = vld [vmem:[%s4 + $0x20] sm:$0xff]
  %v500 = vld [vmem:[%s4 + $0x28] sm:$0xff]
  %v501 = vld [vmem:[%s4 + $0x30] sm:$0xff]
  %v502 = vld [vmem:[%s4 + $0x38] sm:$0xff]
  %v503 = vld [vmem:[%s4 + $0x40] sm:$0xff]
  %v504 = vld [vmem:[%s4 + $0x48] sm:$0xff]
  %v505 = vld [vmem:[%s4 + $0x50] sm:$0xff]
  %v506 = vld [vmem:[%s4 + $0x58] sm:$0xff]
  %v507 = vld [vmem:[%s4 + $0x60] sm:$0xff]
  %v508 = vld [vmem:[%s4 + $0x68] sm:$0xff]
  %v509 = vld [vmem:[%s4 + $0x70] sm:$0xff]
  %v510 = vld [vmem:[%s4 + $0x78] sm:$0xff]
  %v511 = vld [vmem:[%s4 + $0x80] sm:$0xff]
  %v512 = vld [vmem:[%s4 + $0x88] sm:$0xff]
  %v513 = vld [vmem:[%s4 + $0x90] sm:$0xff]
  %v514 = vld [vmem:[%s4 + $0x98] sm:$0xff]
  %v515 = vld [vmem:[%s4 + $0xa0] sm:$0xff]
  %v516 = vld [vmem:[%s4 + $0xa8] sm:$0xff]
  %v517 = vld [vmem:[%s4 + $0xb0] sm:$0xff]
  %v518 = vld [vmem:[%s4 + $0xb8] sm:$0xff]
  %v519 = vld [vmem:[%s4 + $0xc0] sm:$0xff]
  %v520 = vld [vmem:[%s4 + $0xc8] sm:$0xff]
  %v521 = vld [vmem:[%s4 + $0xd0] sm:$0xff]
  %v522 = vld [vmem:[%s4 + $0xd8] sm:$0xff]
  %v523 = vld [vmem:[%s4 + $0xe0] sm:$0xff]
  %v524 = vld [vmem:[%s4 + $0xe8] sm:$0xff]
  %v525 = vld [vmem:[%s4 + $0xf0] sm:$0xff]
  %v526 = vld [vmem:[%s4 + $0xf8] sm:$0xff]
  %v527 = vld [vmem:[%s4 + $0x100] sm:$0xff]
  %v528 = vld [vmem:[%s4 + $0x108] sm:$0xff]
  %v529 = vld [vmem:[%s4 + $0x110] sm:$0xff]
  %v530 = vld [vmem:[%s4 + $0x118] sm:$0xff]
  %v531 = vld [vmem:[%s4 + $0x120] sm:$0xff]
  %v532 = vld [vmem:[%s4 + $0x128] sm:$0xff]
  %v533 = vld [vmem:[%s4 + $0x130] sm:$0xff]
  %v534 = vld [vmem:[%s4 + $0x138] sm:$0xff]
  %v535 = vld [vmem:[%s4 + $0x140] sm:$0xff]
  %v536 = vld [vmem:[%s4 + $0x148] sm:$0xff]
  %v537 = vld [vmem:[%s4 + $0x150] sm:$0xff]
  %v538 = vld [vmem:[%s4 + $0x158] sm:$0xff]
  %v539 = vld [vmem:[%s4 + $0x160] sm:$0xff]
  %v540 = vld [vmem:[%s4 + $0x168] sm:$0xff]
  %v541 = vld [vmem:[%s4 + $0x170] sm:$0xff]
  %v542 = vld [vmem:[%s4 + $0x178] sm:$0xff]
  %v543 = vld [vmem:[%s4 + $0x180] sm:$0xff]
  %v544 = vld [vmem:[%s4 + $0x188] sm:$0xff]
  %v545 = vld [vmem:[%s4 + $0x190] sm:$0xff]
  %v546 = vld [vmem:[%s4 + $0x198] sm:$0xff]
  %v547 = vld [vmem:[%s4 + $0x1a0] sm:$0xff]
  %v548 = vld [vmem:[%s4 + $0x1a8] sm:$0xff]
  %v549 = vld [vmem:[%s4 + $0x1b0] sm:$0xff]
  %v550 = vld [vmem:[%s4 + $0x1b8] sm:$0xff]
  %v551 = vld [vmem:[%s4 + $0x1c0] sm:$0xff]
  %v552 = vld [vmem:[%s4 + $0x1c8] sm:$0xff]
  %v553 = vld [vmem:[%s4 + $0x1d0] sm:$0xff]
  %v554 = vld [vmem:[%s4 + $0x1d8] sm:$0xff]
  %v555 = vld [vmem:[%s4 + $0x1e0] sm:$0xff]
  %v556 = vld [vmem:[%s4 + $0x1e8] sm:$0xff]
  %v557 = vld [vmem:[%s4 + $0x1f0] sm:$0xff]
  %v558 = vld [vmem:[%s4 + $0x1f8] sm:$0xff]
  %v559 = vld [vmem:[%s7] sm:$0xff]
  %v560 = vld [vmem:[%s7 + $0x8] sm:$0xff]
  %v561 = vld [vmem:[%s7 + $0x10] sm:$0xff]
  %v562 = vld [vmem:[%s7 + $0x18] sm:$0xff]
  %v563 = vld [vmem:[%s7 + $0x20] sm:$0xff]
  %v564 = vld [vmem:[%s7 + $0x28] sm:$0xff]
  %v565 = vld [vmem:[%s7 + $0x30] sm:$0xff]
  %v566 = vld [vmem:[%s7 + $0x38] sm:$0xff]
  %v567 = vld [vmem:[%s7 + $0x40] sm:$0xff]
  %v568 = vld [vmem:[%s7 + $0x48] sm:$0xff]
  %v569 = vld [vmem:[%s7 + $0x50] sm:$0xff]
  %v570 = vld [vmem:[%s7 + $0x58] sm:$0xff]
  %v571 = vld [vmem:[%s7 + $0x60] sm:$0xff]
  %v572 = vld [vmem:[%s7 + $0x68] sm:$0xff]
  %v573 = vld [vmem:[%s7 + $0x70] sm:$0xff]
  %v574 = vld [vmem:[%s7 + $0x78] sm:$0xff]
  %v575 = vld [vmem:[%s7 + $0x80] sm:$0xff]
  %v576 = vld [vmem:[%s7 + $0x88] sm:$0xff]
  %v577 = vld [vmem:[%s7 + $0x90] sm:$0xff]
  %v578 = vld [vmem:[%s7 + $0x98] sm:$0xff]
  %v579 = vld [vmem:[%s7 + $0xa0] sm:$0xff]
  %v580 = vld [vmem:[%s7 + $0xa8] sm:$0xff]
  %v581 = vld [vmem:[%s7 + $0xb0] sm:$0xff]
  %v582 = vld [vmem:[%s7 + $0xb8] sm:$0xff]
  %v583 = vld [vmem:[%s7 + $0xc0] sm:$0xff]
  %v584 = vld [vmem:[%s7 + $0xc8] sm:$0xff]
  %v585 = vld [vmem:[%s7 + $0xd0] sm:$0xff]
  %v586 = vld [vmem:[%s7 + $0xd8] sm:$0xff]
  %v587 = vld [vmem:[%s7 + $0xe0] sm:$0xff]
  %v588 = vld [vmem:[%s7 + $0xe8] sm:$0xff]
  %v589 = vld [vmem:[%s7 + $0xf0] sm:$0xff]
  %v590 = vld [vmem:[%s7 + $0xf8] sm:$0xff]
  %v591 = vld [vmem:[%s7 + $0x100] sm:$0xff]
  %v592 = vld [vmem:[%s7 + $0x108] sm:$0xff]
  %v593 = vld [vmem:[%s7 + $0x110] sm:$0xff]
  %v594 = vld [vmem:[%s7 + $0x118] sm:$0xff]
  %v595 = vld [vmem:[%s7 + $0x120] sm:$0xff]
  %v596 = vld [vmem:[%s7 + $0x128] sm:$0xff]
  %v597 = vld [vmem:[%s7 + $0x130] sm:$0xff]
  %v598 = vld [vmem:[%s7 + $0x138] sm:$0xff]
  %v599 = vld [vmem:[%s7 + $0x140] sm:$0xff]
  %v600 = vld [vmem:[%s7 + $0x148] sm:$0xff]
  %v601 = vld [vmem:[%s7 + $0x150] sm:$0xff]
  %v602 = vld [vmem:[%s7 + $0x158] sm:$0xff]
  %v603 = vld [vmem:[%s7 + $0x160] sm:$0xff]
  %v604 = vld [vmem:[%s7 + $0x168] sm:$0xff]
  %v605 = vld [vmem:[%s7 + $0x170] sm:$0xff]
  %v606 = vld [vmem:[%s7 + $0x178] sm:$0xff]
  %v607 = vld [vmem:[%s7 + $0x180] sm:$0xff]
  %v608 = vld [vmem:[%s7 + $0x188] sm:$0xff]
  %v609 = vld [vmem:[%s7 + $0x190] sm:$0xff]
  %v610 = vld [vmem:[%s7 + $0x198] sm:$0xff]
  %v611 = vld [vmem:[%s7 + $0x1a0] sm:$0xff]
  %v612 = vld [vmem:[%s7 + $0x1a8] sm:$0xff]
  %v613 = vld [vmem:[%s7 + $0x1b0] sm:$0xff]
  %v614 = vld [vmem:[%s7 + $0x1b8] sm:$0xff]
  %v615 = vld [vmem:[%s7 + $0x1c0] sm:$0xff]
  %v616 = vld [vmem:[%s7 + $0x1c8] sm:$0xff]
  %v617 = vld [vmem:[%s7 + $0x1d0] sm:$0xff]
  %v618 = vld [vmem:[%s7 + $0x1d8] sm:$0xff]
  %v619 = vld [vmem:[%s7 + $0x1e0] sm:$0xff]
  %v620 = vld [vmem:[%s7 + $0x1e8] sm:$0xff]
  %v621 = vld [vmem:[%s7 + $0x1f0] sm:$0xff]
  %v622 = vld [vmem:[%s7 + $0x1f8] sm:$0xff]
  %v623 = vld [vmem:[%s1] sm:$0xff]
  %624 = vset.pattern.permute.xlu0 0
  %625 = vperm.xlu0 %624, %v623
  %v626 = vpop.permute.xlu0 %625
  %v627 = vld [vmem:[#allocation2] sm:$0xff]
  %v628 = vld [vmem:[#allocation3] sm:$0xff]
  %v629 = vld [vmem:[#allocation4] sm:$0xff]
  %v630 = vld [vmem:[#allocation4 + $0x8] sm:$0xff]
  %v631 = vld [vmem:[#allocation4 + $0x10] sm:$0xff]
  %v632 = vld [vmem:[#allocation4 + $0x18] sm:$0xff]
  %633 = vmatpush.msra.mxu0 %v555
  %634 = vmatpush.msra.mxu0 %v551
  %635 = vmatpush.msra.mxu0 %v547
  %636 = vmatpush.msra.mxu0 %v543
  %637 = vmatpush.msra.mxu0 %v539
  %638 = vmatpush.msra.mxu0 %v535
  %639 = vmatpush.msra.mxu0 %v531
  %640 = vmatpush.msra.mxu0 %v527
  %641 = vmatpush.msra.mxu0 %v523
  %642 = vmatpush.msra.mxu0 %v519
  %643 = vmatpush.msra.mxu0 %v515
  %644 = vmatpush.msra.mxu0 %v511
  %645 = vmatpush.msra.mxu0 %v507
  %646 = vmatpush.msra.mxu0 %v503
  %647 = vmatpush.msra.mxu0 %v499
  %648 = vmatpush.msra.mxu0 %v495
  %649 = vmatmul.f32.gmra.mxu0 %v627
  %v650 = vpop.f32.mrf.mxu0
  %v651 = vadd.f32 0.0, %v650
  %652 = vdwg.mxu0
  %653 = vmatpush.msra.mxu0 %v556
  %654 = vmatpush.msra.mxu0 %v552
  %655 = vmatpush.msra.mxu0 %v548
  %656 = vmatpush.msra.mxu0 %v544
  %657 = vmatpush.msra.mxu0 %v540
  %658 = vmatpush.msra.mxu0 %v536
  %659 = vmatpush.msra.mxu0 %v532
  %660 = vmatpush.msra.mxu0 %v528
  %661 = vmatpush.msra.mxu0 %v524
  %662 = vmatpush.msra.mxu0 %v520
  %663 = vmatpush.msra.mxu0 %v516
  %664 = vmatpush.msra.mxu0 %v512
  %665 = vmatpush.msra.mxu0 %v508
  %666 = vmatpush.msra.mxu0 %v504
  %667 = vmatpush.msra.mxu0 %v500
  %668 = vmatpush.msra.mxu0 %v496
  %669 = vmatmul.f32.gmra.mxu0 %v627
  %v670 = vpop.f32.mrf.mxu0
  %v671 = vadd.f32 0.0, %v670
  %672 = vdwg.mxu0
  %673 = vmatpush.msra.mxu0 %v557
  %674 = vmatpush.msra.mxu0 %v553
  %675 = vmatpush.msra.mxu0 %v549
  %676 = vmatpush.msra.mxu0 %v545
  %677 = vmatpush.msra.mxu0 %v541
  %678 = vmatpush.msra.mxu0 %v537
  %679 = vmatpush.msra.mxu0 %v533
  %680 = vmatpush.msra.mxu0 %v529
  %681 = vmatpush.msra.mxu0 %v525
  %682 = vmatpush.msra.mxu0 %v521
  %683 = vmatpush.msra.mxu0 %v517
  %684 = vmatpush.msra.mxu0 %v513
  %685 = vmatpush.msra.mxu0 %v509
  %686 = vmatpush.msra.mxu0 %v505
  %687 = vmatpush.msra.mxu0 %v501
  %688 = vmatpush.msra.mxu0 %v497
  %689 = vmatmul.f32.gmra.mxu0 %v627
  %v690 = vpop.f32.mrf.mxu0
  %v691 = vadd.f32 0.0, %v690
  %692 = vdwg.mxu0
  %693 = vmatpush.msra.mxu0 %v558
  %694 = vmatpush.msra.mxu0 %v554
  %695 = vmatpush.msra.mxu0 %v550
  %696 = vmatpush.msra.mxu0 %v546
  %697 = vmatpush.msra.mxu0 %v542
  %698 = vmatpush.msra.mxu0 %v538
  %699 = vmatpush.msra.mxu0 %v534
  %700 = vmatpush.msra.mxu0 %v530
  %701 = vmatpush.msra.mxu0 %v526
  %702 = vmatpush.msra.mxu0 %v522
  %703 = vmatpush.msra.mxu0 %v518
  %704 = vmatpush.msra.mxu0 %v514
  %705 = vmatpush.msra.mxu0 %v510
  %706 = vmatpush.msra.mxu0 %v506
  %707 = vmatpush.msra.mxu0 %v502
  %708 = vmatpush.msra.mxu0 %v498
  %709 = vmatmul.f32.gmra.mxu0 %v627
  %v710 = vpop.f32.mrf.mxu0
  %v711 = vadd.f32 0.0, %v710
  %712 = vdwg.mxu0
  %v713 = vadd.f32 %v629, %v651
  %v714 = vadd.f32 %v630, %v671
  %v715 = vadd.f32 %v631, %v691
  %v716 = vadd.f32 %v632, %v711
  %v717 = vmul.f32 %v713, 0.5
  %v718 = vtanh.pop %v717
  %v719 = vmul.f32 %v718, 0.5
  %v720 = vadd.f32 %v719, 0.5
  %v721 = vmul.f32 %v714, 0.5
  %v722 = vtanh.pop %v721
  %v723 = vmul.f32 %v722, 0.5
  %v724 = vadd.f32 %v723, 0.5
  %v725 = vtanh.pop %v715
  %v726 = vmul.f32 %v716, 0.5
  %v727 = vtanh.pop %v726
  %v728 = vmul.f32 %v727, 0.5
  %v729 = vadd.f32 %v728, 0.5
  %v730 = vmul.f32 %v724, %v628
  %v731 = vmul.f32 %v720, %v725
  %v732 = vadd.f32 %v730, %v731
  %v733 = vtanh.pop %v732
  %v734 = vmul.f32 %v729, %v733
  %vm735 = vcmp.gt.s32.totalorder %v626, 0
  %v736 = vsel %vm735, %v734, %v627
  %737 = vst [vmem:[#allocation2] sm:$0xff] %v736
  %v738 = vsel %vm735, %v732, %v628
  %739 = vst [vmem:[#allocation3] sm:$0xff] %v738
  %v740 = vld [vmem:[#allocation2] sm:$0xff]
  %v741 = vld [vmem:[#allocation3] sm:$0xff]
  %v742 = vld [vmem:[#allocation4 + $0x20] sm:$0xff]
  %v743 = vld [vmem:[#allocation4 + $0x28] sm:$0xff]
  %v744 = vld [vmem:[#allocation4 + $0x30] sm:$0xff]
  %v745 = vld [vmem:[#allocation4 + $0x38] sm:$0xff]
  %746 = vmatpush.msra.mxu0 %v555
  %747 = vmatpush.msra.mxu0 %v551
  %748 = vmatpush.msra.mxu0 %v547
  %749 = vmatpush.msra.mxu0 %v543
  %750 = vmatpush.msra.mxu0 %v539
  %751 = vmatpush.msra.mxu0 %v535
  %752 = vmatpush.msra.mxu0 %v531
  %753 = vmatpush.msra.mxu0 %v527
  %754 = vmatpush.msra.mxu0 %v523
  %755 = vmatpush.msra.mxu0 %v519
  %756 = vmatpush.msra.mxu0 %v515
  %757 = vmatpush.msra.mxu0 %v511
  %758 = vmatpush.msra.mxu0 %v507
  %759 = vmatpush.msra.mxu0 %v503
  %760 = vmatpush.msra.mxu0 %v499
  %761 = vmatpush.msra.mxu0 %v495
  %762 = vmatmul.f32.gmra.mxu0 %v740
  %v763 = vpop.f32.mrf.mxu0
  %v764 = vadd.f32 0.0, %v763
  %765 = vdwg.mxu0
  %766 = vmatpush.msra.mxu0 %v556
  %767 = vmatpush.msra.mxu0 %v552
  %768 = vmatpush.msra.mxu0 %v548
  %769 = vmatpush.msra.mxu0 %v544
  %770 = vmatpush.msra.mxu0 %v540
  %771 = vmatpush.msra.mxu0 %v536
  %772 = vmatpush.msra.mxu0 %v532
  %773 = vmatpush.msra.mxu0 %v528
  %774 = vmatpush.msra.mxu0 %v524
  %775 = vmatpush.msra.mxu0 %v520
  %776 = vmatpush.msra.mxu0 %v516
  %777 = vmatpush.msra.mxu0 %v512
  %778 = vmatpush.msra.mxu0 %v508
  %779 = vmatpush.msra.mxu0 %v504
  %780 = vmatpush.msra.mxu0 %v500
  %781 = vmatpush.msra.mxu0 %v496
  %782 = vmatmul.f32.gmra.mxu0 %v740
  %v783 = vpop.f32.mrf.mxu0
  %v784 = vadd.f32 0.0, %v783
  %785 = vdwg.mxu0
  %786 = vmatpush.msra.mxu0 %v557
  %787 = vmatpush.msra.mxu0 %v553
  %788 = vmatpush.msra.mxu0 %v549
  %789 = vmatpush.msra.mxu0 %v545
  %790 = vmatpush.msra.mxu0 %v541
  %791 = vmatpush.msra.mxu0 %v537
  %792 = vmatpush.msra.mxu0 %v533
  %793 = vmatpush.msra.mxu0 %v529
  %794 = vmatpush.msra.mxu0 %v525
  %795 = vmatpush.msra.mxu0 %v521
  %796 = vmatpush.msra.mxu0 %v517
  %797 = vmatpush.msra.mxu0 %v513
  %798 = vmatpush.msra.mxu0 %v509
  %799 = vmatpush.msra.mxu0 %v505
  %800 = vmatpush.msra.mxu0 %v501
  %801 = vmatpush.msra.mxu0 %v497
  %802 = vmatmul.f32.gmra.mxu0 %v740
  %v803 = vpop.f32.mrf.mxu0
  %v804 = vadd.f32 0.0, %v803
  %805 = vdwg.mxu0
  %806 = vmatpush.msra.mxu0 %v558
  %807 = vmatpush.msra.mxu0 %v554
  %808 = vmatpush.msra.mxu0 %v550
  %809 = vmatpush.msra.mxu0 %v546
  %810 = vmatpush.msra.mxu0 %v542
  %811 = vmatpush.msra.mxu0 %v538
  %812 = vmatpush.msra.mxu0 %v534
  %813 = vmatpush.msra.mxu0 %v530
  %814 = vmatpush.msra.mxu0 %v526
  %815 = vmatpush.msra.mxu0 %v522
  %816 = vmatpush.msra.mxu0 %v518
  %817 = vmatpush.msra.mxu0 %v514
  %818 = vmatpush.msra.mxu0 %v510
  %819 = vmatpush.msra.mxu0 %v506
  %820 = vmatpush.msra.mxu0 %v502
  %821 = vmatpush.msra.mxu0 %v498
  %822 = vmatmul.f32.gmra.mxu0 %v740
  %v823 = vpop.f32.mrf.mxu0
  %v824 = vadd.f32 0.0, %v823
  %825 = vdwg.mxu0
  %v826 = vadd.f32 %v742, %v764
  %v827 = vadd.f32 %v743, %v784
  %v828 = vadd.f32 %v744, %v804
  %v829 = vadd.f32 %v745, %v824
  %v830 = vmul.f32 %v826, 0.5
  %v831 = vtanh.pop %v830
  %v832 = vmul.f32 %v831, 0.5
  %v833 = vadd.f32 %v832, 0.5
  %v834 = vmul.f32 %v827, 0.5
  %v835 = vtanh.pop %v834
  %v836 = vmul.f32 %v835, 0.5
  %v837 = vadd.f32 %v836, 0.5
  %v838 = vtanh.pop %v828
  %v839 = vmul.f32 %v829, 0.5
  %v840 = vtanh.pop %v839
  %v841 = vmul.f32 %v840, 0.5
  %v842 = vadd.f32 %v841, 0.5
  %v843 = vmul.f32 %v837, %v741
  %v844 = vmul.f32 %v833, %v838
  %v845 = vadd.f32 %v843, %v844
  %v846 = vtanh.pop %v845
  %v847 = vmul.f32 %v842, %v846
  %vm848 = vcmp.gt.s32.totalorder %v626, 1
  %v849 = vsel %vm848, %v847, %v740
  %850 = vst [vmem:[#allocation2] sm:$0xff] %v849
  %v851 = vsel %vm848, %v845, %v741
  %852 = vst [vmem:[#allocation3] sm:$0xff] %v851
  %v853 = vld [vmem:[#allocation2] sm:$0xff]
  %v854 = vld [vmem:[#allocation3] sm:$0xff]
  %v855 = vld [vmem:[#allocation4 + $0x40] sm:$0xff]
  %v856 = vld [vmem:[#allocation4 + $0x48] sm:$0xff]
  %v857 = vld [vmem:[#allocation4 + $0x50] sm:$0xff]
  %v858 = vld [vmem:[#allocation4 + $0x58] sm:$0xff]
  %859 = vmatpush.msra.mxu0 %v555
  %860 = vmatpush.msra.mxu0 %v551
  %861 = vmatpush.msra.mxu0 %v547
  %862 = vmatpush.msra.mxu0 %v543
  %863 = vmatpush.msra.mxu0 %v539
  %864 = vmatpush.msra.mxu0 %v535
  %865 = vmatpush.msra.mxu0 %v531
  %866 = vmatpush.msra.mxu0 %v527
  %867 = vmatpush.msra.mxu0 %v523
  %868 = vmatpush.msra.mxu0 %v519
  %869 = vmatpush.msra.mxu0 %v515
  %870 = vmatpush.msra.mxu0 %v511
  %871 = vmatpush.msra.mxu0 %v507
  %872 = vmatpush.msra.mxu0 %v503
  %873 = vmatpush.msra.mxu0 %v499
  %874 = vmatpush.msra.mxu0 %v495
  %875 = vmatmul.f32.gmra.mxu0 %v853
  %v876 = vpop.f32.mrf.mxu0
  %v877 = vadd.f32 0.0, %v876
  %878 = vdwg.mxu0
  %879 = vmatpush.msra.mxu0 %v556
  %880 = vmatpush.msra.mxu0 %v552
  %881 = vmatpush.msra.mxu0 %v548
  %882 = vmatpush.msra.mxu0 %v544
  %883 = vmatpush.msra.mxu0 %v540
  %884 = vmatpush.msra.mxu0 %v536
  %885 = vmatpush.msra.mxu0 %v532
  %886 = vmatpush.msra.mxu0 %v528
  %887 = vmatpush.msra.mxu0 %v524
  %888 = vmatpush.msra.mxu0 %v520
  %889 = vmatpush.msra.mxu0 %v516
  %890 = vmatpush.msra.mxu0 %v512
  %891 = vmatpush.msra.mxu0 %v508
  %892 = vmatpush.msra.mxu0 %v504
  %893 = vmatpush.msra.mxu0 %v500
  %894 = vmatpush.msra.mxu0 %v496
  %895 = vmatmul.f32.gmra.mxu0 %v853
  %v896 = vpop.f32.mrf.mxu0
  %v897 = vadd.f32 0.0, %v896
  %898 = vdwg.mxu0
  %899 = vmatpush.msra.mxu0 %v557
  %900 = vmatpush.msra.mxu0 %v553
  %901 = vmatpush.msra.mxu0 %v549
  %902 = vmatpush.msra.mxu0 %v545
  %903 = vmatpush.msra.mxu0 %v541
  %904 = vmatpush.msra.mxu0 %v537
  %905 = vmatpush.msra.mxu0 %v533
  %906 = vmatpush.msra.mxu0 %v529
  %907 = vmatpush.msra.mxu0 %v525
  %908 = vmatpush.msra.mxu0 %v521
  %909 = vmatpush.msra.mxu0 %v517
  %910 = vmatpush.msra.mxu0 %v513
  %911 = vmatpush.msra.mxu0 %v509
  %912 = vmatpush.msra.mxu0 %v505
  %913 = vmatpush.msra.mxu0 %v501
  %914 = vmatpush.msra.mxu0 %v497
  %915 = vmatmul.f32.gmra.mxu0 %v853
  %v916 = vpop.f32.mrf.mxu0
  %v917 = vadd.f32 0.0, %v916
  %918 = vdwg.mxu0
  %919 = vmatpush.msra.mxu0 %v558
  %920 = vmatpush.msra.mxu0 %v554
  %921 = vmatpush.msra.mxu0 %v550
  %922 = vmatpush.msra.mxu0 %v546
  %923 = vmatpush.msra.mxu0 %v542
  %924 = vmatpush.msra.mxu0 %v538
  %925 = vmatpush.msra.mxu0 %v534
  %926 = vmatpush.msra.mxu0 %v530
  %927 = vmatpush.msra.mxu0 %v526
  %928 = vmatpush.msra.mxu0 %v522
  %929 = vmatpush.msra.mxu0 %v518
  %930 = vmatpush.msra.mxu0 %v514
  %931 = vmatpush.msra.mxu0 %v510
  %932 = vmatpush.msra.mxu0 %v506
  %933 = vmatpush.msra.mxu0 %v502
  %934 = vmatpush.msra.mxu0 %v498
  %935 = vmatmul.f32.gmra.mxu0 %v853
  %v936 = vpop.f32.mrf.mxu0
  %v937 = vadd.f32 0.0, %v936
  %938 = vdwg.mxu0
  %v939 = vadd.f32 %v855, %v877
  %v940 = vadd.f32 %v856, %v897
  %v941 = vadd.f32 %v857, %v917
  %v942 = vadd.f32 %v858, %v937
  %v943 = vmul.f32 %v939, 0.5
  %v944 = vtanh.pop %v943
  %v945 = vmul.f32 %v944, 0.5
  %v946 = vadd.f32 %v945, 0.5
  %v947 = vmul.f32 %v940, 0.5
  %v948 = vtanh.pop %v947
  %v949 = vmul.f32 %v948, 0.5
  %v950 = vadd.f32 %v949, 0.5
  %v951 = vtanh.pop %v941
  %v952 = vmul.f32 %v942, 0.5
  %v953 = vtanh.pop %v952
  %v954 = vmul.f32 %v953, 0.5
  %v955 = vadd.f32 %v954, 0.5
  %v956 = vmul.f32 %v950, %v854
  %v957 = vmul.f32 %v946, %v951
  %v958 = vadd.f32 %v956, %v957
  %v959 = vtanh.pop %v958
  %v960 = vmul.f32 %v955, %v959
  %vm961 = vcmp.gt.s32.totalorder %v626, 2
  %v962 = vsel %vm961, %v960, %v853
  %963 = vst [vmem:[#allocation2] sm:$0xff] %v962
  %v964 = vsel %vm961, %v958, %v854
  %965 = vst [vmem:[#allocation3] sm:$0xff] %v964
  %v966 = vld [vmem:[#allocation2] sm:$0xff]
  %v967 = vld [vmem:[#allocation3] sm:$0xff]
  %v968 = vld [vmem:[#allocation4 + $0x60] sm:$0xff]
  %v969 = vld [vmem:[#allocation4 + $0x68] sm:$0xff]
  %v970 = vld [vmem:[#allocation4 + $0x70] sm:$0xff]
  %v971 = vld [vmem:[#allocation4 + $0x78] sm:$0xff]
  %972 = vmatpush.msra.mxu0 %v555
  %973 = vmatpush.msra.mxu0 %v551
  %974 = vmatpush.msra.mxu0 %v547
  %975 = vmatpush.msra.mxu0 %v543
  %976 = vmatpush.msra.mxu0 %v539
  %977 = vmatpush.msra.mxu0 %v535
  %978 = vmatpush.msra.mxu0 %v531
  %979 = vmatpush.msra.mxu0 %v527
  %980 = vmatpush.msra.mxu0 %v523
  %981 = vmatpush.msra.mxu0 %v519
  %982 = vmatpush.msra.mxu0 %v515
  %983 = vmatpush.msra.mxu0 %v511
  %984 = vmatpush.msra.mxu0 %v507
  %985 = vmatpush.msra.mxu0 %v503
  %986 = vmatpush.msra.mxu0 %v499
  %987 = vmatpush.msra.mxu0 %v495
  %988 = vmatmul.f32.gmra.mxu0 %v966
  %v989 = vpop.f32.mrf.mxu0
  %v990 = vadd.f32 0.0, %v989
  %991 = vdwg.mxu0
  %992 = vmatpush.msra.mxu0 %v556
  %993 = vmatpush.msra.mxu0 %v552
  %994 = vmatpush.msra.mxu0 %v548
  %995 = vmatpush.msra.mxu0 %v544
  %996 = vmatpush.msra.mxu0 %v540
  %997 = vmatpush.msra.mxu0 %v536
  %998 = vmatpush.msra.mxu0 %v532
  %999 = vmatpush.msra.mxu0 %v528
  %1000 = vmatpush.msra.mxu0 %v524
  %1001 = vmatpush.msra.mxu0 %v520
  %1002 = vmatpush.msra.mxu0 %v516
  %1003 = vmatpush.msra.mxu0 %v512
  %1004 = vmatpush.msra.mxu0 %v508
  %1005 = vmatpush.msra.mxu0 %v504
  %1006 = vmatpush.msra.mxu0 %v500
  %1007 = vmatpush.msra.mxu0 %v496
  %1008 = vmatmul.f32.gmra.mxu0 %v966
  %v1009 = vpop.f32.mrf.mxu0
  %v1010 = vadd.f32 0.0, %v1009
  %1011 = vdwg.mxu0
  %1012 = vmatpush.msra.mxu0 %v557
  %1013 = vmatpush.msra.mxu0 %v553
  %1014 = vmatpush.msra.mxu0 %v549
  %1015 = vmatpush.msra.mxu0 %v545
  %1016 = vmatpush.msra.mxu0 %v541
  %1017 = vmatpush.msra.mxu0 %v537
  %1018 = vmatpush.msra.mxu0 %v533
  %1019 = vmatpush.msra.mxu0 %v529
  %1020 = vmatpush.msra.mxu0 %v525
  %1021 = vmatpush.msra.mxu0 %v521
  %1022 = vmatpush.msra.mxu0 %v517
  %1023 = vmatpush.msra.mxu0 %v513
  %1024 = vmatpush.msra.mxu0 %v509
  %1025 = vmatpush.msra.mxu0 %v505
  %1026 = vmatpush.msra.mxu0 %v501
  %1027 = vmatpush.msra.mxu0 %v497
  %1028 = vmatmul.f32.gmra.mxu0 %v966
  %v1029 = vpop.f32.mrf.mxu0
  %v1030 = vadd.f32 0.0, %v1029
  %1031 = vdwg.mxu0
  %1032 = vmatpush.msra.mxu0 %v558
  %1033 = vmatpush.msra.mxu0 %v554
  %1034 = vmatpush.msra.mxu0 %v550
  %1035 = vmatpush.msra.mxu0 %v546
  %1036 = vmatpush.msra.mxu0 %v542
  %1037 = vmatpush.msra.mxu0 %v538
  %1038 = vmatpush.msra.mxu0 %v534
  %1039 = vmatpush.msra.mxu0 %v530
  %1040 = vmatpush.msra.mxu0 %v526
  %1041 = vmatpush.msra.mxu0 %v522
  %1042 = vmatpush.msra.mxu0 %v518
  %1043 = vmatpush.msra.mxu0 %v514
  %1044 = vmatpush.msra.mxu0 %v510
  %1045 = vmatpush.msra.mxu0 %v506
  %1046 = vmatpush.msra.mxu0 %v502
  %1047 = vmatpush.msra.mxu0 %v498
  %1048 = vmatmul.f32.gmra.mxu0 %v966
  %v1049 = vpop.f32.mrf.mxu0
  %v1050 = vadd.f32 0.0, %v1049
  %1051 = vdwg.mxu0
  %v1052 = vadd.f32 %v968, %v990
  %v1053 = vadd.f32 %v969, %v1010
  %v1054 = vadd.f32 %v970, %v1030
  %v1055 = vadd.f32 %v971, %v1050
  %v1056 = vmul.f32 %v1052, 0.5
  %v1057 = vtanh.pop %v1056
  %v1058 = vmul.f32 %v1057, 0.5
  %v1059 = vadd.f32 %v1058, 0.5
  %v1060 = vmul.f32 %v1053, 0.5
  %v1061 = vtanh.pop %v1060
  %v1062 = vmul.f32 %v1061, 0.5
  %v1063 = vadd.f32 %v1062, 0.5
  %v1064 = vtanh.pop %v1054
  %v1065 = vmul.f32 %v1055, 0.5
  %v1066 = vtanh.pop %v1065
  %v1067 = vmul.f32 %v1066, 0.5
  %v1068 = vadd.f32 %v1067, 0.5
  %v1069 = vmul.f32 %v1063, %v967
  %v1070 = vmul.f32 %v1059, %v1064
  %v1071 = vadd.f32 %v1069, %v1070
  %v1072 = vtanh.pop %v1071
  %v1073 = vmul.f32 %v1068, %v1072
  %vm1074 = vcmp.gt.s32.totalorder %v626, 3
  %v1075 = vsel %vm1074, %v1073, %v966
  %1076 = vst [vmem:[#allocation2] sm:$0xff] %v1075
  %v1077 = vsel %vm1074, %v1071, %v967
  %1078 = vst [vmem:[#allocation3] sm:$0xff] %v1077
  %v1079 = vld [vmem:[#allocation2] sm:$0xff]
  %v1080 = vld [vmem:[#allocation3] sm:$0xff]
  %v1081 = vld [vmem:[#allocation4 + $0x80] sm:$0xff]
  %v1082 = vld [vmem:[#allocation4 + $0x88] sm:$0xff]
  %v1083 = vld [vmem:[#allocation4 + $0x90] sm:$0xff]
  %v1084 = vld [vmem:[#allocation4 + $0x98] sm:$0xff]
  %1085 = vmatpush.msra.mxu0 %v555
  %1086 = vmatpush.msra.mxu0 %v551
  %1087 = vmatpush.msra.mxu0 %v547
  %1088 = vmatpush.msra.mxu0 %v543
  %1089 = vmatpush.msra.mxu0 %v539
  %1090 = vmatpush.msra.mxu0 %v535
  %1091 = vmatpush.msra.mxu0 %v531
  %1092 = vmatpush.msra.mxu0 %v527
  %1093 = vmatpush.msra.mxu0 %v523
  %1094 = vmatpush.msra.mxu0 %v519
  %1095 = vmatpush.msra.mxu0 %v515
  %1096 = vmatpush.msra.mxu0 %v511
  %1097 = vmatpush.msra.mxu0 %v507
  %1098 = vmatpush.msra.mxu0 %v503
  %1099 = vmatpush.msra.mxu0 %v499
  %1100 = vmatpush.msra.mxu0 %v495
  %1101 = vmatmul.f32.gmra.mxu0 %v1079
  %v1102 = vpop.f32.mrf.mxu0
  %v1103 = vadd.f32 0.0, %v1102
  %1104 = vdwg.mxu0
  %1105 = vmatpush.msra.mxu0 %v556
  %1106 = vmatpush.msra.mxu0 %v552
  %1107 = vmatpush.msra.mxu0 %v548
  %1108 = vmatpush.msra.mxu0 %v544
  %1109 = vmatpush.msra.mxu0 %v540
  %1110 = vmatpush.msra.mxu0 %v536
  %1111 = vmatpush.msra.mxu0 %v532
  %1112 = vmatpush.msra.mxu0 %v528
  %1113 = vmatpush.msra.mxu0 %v524
  %1114 = vmatpush.msra.mxu0 %v520
  %1115 = vmatpush.msra.mxu0 %v516
  %1116 = vmatpush.msra.mxu0 %v512
  %1117 = vmatpush.msra.mxu0 %v508
  %1118 = vmatpush.msra.mxu0 %v504
  %1119 = vmatpush.msra.mxu0 %v500
  %1120 = vmatpush.msra.mxu0 %v496
  %1121 = vmatmul.f32.gmra.mxu0 %v1079
  %v1122 = vpop.f32.mrf.mxu0
  %v1123 = vadd.f32 0.0, %v1122
  %1124 = vdwg.mxu0
  %1125 = vmatpush.msra.mxu0 %v557
  %1126 = vmatpush.msra.mxu0 %v553
  %1127 = vmatpush.msra.mxu0 %v549
  %1128 = vmatpush.msra.mxu0 %v545
  %1129 = vmatpush.msra.mxu0 %v541
  %1130 = vmatpush.msra.mxu0 %v537
  %1131 = vmatpush.msra.mxu0 %v533
  %1132 = vmatpush.msra.mxu0 %v529
  %1133 = vmatpush.msra.mxu0 %v525
  %1134 = vmatpush.msra.mxu0 %v521
  %1135 = vmatpush.msra.mxu0 %v517
  %1136 = vmatpush.msra.mxu0 %v513
  %1137 = vmatpush.msra.mxu0 %v509
  %1138 = vmatpush.msra.mxu0 %v505
  %1139 = vmatpush.msra.mxu0 %v501
  %1140 = vmatpush.msra.mxu0 %v497
  %1141 = vmatmul.f32.gmra.mxu0 %v1079
  %v1142 = vpop.f32.mrf.mxu0
  %v1143 = vadd.f32 0.0, %v1142
  %1144 = vdwg.mxu0
  %1145 = vmatpush.msra.mxu0 %v558
  %1146 = vmatpush.msra.mxu0 %v554
  %1147 = vmatpush.msra.mxu0 %v550
  %1148 = vmatpush.msra.mxu0 %v546
  %1149 = vmatpush.msra.mxu0 %v542
  %1150 = vmatpush.msra.mxu0 %v538
  %1151 = vmatpush.msra.mxu0 %v534
  %1152 = vmatpush.msra.mxu0 %v530
  %1153 = vmatpush.msra.mxu0 %v526
  %1154 = vmatpush.msra.mxu0 %v522
  %1155 = vmatpush.msra.mxu0 %v518
  %1156 = vmatpush.msra.mxu0 %v514
  %1157 = vmatpush.msra.mxu0 %v510
  %1158 = vmatpush.msra.mxu0 %v506
  %1159 = vmatpush.msra.mxu0 %v502
  %1160 = vmatpush.msra.mxu0 %v498
  %1161 = vmatmul.f32.gmra.mxu0 %v1079
  %v1162 = vpop.f32.mrf.mxu0
  %v1163 = vadd.f32 0.0, %v1162
  %1164 = vdwg.mxu0
  %v1165 = vadd.f32 %v1081, %v1103
  %v1166 = vadd.f32 %v1082, %v1123
  %v1167 = vadd.f32 %v1083, %v1143
  %v1168 = vadd.f32 %v1084, %v1163
  %v1169 = vmul.f32 %v1165, 0.5
  %v1170 = vtanh.pop %v1169
  %v1171 = vmul.f32 %v1170, 0.5
  %v1172 = vadd.f32 %v1171, 0.5
  %v1173 = vmul.f32 %v1166, 0.5
  %v1174 = vtanh.pop %v1173
  %v1175 = vmul.f32 %v1174, 0.5
  %v1176 = vadd.f32 %v1175, 0.5
  %v1177 = vtanh.pop %v1167
  %v1178 = vmul.f32 %v1168, 0.5
  %v1179 = vtanh.pop %v1178
  %v1180 = vmul.f32 %v1179, 0.5
  %v1181 = vadd.f32 %v1180, 0.5
  %v1182 = vmul.f32 %v1176, %v1080
  %v1183 = vmul.f32 %v1172, %v1177
  %v1184 = vadd.f32 %v1182, %v1183
  %v1185 = vtanh.pop %v1184
  %v1186 = vmul.f32 %v1181, %v1185
  %vm1187 = vcmp.gt.s32.totalorder %v626, 4
  %v1188 = vsel %vm1187, %v1186, %v1079
  %1189 = vst [vmem:[#allocation2] sm:$0xff] %v1188
  %v1190 = vsel %vm1187, %v1184, %v1080
  %1191 = vst [vmem:[#allocation3] sm:$0xff] %v1190
  %v1192 = vld [vmem:[#allocation2] sm:$0xff]
  %v1193 = vld [vmem:[#allocation3] sm:$0xff]
  %v1194 = vld [vmem:[#allocation4 + $0xa0] sm:$0xff]
  %v1195 = vld [vmem:[#allocation4 + $0xa8] sm:$0xff]
  %v1196 = vld [vmem:[#allocation4 + $0xb0] sm:$0xff]
  %v1197 = vld [vmem:[#allocation4 + $0xb8] sm:$0xff]
  %1198 = vmatpush.msra.mxu0 %v555
  %1199 = vmatpush.msra.mxu0 %v551
  %1200 = vmatpush.msra.mxu0 %v547
  %1201 = vmatpush.msra.mxu0 %v543
  %1202 = vmatpush.msra.mxu0 %v539
  %1203 = vmatpush.msra.mxu0 %v535
  %1204 = vmatpush.msra.mxu0 %v531
  %1205 = vmatpush.msra.mxu0 %v527
  %1206 = vmatpush.msra.mxu0 %v523
  %1207 = vmatpush.msra.mxu0 %v519
  %1208 = vmatpush.msra.mxu0 %v515
  %1209 = vmatpush.msra.mxu0 %v511
  %1210 = vmatpush.msra.mxu0 %v507
  %1211 = vmatpush.msra.mxu0 %v503
  %1212 = vmatpush.msra.mxu0 %v499
  %1213 = vmatpush.msra.mxu0 %v495
  %1214 = vmatmul.f32.gmra.mxu0 %v1192
  %v1215 = vpop.f32.mrf.mxu0
  %v1216 = vadd.f32 0.0, %v1215
  %1217 = vdwg.mxu0
  %1218 = vmatpush.msra.mxu0 %v556
  %1219 = vmatpush.msra.mxu0 %v552
  %1220 = vmatpush.msra.mxu0 %v548
  %1221 = vmatpush.msra.mxu0 %v544
  %1222 = vmatpush.msra.mxu0 %v540
  %1223 = vmatpush.msra.mxu0 %v536
  %1224 = vmatpush.msra.mxu0 %v532
  %1225 = vmatpush.msra.mxu0 %v528
  %1226 = vmatpush.msra.mxu0 %v524
  %1227 = vmatpush.msra.mxu0 %v520
  %1228 = vmatpush.msra.mxu0 %v516
  %1229 = vmatpush.msra.mxu0 %v512
  %1230 = vmatpush.msra.mxu0 %v508
  %1231 = vmatpush.msra.mxu0 %v504
  %1232 = vmatpush.msra.mxu0 %v500
  %1233 = vmatpush.msra.mxu0 %v496
  %1234 = vmatmul.f32.gmra.mxu0 %v1192
  %v1235 = vpop.f32.mrf.mxu0
  %v1236 = vadd.f32 0.0, %v1235
  %1237 = vdwg.mxu0
  %1238 = vmatpush.msra.mxu0 %v557
  %1239 = vmatpush.msra.mxu0 %v553
  %1240 = vmatpush.msra.mxu0 %v549
  %1241 = vmatpush.msra.mxu0 %v545
  %1242 = vmatpush.msra.mxu0 %v541
  %1243 = vmatpush.msra.mxu0 %v537
  %1244 = vmatpush.msra.mxu0 %v533
  %1245 = vmatpush.msra.mxu0 %v529
  %1246 = vmatpush.msra.mxu0 %v525
  %1247 = vmatpush.msra.mxu0 %v521
  %1248 = vmatpush.msra.mxu0 %v517
  %1249 = vmatpush.msra.mxu0 %v513
  %1250 = vmatpush.msra.mxu0 %v509
  %1251 = vmatpush.msra.mxu0 %v505
  %1252 = vmatpush.msra.mxu0 %v501
  %1253 = vmatpush.msra.mxu0 %v497
  %1254 = vmatmul.f32.gmra.mxu0 %v1192
  %v1255 = vpop.f32.mrf.mxu0
  %v1256 = vadd.f32 0.0, %v1255
  %1257 = vdwg.mxu0
  %1258 = vmatpush.msra.mxu0 %v558
  %1259 = vmatpush.msra.mxu0 %v554
  %1260 = vmatpush.msra.mxu0 %v550
  %1261 = vmatpush.msra.mxu0 %v546
  %1262 = vmatpush.msra.mxu0 %v542
  %1263 = vmatpush.msra.mxu0 %v538
  %1264 = vmatpush.msra.mxu0 %v534
  %1265 = vmatpush.msra.mxu0 %v530
  %1266 = vmatpush.msra.mxu0 %v526
  %1267 = vmatpush.msra.mxu0 %v522
  %1268 = vmatpush.msra.mxu0 %v518
  %1269 = vmatpush.msra.mxu0 %v514
  %1270 = vmatpush.msra.mxu0 %v510
  %1271 = vmatpush.msra.mxu0 %v506
  %1272 = vmatpush.msra.mxu0 %v502
  %1273 = vmatpush.msra.mxu0 %v498
  %1274 = vmatmul.f32.gmra.mxu0 %v1192
  %v1275 = vpop.f32.mrf.mxu0
  %v1276 = vadd.f32 0.0, %v1275
  %1277 = vdwg.mxu0
  %v1278 = vadd.f32 %v1194, %v1216
  %v1279 = vadd.f32 %v1195, %v1236
  %v1280 = vadd.f32 %v1196, %v1256
  %v1281 = vadd.f32 %v1197, %v1276
  %v1282 = vmul.f32 %v1278, 0.5
  %v1283 = vtanh.pop %v1282
  %v1284 = vmul.f32 %v1283, 0.5
  %v1285 = vadd.f32 %v1284, 0.5
  %v1286 = vmul.f32 %v1279, 0.5
  %v1287 = vtanh.pop %v1286
  %v1288 = vmul.f32 %v1287, 0.5
  %v1289 = vadd.f32 %v1288, 0.5
  %v1290 = vtanh.pop %v1280
  %v1291 = vmul.f32 %v1281, 0.5
  %v1292 = vtanh.pop %v1291
  %v1293 = vmul.f32 %v1292, 0.5
  %v1294 = vadd.f32 %v1293, 0.5
  %v1295 = vmul.f32 %v1289, %v1193
  %v1296 = vmul.f32 %v1285, %v1290
  %v1297 = vadd.f32 %v1295, %v1296
  %v1298 = vtanh.pop %v1297
  %v1299 = vmul.f32 %v1294, %v1298
  %vm1300 = vcmp.gt.s32.totalorder %v626, 5
  %v1301 = vsel %vm1300, %v1299, %v1192
  %1302 = vst [vmem:[#allocation2] sm:$0xff] %v1301
  %v1303 = vsel %vm1300, %v1297, %v1193
  %1304 = vst [vmem:[#allocation3] sm:$0xff] %v1303
  %v1305 = vld [vmem:[#allocation2] sm:$0xff]
  %v1306 = vld [vmem:[#allocation3] sm:$0xff]
  %v1307 = vld [vmem:[#allocation4 + $0xc0] sm:$0xff]
  %v1308 = vld [vmem:[#allocation4 + $0xc8] sm:$0xff]
  %v1309 = vld [vmem:[#allocation4 + $0xd0] sm:$0xff]
  %v1310 = vld [vmem:[#allocation4 + $0xd8] sm:$0xff]
  %1311 = vmatpush.msra.mxu0 %v555
  %1312 = vmatpush.msra.mxu0 %v551
  %1313 = vmatpush.msra.mxu0 %v547
  %1314 = vmatpush.msra.mxu0 %v543
  %1315 = vmatpush.msra.mxu0 %v539
  %1316 = vmatpush.msra.mxu0 %v535
  %1317 = vmatpush.msra.mxu0 %v531
  %1318 = vmatpush.msra.mxu0 %v527
  %1319 = vmatpush.msra.mxu0 %v523
  %1320 = vmatpush.msra.mxu0 %v519
  %1321 = vmatpush.msra.mxu0 %v515
  %1322 = vmatpush.msra.mxu0 %v511
  %1323 = vmatpush.msra.mxu0 %v507
  %1324 = vmatpush.msra.mxu0 %v503
  %1325 = vmatpush.msra.mxu0 %v499
  %1326 = vmatpush.msra.mxu0 %v495
  %1327 = vmatmul.f32.gmra.mxu0 %v1305
  %v1328 = vpop.f32.mrf.mxu0
  %v1329 = vadd.f32 0.0, %v1328
  %1330 = vdwg.mxu0
  %1331 = vmatpush.msra.mxu0 %v556
  %1332 = vmatpush.msra.mxu0 %v552
  %1333 = vmatpush.msra.mxu0 %v548
  %1334 = vmatpush.msra.mxu0 %v544
  %1335 = vmatpush.msra.mxu0 %v540
  %1336 = vmatpush.msra.mxu0 %v536
  %1337 = vmatpush.msra.mxu0 %v532
  %1338 = vmatpush.msra.mxu0 %v528
  %1339 = vmatpush.msra.mxu0 %v524
  %1340 = vmatpush.msra.mxu0 %v520
  %1341 = vmatpush.msra.mxu0 %v516
  %1342 = vmatpush.msra.mxu0 %v512
  %1343 = vmatpush.msra.mxu0 %v508
  %1344 = vmatpush.msra.mxu0 %v504
  %1345 = vmatpush.msra.mxu0 %v500
  %1346 = vmatpush.msra.mxu0 %v496
  %1347 = vmatmul.f32.gmra.mxu0 %v1305
  %v1348 = vpop.f32.mrf.mxu0
  %v1349 = vadd.f32 0.0, %v1348
  %1350 = vdwg.mxu0
  %1351 = vmatpush.msra.mxu0 %v557
  %1352 = vmatpush.msra.mxu0 %v553
  %1353 = vmatpush.msra.mxu0 %v549
  %1354 = vmatpush.msra.mxu0 %v545
  %1355 = vmatpush.msra.mxu0 %v541
  %1356 = vmatpush.msra.mxu0 %v537
  %1357 = vmatpush.msra.mxu0 %v533
  %1358 = vmatpush.msra.mxu0 %v529
  %1359 = vmatpush.msra.mxu0 %v525
  %1360 = vmatpush.msra.mxu0 %v521
  %1361 = vmatpush.msra.mxu0 %v517
  %1362 = vmatpush.msra.mxu0 %v513
  %1363 = vmatpush.msra.mxu0 %v509
  %1364 = vmatpush.msra.mxu0 %v505
  %1365 = vmatpush.msra.mxu0 %v501
  %1366 = vmatpush.msra.mxu0 %v497
  %1367 = vmatmul.f32.gmra.mxu0 %v1305
  %v1368 = vpop.f32.mrf.mxu0
  %v1369 = vadd.f32 0.0, %v1368
  %1370 = vdwg.mxu0
  %1371 = vmatpush.msra.mxu0 %v558
  %1372 = vmatpush.msra.mxu0 %v554
  %1373 = vmatpush.msra.mxu0 %v550
  %1374 = vmatpush.msra.mxu0 %v546
  %1375 = vmatpush.msra.mxu0 %v542
  %1376 = vmatpush.msra.mxu0 %v538
  %1377 = vmatpush.msra.mxu0 %v534
  %1378 = vmatpush.msra.mxu0 %v530
  %1379 = vmatpush.msra.mxu0 %v526
  %1380 = vmatpush.msra.mxu0 %v522
  %1381 = vmatpush.msra.mxu0 %v518
  %1382 = vmatpush.msra.mxu0 %v514
  %1383 = vmatpush.msra.mxu0 %v510
  %1384 = vmatpush.msra.mxu0 %v506
  %1385 = vmatpush.msra.mxu0 %v502
  %1386 = vmatpush.msra.mxu0 %v498
  %1387 = vmatmul.f32.gmra.mxu0 %v1305
  %v1388 = vpop.f32.mrf.mxu0
  %v1389 = vadd.f32 0.0, %v1388
  %1390 = vdwg.mxu0
  %v1391 = vadd.f32 %v1307, %v1329
  %v1392 = vadd.f32 %v1308, %v1349
  %v1393 = vadd.f32 %v1309, %v1369
  %v1394 = vadd.f32 %v1310, %v1389
  %v1395 = vmul.f32 %v1391, 0.5
  %v1396 = vtanh.pop %v1395
  %v1397 = vmul.f32 %v1396, 0.5
  %v1398 = vadd.f32 %v1397, 0.5
  %v1399 = vmul.f32 %v1392, 0.5
  %v1400 = vtanh.pop %v1399
  %v1401 = vmul.f32 %v1400, 0.5
  %v1402 = vadd.f32 %v1401, 0.5
  %v1403 = vtanh.pop %v1393
  %v1404 = vmul.f32 %v1394, 0.5
  %v1405 = vtanh.pop %v1404
  %v1406 = vmul.f32 %v1405, 0.5
  %v1407 = vadd.f32 %v1406, 0.5
  %v1408 = vmul.f32 %v1402, %v1306
  %v1409 = vmul.f32 %v1398, %v1403
  %v1410 = vadd.f32 %v1408, %v1409
  %v1411 = vtanh.pop %v1410
  %v1412 = vmul.f32 %v1407, %v1411
  %vm1413 = vcmp.gt.s32.totalorder %v626, 6
  %v1414 = vsel %vm1413, %v1412, %v1305
  %1415 = vst [vmem:[#allocation2] sm:$0xff] %v1414
  %v1416 = vsel %vm1413, %v1410, %v1306
  %1417 = vst [vmem:[#allocation3] sm:$0xff] %v1416
  %v1418 = vld [vmem:[#allocation2] sm:$0xff]
  %v1419 = vld [vmem:[#allocation3] sm:$0xff]
  %v1420 = vld [vmem:[#allocation4 + $0xe0] sm:$0xff]
  %v1421 = vld [vmem:[#allocation4 + $0xe8] sm:$0xff]
  %v1422 = vld [vmem:[#allocation4 + $0xf0] sm:$0xff]
  %v1423 = vld [vmem:[#allocation4 + $0xf8] sm:$0xff]
  %1424 = vmatpush.msra.mxu0 %v555
  %1425 = vmatpush.msra.mxu0 %v551
  %1426 = vmatpush.msra.mxu0 %v547
  %1427 = vmatpush.msra.mxu0 %v543
  %1428 = vmatpush.msra.mxu0 %v539
  %1429 = vmatpush.msra.mxu0 %v535
  %1430 = vmatpush.msra.mxu0 %v531
  %1431 = vmatpush.msra.mxu0 %v527
  %1432 = vmatpush.msra.mxu0 %v523
  %1433 = vmatpush.msra.mxu0 %v519
  %1434 = vmatpush.msra.mxu0 %v515
  %1435 = vmatpush.msra.mxu0 %v511
  %1436 = vmatpush.msra.mxu0 %v507
  %1437 = vmatpush.msra.mxu0 %v503
  %1438 = vmatpush.msra.mxu0 %v499
  %1439 = vmatpush.msra.mxu0 %v495
  %1440 = vmatmul.f32.gmra.mxu0 %v1418
  %v1441 = vpop.f32.mrf.mxu0
  %v1442 = vadd.f32 0.0, %v1441
  %1443 = vdwg.mxu0
  %1444 = vmatpush.msra.mxu0 %v556
  %1445 = vmatpush.msra.mxu0 %v552
  %1446 = vmatpush.msra.mxu0 %v548
  %1447 = vmatpush.msra.mxu0 %v544
  %1448 = vmatpush.msra.mxu0 %v540
  %1449 = vmatpush.msra.mxu0 %v536
  %1450 = vmatpush.msra.mxu0 %v532
  %1451 = vmatpush.msra.mxu0 %v528
  %1452 = vmatpush.msra.mxu0 %v524
  %1453 = vmatpush.msra.mxu0 %v520
  %1454 = vmatpush.msra.mxu0 %v516
  %1455 = vmatpush.msra.mxu0 %v512
  %1456 = vmatpush.msra.mxu0 %v508
  %1457 = vmatpush.msra.mxu0 %v504
  %1458 = vmatpush.msra.mxu0 %v500
  %1459 = vmatpush.msra.mxu0 %v496
  %1460 = vmatmul.f32.gmra.mxu0 %v1418
  %v1461 = vpop.f32.mrf.mxu0
  %v1462 = vadd.f32 0.0, %v1461
  %1463 = vdwg.mxu0
  %1464 = vmatpush.msra.mxu0 %v557
  %1465 = vmatpush.msra.mxu0 %v553
  %1466 = vmatpush.msra.mxu0 %v549
  %1467 = vmatpush.msra.mxu0 %v545
  %1468 = vmatpush.msra.mxu0 %v541
  %1469 = vmatpush.msra.mxu0 %v537
  %1470 = vmatpush.msra.mxu0 %v533
  %1471 = vmatpush.msra.mxu0 %v529
  %1472 = vmatpush.msra.mxu0 %v525
  %1473 = vmatpush.msra.mxu0 %v521
  %1474 = vmatpush.msra.mxu0 %v517
  %1475 = vmatpush.msra.mxu0 %v513
  %1476 = vmatpush.msra.mxu0 %v509
  %1477 = vmatpush.msra.mxu0 %v505
  %1478 = vmatpush.msra.mxu0 %v501
  %1479 = vmatpush.msra.mxu0 %v497
  %1480 = vmatmul.f32.gmra.mxu0 %v1418
  %v1481 = vpop.f32.mrf.mxu0
  %v1482 = vadd.f32 0.0, %v1481
  %1483 = vdwg.mxu0
  %1484 = vmatpush.msra.mxu0 %v558
  %1485 = vmatpush.msra.mxu0 %v554
  %1486 = vmatpush.msra.mxu0 %v550
  %1487 = vmatpush.msra.mxu0 %v546
  %1488 = vmatpush.msra.mxu0 %v542
  %1489 = vmatpush.msra.mxu0 %v538
  %1490 = vmatpush.msra.mxu0 %v534
  %1491 = vmatpush.msra.mxu0 %v530
  %1492 = vmatpush.msra.mxu0 %v526
  %1493 = vmatpush.msra.mxu0 %v522
  %1494 = vmatpush.msra.mxu0 %v518
  %1495 = vmatpush.msra.mxu0 %v514
  %1496 = vmatpush.msra.mxu0 %v510
  %1497 = vmatpush.msra.mxu0 %v506
  %1498 = vmatpush.msra.mxu0 %v502
  %1499 = vmatpush.msra.mxu0 %v498
  %1500 = vmatmul.f32.gmra.mxu0 %v1418
  %v1501 = vpop.f32.mrf.mxu0
  %v1502 = vadd.f32 0.0, %v1501
  %1503 = vdwg.mxu0
  %v1504 = vadd.f32 %v1420, %v1442
  %v1505 = vadd.f32 %v1421, %v1462
  %v1506 = vadd.f32 %v1422, %v1482
  %v1507 = vadd.f32 %v1423, %v1502
  %v1508 = vmul.f32 %v1504, 0.5
  %v1509 = vtanh.pop %v1508
  %v1510 = vmul.f32 %v1509, 0.5
  %v1511 = vadd.f32 %v1510, 0.5
  %v1512 = vmul.f32 %v1505, 0.5
  %v1513 = vtanh.pop %v1512
  %v1514 = vmul.f32 %v1513, 0.5
  %v1515 = vadd.f32 %v1514, 0.5
  %v1516 = vtanh.pop %v1506
  %v1517 = vmul.f32 %v1507, 0.5
  %v1518 = vtanh.pop %v1517
  %v1519 = vmul.f32 %v1518, 0.5
  %v1520 = vadd.f32 %v1519, 0.5
  %v1521 = vmul.f32 %v1515, %v1419
  %v1522 = vmul.f32 %v1511, %v1516
  %v1523 = vadd.f32 %v1521, %v1522
  %v1524 = vtanh.pop %v1523
  %v1525 = vmul.f32 %v1520, %v1524
  %vm1526 = vcmp.gt.s32.totalorder %v626, 7
  %v1527 = vsel %vm1526, %v1525, %v1418
  %1528 = vst [vmem:[#allocation2] sm:$0xff] %v1527
  %v1529 = vsel %vm1526, %v1523, %v1419
  %1530 = vst [vmem:[#allocation3] sm:$0xff] %v1529
  %v1531 = vld [vmem:[%s8] sm:$0xf]
  %v1533 = vperm.slane %v1531, 0
  %v1534 = vperm.slane %v1531, 1
  %v1535 = vperm.slane %v1531, 2
  %v1536 = vperm.slane %v1531, 3
  %v1541 = vld [vmem:[#allocation2] sm:$0xff]
  %v1542 = vld [vmem:[#allocation3] sm:$0xff]
  %1543 = vmatpush.msra.mxu0 %v619
  %1544 = vmatpush.msra.mxu0 %v615
  %1545 = vmatpush.msra.mxu0 %v611
  %1546 = vmatpush.msra.mxu0 %v607
  %1547 = vmatpush.msra.mxu0 %v603
  %1548 = vmatpush.msra.mxu0 %v599
  %1549 = vmatpush.msra.mxu0 %v595
  %1550 = vmatpush.msra.mxu0 %v591
  %1551 = vmatpush.msra.mxu0 %v587
  %1552 = vmatpush.msra.mxu0 %v583
  %1553 = vmatpush.msra.mxu0 %v579
  %1554 = vmatpush.msra.mxu0 %v575
  %1555 = vmatpush.msra.mxu0 %v571
  %1556 = vmatpush.msra.mxu0 %v567
  %1557 = vmatpush.msra.mxu0 %v563
  %1558 = vmatpush.msra.mxu0 %v559
  %1559 = vmatmul.f32.gmra.mxu0 %v1541
  %v1560 = vpop.f32.mrf.mxu0
  %v1561 = vadd.f32 0.0, %v1560
  %1562 = vdwg.mxu0
  %1563 = vmatpush.msra.mxu0 %v620
  %1564 = vmatpush.msra.mxu0 %v616
  %1565 = vmatpush.msra.mxu0 %v612
  %1566 = vmatpush.msra.mxu0 %v608
  %1567 = vmatpush.msra.mxu0 %v604
  %1568 = vmatpush.msra.mxu0 %v600
  %1569 = vmatpush.msra.mxu0 %v596
  %1570 = vmatpush.msra.mxu0 %v592
  %1571 = vmatpush.msra.mxu0 %v588
  %1572 = vmatpush.msra.mxu0 %v584
  %1573 = vmatpush.msra.mxu0 %v580
  %1574 = vmatpush.msra.mxu0 %v576
  %1575 = vmatpush.msra.mxu0 %v572
  %1576 = vmatpush.msra.mxu0 %v568
  %1577 = vmatpush.msra.mxu0 %v564
  %1578 = vmatpush.msra.mxu0 %v560
  %1579 = vmatmul.f32.gmra.mxu0 %v1541
  %v1580 = vpop.f32.mrf.mxu0
  %v1581 = vadd.f32 0.0, %v1580
  %1582 = vdwg.mxu0
  %1583 = vmatpush.msra.mxu0 %v621
  %1584 = vmatpush.msra.mxu0 %v617
  %1585 = vmatpush.msra.mxu0 %v613
  %1586 = vmatpush.msra.mxu0 %v609
  %1587 = vmatpush.msra.mxu0 %v605
  %1588 = vmatpush.msra.mxu0 %v601
  %1589 = vmatpush.msra.mxu0 %v597
  %1590 = vmatpush.msra.mxu0 %v593
  %1591 = vmatpush.msra.mxu0 %v589
  %1592 = vmatpush.msra.mxu0 %v585
  %1593 = vmatpush.msra.mxu0 %v581
  %1594 = vmatpush.msra.mxu0 %v577
  %1595 = vmatpush.msra.mxu0 %v573
  %1596 = vmatpush.msra.mxu0 %v569
  %1597 = vmatpush.msra.mxu0 %v565
  %1598 = vmatpush.msra.mxu0 %v561
  %1599 = vmatmul.f32.gmra.mxu0 %v1541
  %v1600 = vpop.f32.mrf.mxu0
  %v1601 = vadd.f32 0.0, %v1600
  %1602 = vdwg.mxu0
  %1603 = vmatpush.msra.mxu0 %v622
  %1604 = vmatpush.msra.mxu0 %v618
  %1605 = vmatpush.msra.mxu0 %v614
  %1606 = vmatpush.msra.mxu0 %v610
  %1607 = vmatpush.msra.mxu0 %v606
  %1608 = vmatpush.msra.mxu0 %v602
  %1609 = vmatpush.msra.mxu0 %v598
  %1610 = vmatpush.msra.mxu0 %v594
  %1611 = vmatpush.msra.mxu0 %v590
  %1612 = vmatpush.msra.mxu0 %v586
  %1613 = vmatpush.msra.mxu0 %v582
  %1614 = vmatpush.msra.mxu0 %v578
  %1615 = vmatpush.msra.mxu0 %v574
  %1616 = vmatpush.msra.mxu0 %v570
  %1617 = vmatpush.msra.mxu0 %v566
  %1618 = vmatpush.msra.mxu0 %v562
  %1619 = vmatmul.f32.gmra.mxu0 %v1541
  %v1620 = vpop.f32.mrf.mxu0
  %v1621 = vadd.f32 0.0, %v1620
  %1622 = vdwg.mxu0
  %v1623 = vadd.f32 %v1533, %v1561
  %v1624 = vadd.f32 %v1534, %v1581
  %v1625 = vadd.f32 %v1535, %v1601
  %v1626 = vadd.f32 %v1536, %v1621
  %v1627 = vmul.f32 %v1623, 0.5
  %v1628 = vtanh.pop %v1627
  %v1629 = vmul.f32 %v1628, 0.5
  %v1630 = vadd.f32 %v1629, 0.5
  %v1631 = vmul.f32 %v1624, 0.5
  %v1632 = vtanh.pop %v1631
  %v1633 = vmul.f32 %v1632, 0.5
  %v1634 = vadd.f32 %v1633, 0.5
  %v1635 = vtanh.pop %v1625
  %v1636 = vmul.f32 %v1626, 0.5
  %v1637 = vtanh.pop %v1636
  %v1638 = vmul.f32 %v1637, 0.5
  %v1639 = vadd.f32 %v1638, 0.5
  %v1640 = vmul.f32 %v1634, %v1542
  %v1641 = vmul.f32 %v1630, %v1635
  %v1642 = vadd.f32 %v1640, %v1641
  %v1643 = vtanh.pop %v1642
  %v1644 = vmul.f32 %v1639, %v1643
  %1645 = vst [vmem:[#allocation2] sm:$0xff] %v1644
  %1646 = vst [vmem:[#allocation3] sm:$0xff] %v1642
  %1647 = vst [vmem:[#allocation6] sm:$0xff] %v1644
  %v1648 = vld [vmem:[#allocation5] sm:$0xff]
  %v1649 = vld [vmem:[#allocation5 + $0x8] sm:$0xff]
  %v1650 = vld [vmem:[#allocation5 + $0x10] sm:$0xff]
  %v1651 = vld [vmem:[#allocation5 + $0x18] sm:$0xff]
  %v1652 = vld [vmem:[#allocation2] sm:$0xff]
  %v1653 = vld [vmem:[#allocation3] sm:$0xff]
  %1654 = vmatpush.msra.mxu0 %v619
  %1655 = vmatpush.msra.mxu0 %v615
  %1656 = vmatpush.msra.mxu0 %v611
  %1657 = vmatpush.msra.mxu0 %v607
  %1658 = vmatpush.msra.mxu0 %v603
  %1659 = vmatpush.msra.mxu0 %v599
  %1660 = vmatpush.msra.mxu0 %v595
  %1661 = vmatpush.msra.mxu0 %v591
  %1662 = vmatpush.msra.mxu0 %v587
  %1663 = vmatpush.msra.mxu0 %v583
  %1664 = vmatpush.msra.mxu0 %v579
  %1665 = vmatpush.msra.mxu0 %v575
  %1666 = vmatpush.msra.mxu0 %v571
  %1667 = vmatpush.msra.mxu0 %v567
  %1668 = vmatpush.msra.mxu0 %v563
  %1669 = vmatpush.msra.mxu0 %v559
  %1670 = vmatmul.f32.gmra.mxu0 %v1652
  %v1671 = vpop.f32.mrf.mxu0
  %v1672 = vadd.f32 0.0, %v1671
  %1673 = vdwg.mxu0
  %1674 = vmatpush.msra.mxu0 %v620
  %1675 = vmatpush.msra.mxu0 %v616
  %1676 = vmatpush.msra.mxu0 %v612
  %1677 = vmatpush.msra.mxu0 %v608
  %1678 = vmatpush.msra.mxu0 %v604
  %1679 = vmatpush.msra.mxu0 %v600
  %1680 = vmatpush.msra.mxu0 %v596
  %1681 = vmatpush.msra.mxu0 %v592
  %1682 = vmatpush.msra.mxu0 %v588
  %1683 = vmatpush.msra.mxu0 %v584
  %1684 = vmatpush.msra.mxu0 %v580
  %1685 = vmatpush.msra.mxu0 %v576
  %1686 = vmatpush.msra.mxu0 %v572
  %1687 = vmatpush.msra.mxu0 %v568
  %1688 = vmatpush.msra.mxu0 %v564
  %1689 = vmatpush.msra.mxu0 %v560
  %1690 = vmatmul.f32.gmra.mxu0 %v1652
  %v1691 = vpop.f32.mrf.mxu0
  %v1692 = vadd.f32 0.0, %v1691
  %1693 = vdwg.mxu0
  %1694 = vmatpush.msra.mxu0 %v621
  %1695 = vmatpush.msra.mxu0 %v617
  %1696 = vmatpush.msra.mxu0 %v613
  %1697 = vmatpush.msra.mxu0 %v609
  %1698 = vmatpush.msra.mxu0 %v605
  %1699 = vmatpush.msra.mxu0 %v601
  %1700 = vmatpush.msra.mxu0 %v597
  %1701 = vmatpush.msra.mxu0 %v593
  %1702 = vmatpush.msra.mxu0 %v589
  %1703 = vmatpush.msra.mxu0 %v585
  %1704 = vmatpush.msra.mxu0 %v581
  %1705 = vmatpush.msra.mxu0 %v577
  %1706 = vmatpush.msra.mxu0 %v573
  %1707 = vmatpush.msra.mxu0 %v569
  %1708 = vmatpush.msra.mxu0 %v565
  %1709 = vmatpush.msra.mxu0 %v561
  %1710 = vmatmul.f32.gmra.mxu0 %v1652
  %v1711 = vpop.f32.mrf.mxu0
  %v1712 = vadd.f32 0.0, %v1711
  %1713 = vdwg.mxu0
  %1714 = vmatpush.msra.mxu0 %v622
  %1715 = vmatpush.msra.mxu0 %v618
  %1716 = vmatpush.msra.mxu0 %v614
  %1717 = vmatpush.msra.mxu0 %v610
  %1718 = vmatpush.msra.mxu0 %v606
  %1719 = vmatpush.msra.mxu0 %v602
  %1720 = vmatpush.msra.mxu0 %v598
  %1721 = vmatpush.msra.mxu0 %v594
  %1722 = vmatpush.msra.mxu0 %v590
  %1723 = vmatpush.msra.mxu0 %v586
  %1724 = vmatpush.msra.mxu0 %v582
  %1725 = vmatpush.msra.mxu0 %v578
  %1726 = vmatpush.msra.mxu0 %v574
  %1727 = vmatpush.msra.mxu0 %v570
  %1728 = vmatpush.msra.mxu0 %v566
  %1729 = vmatpush.msra.mxu0 %v562
  %1730 = vmatmul.f32.gmra.mxu0 %v1652
  %v1731 = vpop.f32.mrf.mxu0
  %v1732 = vadd.f32 0.0, %v1731
  %1733 = vdwg.mxu0
  %v1734 = vadd.f32 %v1648, %v1672
  %v1735 = vadd.f32 %v1649, %v1692
  %v1736 = vadd.f32 %v1650, %v1712
  %v1737 = vadd.f32 %v1651, %v1732
  %v1738 = vmul.f32 %v1734, 0.5
  %v1739 = vtanh.pop %v1738
  %v1740 = vmul.f32 %v1739, 0.5
  %v1741 = vadd.f32 %v1740, 0.5
  %v1742 = vmul.f32 %v1735, 0.5
  %v1743 = vtanh.pop %v1742
  %v1744 = vmul.f32 %v1743, 0.5
  %v1745 = vadd.f32 %v1744, 0.5
  %v1746 = vtanh.pop %v1736
  %v1747 = vmul.f32 %v1737, 0.5
  %v1748 = vtanh.pop %v1747
  %v1749 = vmul.f32 %v1748, 0.5
  %v1750 = vadd.f32 %v1749, 0.5
  %v1751 = vmul.f32 %v1745, %v1653
  %v1752 = vmul.f32 %v1741, %v1746
  %v1753 = vadd.f32 %v1751, %v1752
  %v1754 = vtanh.pop %v1753
  %v1755 = vmul.f32 %v1750, %v1754
  %1756 = vst [vmem:[#allocation2] sm:$0xff] %v1755
  %1757 = vst [vmem:[#allocation3] sm:$0xff] %v1753
  %1758 = vst [vmem:[#allocation6 + $0x8] sm:$0xff] %v1755
  %v1759 = vld [vmem:[#allocation5 + $0x20] sm:$0xff]
  %v1760 = vld [vmem:[#allocation5 + $0x28] sm:$0xff]
  %v1761 = vld [vmem:[#allocation5 + $0x30] sm:$0xff]
  %v1762 = vld [vmem:[#allocation5 + $0x38] sm:$0xff]
  %v1763 = vld [vmem:[#allocation2] sm:$0xff]
  %v1764 = vld [vmem:[#allocation3] sm:$0xff]
  %1765 = vmatpush.msra.mxu0 %v619
  %1766 = vmatpush.msra.mxu0 %v615
  %1767 = vmatpush.msra.mxu0 %v611
  %1768 = vmatpush.msra.mxu0 %v607
  %1769 = vmatpush.msra.mxu0 %v603
  %1770 = vmatpush.msra.mxu0 %v599
  %1771 = vmatpush.msra.mxu0 %v595
  %1772 = vmatpush.msra.mxu0 %v591
  %1773 = vmatpush.msra.mxu0 %v587
  %1774 = vmatpush.msra.mxu0 %v583
  %1775 = vmatpush.msra.mxu0 %v579
  %1776 = vmatpush.msra.mxu0 %v575
  %1777 = vmatpush.msra.mxu0 %v571
  %1778 = vmatpush.msra.mxu0 %v567
  %1779 = vmatpush.msra.mxu0 %v563
  %1780 = vmatpush.msra.mxu0 %v559
  %1781 = vmatmul.f32.gmra.mxu0 %v1763
  %v1782 = vpop.f32.mrf.mxu0
  %v1783 = vadd.f32 0.0, %v1782
  %1784 = vdwg.mxu0
  %1785 = vmatpush.msra.mxu0 %v620
  %1786 = vmatpush.msra.mxu0 %v616
  %1787 = vmatpush.msra.mxu0 %v612
  %1788 = vmatpush.msra.mxu0 %v608
  %1789 = vmatpush.msra.mxu0 %v604
  %1790 = vmatpush.msra.mxu0 %v600
  %1791 = vmatpush.msra.mxu0 %v596
  %1792 = vmatpush.msra.mxu0 %v592
  %1793 = vmatpush.msra.mxu0 %v588
  %1794 = vmatpush.msra.mxu0 %v584
  %1795 = vmatpush.msra.mxu0 %v580
  %1796 = vmatpush.msra.mxu0 %v576
  %1797 = vmatpush.msra.mxu0 %v572
  %1798 = vmatpush.msra.mxu0 %v568
  %1799 = vmatpush.msra.mxu0 %v564
  %1800 = vmatpush.msra.mxu0 %v560
  %1801 = vmatmul.f32.gmra.mxu0 %v1763
  %v1802 = vpop.f32.mrf.mxu0
  %v1803 = vadd.f32 0.0, %v1802
  %1804 = vdwg.mxu0
  %1805 = vmatpush.msra.mxu0 %v621
  %1806 = vmatpush.msra.mxu0 %v617
  %1807 = vmatpush.msra.mxu0 %v613
  %1808 = vmatpush.msra.mxu0 %v609
  %1809 = vmatpush.msra.mxu0 %v605
  %1810 = vmatpush.msra.mxu0 %v601
  %1811 = vmatpush.msra.mxu0 %v597
  %1812 = vmatpush.msra.mxu0 %v593
  %1813 = vmatpush.msra.mxu0 %v589
  %1814 = vmatpush.msra.mxu0 %v585
  %1815 = vmatpush.msra.mxu0 %v581
  %1816 = vmatpush.msra.mxu0 %v577
  %1817 = vmatpush.msra.mxu0 %v573
  %1818 = vmatpush.msra.mxu0 %v569
  %1819 = vmatpush.msra.mxu0 %v565
  %1820 = vmatpush.msra.mxu0 %v561
  %1821 = vmatmul.f32.gmra.mxu0 %v1763
  %v1822 = vpop.f32.mrf.mxu0
  %v1823 = vadd.f32 0.0, %v1822
  %1824 = vdwg.mxu0
  %1825 = vmatpush.msra.mxu0 %v622
  %1826 = vmatpush.msra.mxu0 %v618
  %1827 = vmatpush.msra.mxu0 %v614
  %1828 = vmatpush.msra.mxu0 %v610
  %1829 = vmatpush.msra.mxu0 %v606
  %1830 = vmatpush.msra.mxu0 %v602
  %1831 = vmatpush.msra.mxu0 %v598
  %1832 = vmatpush.msra.mxu0 %v594
  %1833 = vmatpush.msra.mxu0 %v590
  %1834 = vmatpush.msra.mxu0 %v586
  %1835 = vmatpush.msra.mxu0 %v582
  %1836 = vmatpush.msra.mxu0 %v578
  %1837 = vmatpush.msra.mxu0 %v574
  %1838 = vmatpush.msra.mxu0 %v570
  %1839 = vmatpush.msra.mxu0 %v566
  %1840 = vmatpush.msra.mxu0 %v562
  %1841 = vmatmul.f32.gmra.mxu0 %v1763
  %v1842 = vpop.f32.mrf.mxu0
  %v1843 = vadd.f32 0.0, %v1842
  %1844 = vdwg.mxu0
  %v1845 = vadd.f32 %v1759, %v1783
  %v1846 = vadd.f32 %v1760, %v1803
  %v1847 = vadd.f32 %v1761, %v1823
  %v1848 = vadd.f32 %v1762, %v1843
  %v1849 = vmul.f32 %v1845, 0.5
  %v1850 = vtanh.pop %v1849
  %v1851 = vmul.f32 %v1850, 0.5
  %v1852 = vadd.f32 %v1851, 0.5
  %v1853 = vmul.f32 %v1846, 0.5
  %v1854 = vtanh.pop %v1853
  %v1855 = vmul.f32 %v1854, 0.5
  %v1856 = vadd.f32 %v1855, 0.5
  %v1857 = vtanh.pop %v1847
  %v1858 = vmul.f32 %v1848, 0.5
  %v1859 = vtanh.pop %v1858
  %v1860 = vmul.f32 %v1859, 0.5
  %v1861 = vadd.f32 %v1860, 0.5
  %v1862 = vmul.f32 %v1856, %v1764
  %v1863 = vmul.f32 %v1852, %v1857
  %v1864 = vadd.f32 %v1862, %v1863
  %v1865 = vtanh.pop %v1864
  %v1866 = vmul.f32 %v1861, %v1865
  %1867 = vst [vmem:[#allocation2] sm:$0xff] %v1866
  %1868 = vst [vmem:[#allocation3] sm:$0xff] %v1864
  %1869 = vst [vmem:[#allocation6 + $0x10] sm:$0xff] %v1866
  %v1870 = vld [vmem:[#allocation5 + $0x40] sm:$0xff]
  %v1871 = vld [vmem:[#allocation5 + $0x48] sm:$0xff]
  %v1872 = vld [vmem:[#allocation5 + $0x50] sm:$0xff]
  %v1873 = vld [vmem:[#allocation5 + $0x58] sm:$0xff]
  %v1874 = vld [vmem:[#allocation2] sm:$0xff]
  %v1875 = vld [vmem:[#allocation3] sm:$0xff]
  %1876 = vmatpush.msra.mxu0 %v619
  %1877 = vmatpush.msra.mxu0 %v615
  %1878 = vmatpush.msra.mxu0 %v611
  %1879 = vmatpush.msra.mxu0 %v607
  %1880 = vmatpush.msra.mxu0 %v603
  %1881 = vmatpush.msra.mxu0 %v599
  %1882 = vmatpush.msra.mxu0 %v595
  %1883 = vmatpush.msra.mxu0 %v591
  %1884 = vmatpush.msra.mxu0 %v587
  %1885 = vmatpush.msra.mxu0 %v583
  %1886 = vmatpush.msra.mxu0 %v579
  %1887 = vmatpush.msra.mxu0 %v575
  %1888 = vmatpush.msra.mxu0 %v571
  %1889 = vmatpush.msra.mxu0 %v567
  %1890 = vmatpush.msra.mxu0 %v563
  %1891 = vmatpush.msra.mxu0 %v559
  %1892 = vmatmul.f32.gmra.mxu0 %v1874
  %v1893 = vpop.f32.mrf.mxu0
  %v1894 = vadd.f32 0.0, %v1893
  %1895 = vdwg.mxu0
  %1896 = vmatpush.msra.mxu0 %v620
  %1897 = vmatpush.msra.mxu0 %v616
  %1898 = vmatpush.msra.mxu0 %v612
  %1899 = vmatpush.msra.mxu0 %v608
  %1900 = vmatpush.msra.mxu0 %v604
  %1901 = vmatpush.msra.mxu0 %v600
  %1902 = vmatpush.msra.mxu0 %v596
  %1903 = vmatpush.msra.mxu0 %v592
  %1904 = vmatpush.msra.mxu0 %v588
  %1905 = vmatpush.msra.mxu0 %v584
  %1906 = vmatpush.msra.mxu0 %v580
  %1907 = vmatpush.msra.mxu0 %v576
  %1908 = vmatpush.msra.mxu0 %v572
  %1909 = vmatpush.msra.mxu0 %v568
  %1910 = vmatpush.msra.mxu0 %v564
  %1911 = vmatpush.msra.mxu0 %v560
  %1912 = vmatmul.f32.gmra.mxu0 %v1874
  %v1913 = vpop.f32.mrf.mxu0
  %v1914 = vadd.f32 0.0, %v1913
  %1915 = vdwg.mxu0
  %1916 = vmatpush.msra.mxu0 %v621
  %1917 = vmatpush.msra.mxu0 %v617
  %1918 = vmatpush.msra.mxu0 %v613
  %1919 = vmatpush.msra.mxu0 %v609
  %1920 = vmatpush.msra.mxu0 %v605
  %1921 = vmatpush.msra.mxu0 %v601
  %1922 = vmatpush.msra.mxu0 %v597
  %1923 = vmatpush.msra.mxu0 %v593
  %1924 = vmatpush.msra.mxu0 %v589
  %1925 = vmatpush.msra.mxu0 %v585
  %1926 = vmatpush.msra.mxu0 %v581
  %1927 = vmatpush.msra.mxu0 %v577
  %1928 = vmatpush.msra.mxu0 %v573
  %1929 = vmatpush.msra.mxu0 %v569
  %1930 = vmatpush.msra.mxu0 %v565
  %1931 = vmatpush.msra.mxu0 %v561
  %1932 = vmatmul.f32.gmra.mxu0 %v1874
  %v1933 = vpop.f32.mrf.mxu0
  %v1934 = vadd.f32 0.0, %v1933
  %1935 = vdwg.mxu0
  %1936 = vmatpush.msra.mxu0 %v622
  %1937 = vmatpush.msra.mxu0 %v618
  %1938 = vmatpush.msra.mxu0 %v614
  %1939 = vmatpush.msra.mxu0 %v610
  %1940 = vmatpush.msra.mxu0 %v606
  %1941 = vmatpush.msra.mxu0 %v602
  %1942 = vmatpush.msra.mxu0 %v598
  %1943 = vmatpush.msra.mxu0 %v594
  %1944 = vmatpush.msra.mxu0 %v590
  %1945 = vmatpush.msra.mxu0 %v586
  %1946 = vmatpush.msra.mxu0 %v582
  %1947 = vmatpush.msra.mxu0 %v578
  %1948 = vmatpush.msra.mxu0 %v574
  %1949 = vmatpush.msra.mxu0 %v570
  %1950 = vmatpush.msra.mxu0 %v566
  %1951 = vmatpush.msra.mxu0 %v562
  %1952 = vmatmul.f32.gmra.mxu0 %v1874
  %v1953 = vpop.f32.mrf.mxu0
  %v1954 = vadd.f32 0.0, %v1953
  %1955 = vdwg.mxu0
  %v1956 = vadd.f32 %v1870, %v1894
  %v1957 = vadd.f32 %v1871, %v1914
  %v1958 = vadd.f32 %v1872, %v1934
  %v1959 = vadd.f32 %v1873, %v1954
  %v1960 = vmul.f32 %v1956, 0.5
  %v1961 = vtanh.pop %v1960
  %v1962 = vmul.f32 %v1961, 0.5
  %v1963 = vadd.f32 %v1962, 0.5
  %v1964 = vmul.f32 %v1957, 0.5
  %v1965 = vtanh.pop %v1964
  %v1966 = vmul.f32 %v1965, 0.5
  %v1967 = vadd.f32 %v1966, 0.5
  %v1968 = vtanh.pop %v1958
  %v1969 = vmul.f32 %v1959, 0.5
  %v1970 = vtanh.pop %v1969
  %v1971 = vmul.f32 %v1970, 0.5
  %v1972 = vadd.f32 %v1971, 0.5
  %v1973 = vmul.f32 %v1967, %v1875
  %v1974 = vmul.f32 %v1963, %v1968
  %v1975 = vadd.f32 %v1973, %v1974
  %v1976 = vtanh.pop %v1975
  %v1977 = vmul.f32 %v1972, %v1976
  %1978 = vst [vmem:[#allocation2] sm:$0xff] %v1977
  %1979 = vst [vmem:[#allocation3] sm:$0xff] %v1975
  %1980 = vst [vmem:[#allocation6 + $0x18] sm:$0xff] %v1977
  %v1981 = vld [vmem:[#allocation5 + $0x60] sm:$0xff]
  %v1982 = vld [vmem:[#allocation5 + $0x68] sm:$0xff]
  %v1983 = vld [vmem:[#allocation5 + $0x70] sm:$0xff]
  %v1984 = vld [vmem:[#allocation5 + $0x78] sm:$0xff]
  %v1985 = vld [vmem:[#allocation2] sm:$0xff]
  %v1986 = vld [vmem:[#allocation3] sm:$0xff]
  %1987 = vmatpush.msra.mxu0 %v619
  %1988 = vmatpush.msra.mxu0 %v615
  %1989 = vmatpush.msra.mxu0 %v611
  %1990 = vmatpush.msra.mxu0 %v607
  %1991 = vmatpush.msra.mxu0 %v603
  %1992 = vmatpush.msra.mxu0 %v599
  %1993 = vmatpush.msra.mxu0 %v595
  %1994 = vmatpush.msra.mxu0 %v591
  %1995 = vmatpush.msra.mxu0 %v587
  %1996 = vmatpush.msra.mxu0 %v583
  %1997 = vmatpush.msra.mxu0 %v579
  %1998 = vmatpush.msra.mxu0 %v575
  %1999 = vmatpush.msra.mxu0 %v571
  %2000 = vmatpush.msra.mxu0 %v567
  %2001 = vmatpush.msra.mxu0 %v563
  %2002 = vmatpush.msra.mxu0 %v559
  %2003 = vmatmul.f32.gmra.mxu0 %v1985
  %v2004 = vpop.f32.mrf.mxu0
  %v2005 = vadd.f32 0.0, %v2004
  %2006 = vdwg.mxu0
  %2007 = vmatpush.msra.mxu0 %v620
  %2008 = vmatpush.msra.mxu0 %v616
  %2009 = vmatpush.msra.mxu0 %v612
  %2010 = vmatpush.msra.mxu0 %v608
  %2011 = vmatpush.msra.mxu0 %v604
  %2012 = vmatpush.msra.mxu0 %v600
  %2013 = vmatpush.msra.mxu0 %v596
  %2014 = vmatpush.msra.mxu0 %v592
  %2015 = vmatpush.msra.mxu0 %v588
  %2016 = vmatpush.msra.mxu0 %v584
  %2017 = vmatpush.msra.mxu0 %v580
  %2018 = vmatpush.msra.mxu0 %v576
  %2019 = vmatpush.msra.mxu0 %v572
  %2020 = vmatpush.msra.mxu0 %v568
  %2021 = vmatpush.msra.mxu0 %v564
  %2022 = vmatpush.msra.mxu0 %v560
  %2023 = vmatmul.f32.gmra.mxu0 %v1985
  %v2024 = vpop.f32.mrf.mxu0
  %v2025 = vadd.f32 0.0, %v2024
  %2026 = vdwg.mxu0
  %2027 = vmatpush.msra.mxu0 %v621
  %2028 = vmatpush.msra.mxu0 %v617
  %2029 = vmatpush.msra.mxu0 %v613
  %2030 = vmatpush.msra.mxu0 %v609
  %2031 = vmatpush.msra.mxu0 %v605
  %2032 = vmatpush.msra.mxu0 %v601
  %2033 = vmatpush.msra.mxu0 %v597
  %2034 = vmatpush.msra.mxu0 %v593
  %2035 = vmatpush.msra.mxu0 %v589
  %2036 = vmatpush.msra.mxu0 %v585
  %2037 = vmatpush.msra.mxu0 %v581
  %2038 = vmatpush.msra.mxu0 %v577
  %2039 = vmatpush.msra.mxu0 %v573
  %2040 = vmatpush.msra.mxu0 %v569
  %2041 = vmatpush.msra.mxu0 %v565
  %2042 = vmatpush.msra.mxu0 %v561
  %2043 = vmatmul.f32.gmra.mxu0 %v1985
  %v2044 = vpop.f32.mrf.mxu0
  %v2045 = vadd.f32 0.0, %v2044
  %2046 = vdwg.mxu0
  %2047 = vmatpush.msra.mxu0 %v622
  %2048 = vmatpush.msra.mxu0 %v618
  %2049 = vmatpush.msra.mxu0 %v614
  %2050 = vmatpush.msra.mxu0 %v610
  %2051 = vmatpush.msra.mxu0 %v606
  %2052 = vmatpush.msra.mxu0 %v602
  %2053 = vmatpush.msra.mxu0 %v598
  %2054 = vmatpush.msra.mxu0 %v594
  %2055 = vmatpush.msra.mxu0 %v590
  %2056 = vmatpush.msra.mxu0 %v586
  %2057 = vmatpush.msra.mxu0 %v582
  %2058 = vmatpush.msra.mxu0 %v578
  %2059 = vmatpush.msra.mxu0 %v574
  %2060 = vmatpush.msra.mxu0 %v570
  %2061 = vmatpush.msra.mxu0 %v566
  %2062 = vmatpush.msra.mxu0 %v562
  %2063 = vmatmul.f32.gmra.mxu0 %v1985
  %v2064 = vpop.f32.mrf.mxu0
  %v2065 = vadd.f32 0.0, %v2064
  %2066 = vdwg.mxu0
  %v2067 = vadd.f32 %v1981, %v2005
  %v2068 = vadd.f32 %v1982, %v2025
  %v2069 = vadd.f32 %v1983, %v2045
  %v2070 = vadd.f32 %v1984, %v2065
  %v2071 = vmul.f32 %v2067, 0.5
  %v2072 = vtanh.pop %v2071
  %v2073 = vmul.f32 %v2072, 0.5
  %v2074 = vadd.f32 %v2073, 0.5
  %v2075 = vmul.f32 %v2068, 0.5
  %v2076 = vtanh.pop %v2075
  %v2077 = vmul.f32 %v2076, 0.5
  %v2078 = vadd.f32 %v2077, 0.5
  %v2079 = vtanh.pop %v2069
  %v2080 = vmul.f32 %v2070, 0.5
  %v2081 = vtanh.pop %v2080
  %v2082 = vmul.f32 %v2081, 0.5
  %v2083 = vadd.f32 %v2082, 0.5
  %v2084 = vmul.f32 %v2078, %v1986
  %v2085 = vmul.f32 %v2074, %v2079
  %v2086 = vadd.f32 %v2084, %v2085
  %v2087 = vtanh.pop %v2086
  %v2088 = vmul.f32 %v2083, %v2087
  %2089 = vst [vmem:[#allocation2] sm:$0xff] %v2088
  %2090 = vst [vmem:[#allocation3] sm:$0xff] %v2086
  %2091 = vst [vmem:[#allocation6 + $0x20] sm:$0xff] %v2088
  %v2092 = vld [vmem:[#allocation5 + $0x80] sm:$0xff]
  %v2093 = vld [vmem:[#allocation5 + $0x88] sm:$0xff]
  %v2094 = vld [vmem:[#allocation5 + $0x90] sm:$0xff]
  %v2095 = vld [vmem:[#allocation5 + $0x98] sm:$0xff]
  %v2096 = vld [vmem:[#allocation2] sm:$0xff]
  %v2097 = vld [vmem:[#allocation3] sm:$0xff]
  %2098 = vmatpush.msra.mxu0 %v619
  %2099 = vmatpush.msra.mxu0 %v615
  %2100 = vmatpush.msra.mxu0 %v611
  %2101 = vmatpush.msra.mxu0 %v607
  %2102 = vmatpush.msra.mxu0 %v603
  %2103 = vmatpush.msra.mxu0 %v599
  %2104 = vmatpush.msra.mxu0 %v595
  %2105 = vmatpush.msra.mxu0 %v591
  %2106 = vmatpush.msra.mxu0 %v587
  %2107 = vmatpush.msra.mxu0 %v583
  %2108 = vmatpush.msra.mxu0 %v579
  %2109 = vmatpush.msra.mxu0 %v575
  %2110 = vmatpush.msra.mxu0 %v571
  %2111 = vmatpush.msra.mxu0 %v567
  %2112 = vmatpush.msra.mxu0 %v563
  %2113 = vmatpush.msra.mxu0 %v559
  %2114 = vmatmul.f32.gmra.mxu0 %v2096
  %v2115 = vpop.f32.mrf.mxu0
  %v2116 = vadd.f32 0.0, %v2115
  %2117 = vdwg.mxu0
  %2118 = vmatpush.msra.mxu0 %v620
  %2119 = vmatpush.msra.mxu0 %v616
  %2120 = vmatpush.msra.mxu0 %v612
  %2121 = vmatpush.msra.mxu0 %v608
  %2122 = vmatpush.msra.mxu0 %v604
  %2123 = vmatpush.msra.mxu0 %v600
  %2124 = vmatpush.msra.mxu0 %v596
  %2125 = vmatpush.msra.mxu0 %v592
  %2126 = vmatpush.msra.mxu0 %v588
  %2127 = vmatpush.msra.mxu0 %v584
  %2128 = vmatpush.msra.mxu0 %v580
  %2129 = vmatpush.msra.mxu0 %v576
  %2130 = vmatpush.msra.mxu0 %v572
  %2131 = vmatpush.msra.mxu0 %v568
  %2132 = vmatpush.msra.mxu0 %v564
  %2133 = vmatpush.msra.mxu0 %v560
  %2134 = vmatmul.f32.gmra.mxu0 %v2096
  %v2135 = vpop.f32.mrf.mxu0
  %v2136 = vadd.f32 0.0, %v2135
  %2137 = vdwg.mxu0
  %2138 = vmatpush.msra.mxu0 %v621
  %2139 = vmatpush.msra.mxu0 %v617
  %2140 = vmatpush.msra.mxu0 %v613
  %2141 = vmatpush.msra.mxu0 %v609
  %2142 = vmatpush.msra.mxu0 %v605
  %2143 = vmatpush.msra.mxu0 %v601
  %2144 = vmatpush.msra.mxu0 %v597
  %2145 = vmatpush.msra.mxu0 %v593
  %2146 = vmatpush.msra.mxu0 %v589
  %2147 = vmatpush.msra.mxu0 %v585
  %2148 = vmatpush.msra.mxu0 %v581
  %2149 = vmatpush.msra.mxu0 %v577
  %2150 = vmatpush.msra.mxu0 %v573
  %2151 = vmatpush.msra.mxu0 %v569
  %2152 = vmatpush.msra.mxu0 %v565
  %2153 = vmatpush.msra.mxu0 %v561
  %2154 = vmatmul.f32.gmra.mxu0 %v2096
  %v2155 = vpop.f32.mrf.mxu0
  %v2156 = vadd.f32 0.0, %v2155
  %2157 = vdwg.mxu0
  %2158 = vmatpush.msra.mxu0 %v622
  %2159 = vmatpush.msra.mxu0 %v618
  %2160 = vmatpush.msra.mxu0 %v614
  %2161 = vmatpush.msra.mxu0 %v610
  %2162 = vmatpush.msra.mxu0 %v606
  %2163 = vmatpush.msra.mxu0 %v602
  %2164 = vmatpush.msra.mxu0 %v598
  %2165 = vmatpush.msra.mxu0 %v594
  %2166 = vmatpush.msra.mxu0 %v590
  %2167 = vmatpush.msra.mxu0 %v586
  %2168 = vmatpush.msra.mxu0 %v582
  %2169 = vmatpush.msra.mxu0 %v578
  %2170 = vmatpush.msra.mxu0 %v574
  %2171 = vmatpush.msra.mxu0 %v570
  %2172 = vmatpush.msra.mxu0 %v566
  %2173 = vmatpush.msra.mxu0 %v562
  %2174 = vmatmul.f32.gmra.mxu0 %v2096
  %v2175 = vpop.f32.mrf.mxu0
  %v2176 = vadd.f32 0.0, %v2175
  %2177 = vdwg.mxu0
  %v2178 = vadd.f32 %v2092, %v2116
  %v2179 = vadd.f32 %v2093, %v2136
  %v2180 = vadd.f32 %v2094, %v2156
  %v2181 = vadd.f32 %v2095, %v2176
  %v2182 = vmul.f32 %v2178, 0.5
  %v2183 = vtanh.pop %v2182
  %v2184 = vmul.f32 %v2183, 0.5
  %v2185 = vadd.f32 %v2184, 0.5
  %v2186 = vmul.f32 %v2179, 0.5
  %v2187 = vtanh.pop %v2186
  %v2188 = vmul.f32 %v2187, 0.5
  %v2189 = vadd.f32 %v2188, 0.5
  %v2190 = vtanh.pop %v2180
  %v2191 = vmul.f32 %v2181, 0.5
  %v2192 = vtanh.pop %v2191
  %v2193 = vmul.f32 %v2192, 0.5
  %v2194 = vadd.f32 %v2193, 0.5
  %v2195 = vmul.f32 %v2189, %v2097
  %v2196 = vmul.f32 %v2185, %v2190
  %v2197 = vadd.f32 %v2195, %v2196
  %v2198 = vtanh.pop %v2197
  %v2199 = vmul.f32 %v2194, %v2198
  %2200 = vst [vmem:[#allocation2] sm:$0xff] %v2199
  %2201 = vst [vmem:[#allocation3] sm:$0xff] %v2197
  %2202 = vst [vmem:[#allocation6 + $0x28] sm:$0xff] %v2199
  %v2203 = vld [vmem:[#allocation6] sm:$0xff]
  %v2204 = vld [vmem:[#allocation6 + $0x8] sm:$0xff]
  %v2205 = vld [vmem:[#allocation6 + $0x10] sm:$0xff]
  %v2206 = vld [vmem:[#allocation6 + $0x18] sm:$0xff]
  %v2207 = vld [vmem:[#allocation6 + $0x20] sm:$0xff]
  %v2208 = vld [vmem:[#allocation6 + $0x28] sm:$0xff]
  %v2209 = vld [vmem:[%s9] sm:$0xff]
  %v2210 = vld [vmem:[%s9 + $0x8] sm:$0xff]
  %v2211 = vld [vmem:[%s9 + $0x10] sm:$0xff]
  %v2212 = vld [vmem:[%s9 + $0x18] sm:$0xff]
  %v2213 = vld [vmem:[%s9 + $0x20] sm:$0xff]
  %v2214 = vld [vmem:[%s9 + $0x28] sm:$0xff]
  %v2215 = vld [vmem:[%s9 + $0x30] sm:$0xff]
  %v2216 = vld [vmem:[%s9 + $0x38] sm:$0xff]
  %v2217 = vld [vmem:[%s9 + $0x40] sm:$0xff]
  %v2218 = vld [vmem:[%s9 + $0x48] sm:$0xff]
  %v2219 = vld [vmem:[%s9 + $0x50] sm:$0xff]
  %v2220 = vld [vmem:[%s9 + $0x58] sm:$0xff]
  %v2221 = vld [vmem:[%s9 + $0x60] sm:$0xff]
  %v2222 = vld [vmem:[%s9 + $0x68] sm:$0xff]
  %v2223 = vld [vmem:[%s9 + $0x70] sm:$0xff]
  %v2224 = vld [vmem:[%s9 + $0x78] sm:$0xff]
  %v2225 = vld [vmem:[%s10] sm:$0x1]
  %v2227 = vperm.slane %v2225, 0
  %2229 = vmatpush.msra.mxu0 %v2224
  %2230 = vmatpush.msra.mxu0 %v2223
  %2231 = vmatpush.msra.mxu0 %v2222
  %2232 = vmatpush.msra.mxu0 %v2221
  %2233 = vmatpush.msra.mxu0 %v2220
  %2234 = vmatpush.msra.mxu0 %v2219
  %2235 = vmatpush.msra.mxu0 %v2218
  %2236 = vmatpush.msra.mxu0 %v2217
  %2237 = vmatpush.msra.mxu0 %v2216
  %2238 = vmatpush.msra.mxu0 %v2215
  %2239 = vmatpush.msra.mxu0 %v2214
  %2240 = vmatpush.msra.mxu0 %v2213
  %2241 = vmatpush.msra.mxu0 %v2212
  %2242 = vmatpush.msra.mxu0 %v2211
  %2243 = vmatpush.msra.mxu0 %v2210
  %2244 = vmatpush.msra.mxu0 %v2209
  %2245 = vmatmul.f32.gmra.mxu0 %v2203
  %v2246 = vpop.f32.mrf.mxu0
  %v2247 = vadd.f32 %v2227, %v2246
  %2248 = vmatmul.f32.gmra.mxu0 %v2204
  %v2249 = vpop.f32.mrf.mxu0
  %v2250 = vadd.f32 %v2227, %v2249
  %2251 = vmatmul.f32.gmra.mxu0 %v2205
  %v2252 = vpop.f32.mrf.mxu0
  %v2253 = vadd.f32 %v2227, %v2252
  %2254 = vmatmul.f32.gmra.mxu0 %v2206
  %v2255 = vpop.f32.mrf.mxu0
  %v2256 = vadd.f32 %v2227, %v2255
  %2257 = vmatmul.f32.gmra.mxu0 %v2207
  %v2258 = vpop.f32.mrf.mxu0
  %v2259 = vadd.f32 %v2227, %v2258
  %2260 = vmatmul.f32.gmra.mxu0 %v2208
  %v2261 = vpop.f32.mrf.mxu0
  %v2262 = vadd.f32 %v2227, %v2261
  %2263 = vdwg.mxu0
  %2264 = vst [vmem:[%s11] sm:$0xff] %v2247
  %2265 = vst [vmem:[%s11 + $0x8] sm:$0xff] %v2250
  %2266 = vst [vmem:[%s11 + $0x10] sm:$0xff] %v2253
  %2267 = vst [vmem:[%s11 + $0x18] sm:$0xff] %v2256
  %2268 = vst [vmem:[%s11 + $0x20] sm:$0xff] %v2259
  %2269 = vst [vmem:[%s11 + $0x28] sm:$0xff] %v2262
  %v2270 = vld [vmem:[#allocation2] sm:$0xff]
  %2271 = vst [vmem:[%s12] sm:$0xff] %v2270
  // Predicated region
  $region46: #{seq2seq_forward.1} parent=0 // pred_check
    _
  $region47: #{seq2seq_forward.1} parent=0 // pred_check_branch
    %2273 = sbr.rel (0) target = $region49
  $region48: #{seq2seq_forward.1} parent=0 // pred_region
    _
  $region49: #{seq2seq_forward.1} parent=0 // pred_fallthru
    _
  // Predicated region
  $region50: #{seq2seq_forward.1} parent=0 // pred_check
    _
  $region51: #{seq2seq_forward.1} parent=0 // pred_check_branch
    %2275 = sbr.rel (0) target = $region53
  $region52: #{seq2seq_forward.1} parent=0 // pred_region
    _
  $region53: #{seq2seq_forward.1} parent=0 // pred_fallthru
    _
  // Predicated region
  $region54: #{seq2seq_forward.1} parent=0 // pred_check
    _
  $region55: #{seq2seq_forward.1} parent=0 // pred_check_branch
    %2277 = sbr.rel (0) target = $region57
  $region56: #{seq2seq_forward.1} parent=0 // pred_region
    _
  $region57: #{seq2seq_forward.1} parent=0 // pred_fallthru
    _
  // Predicated region
  $region58: #{seq2seq_forward.1} parent=0 // pred_check
    _
  $region59: #{seq2seq_forward.1} parent=0 // pred_check_branch
    %2279 = sbr.rel (0) target = $region61
  $region60: #{seq2seq_forward.1} parent=0 // pred_region
    _
  $region61: #{seq2seq_forward.1} parent=0 // pred_fallthru
    _

</llo_original>
